<compile_context>
chip_gen: v7x
topology: tpu7x:2x2x1
jax: 0.10.0
libtpu: 0.0.40
codegen_flags: <defaults>
</compile_context>

<pallas_src>
import math
import numpy as np
import jax
import jax.numpy as jnp
from jax.experimental import pallas as pl
from jax.experimental.pallas import tpu as pltpu


def supervisor_kernel(x_ref, w_ih_ref, w_hh_ref, b_g_ref, b_hn_ref,
                      w_fc_ref, b_fc_ref, out_ref, seq_ref):
    """Multi-layer GRU over time + Linear + Sigmoid, fully VMEM-resident.

    Packed "batch-in-lanes" layout (BH = B*H):
      x_ref:    (T, BH)        packed input, row t = [x_b0 | x_b1 | ...]
      w_ih_ref: (L, BH, 3*BH)  block-diag per-gate input weights, [r|z|n] along N
      w_hh_ref: (L, BH, 3*BH)  block-diag per-gate hidden weights, [r|z|n] along N
      b_g_ref:  (L, 1, 3*BH)   [b_ir+b_hr | b_iz+b_hz | b_in], batch-tiled
      b_hn_ref: (L, 1, BH)     b_hn (must stay inside r * (...)), batch-tiled
      w_fc_ref: (BH, BH)       block-diag fc weight
      b_fc_ref: (1, BH)        batch-tiled fc bias
      out_ref:  (T, BH)        sigmoid(fc(gru_output)), natively lane-dense
      seq_ref:  (T, BH)        VMEM scratch: current layer's output sequence
    """
    T, BH = out_ref.shape
    L = w_ih_ref.shape[0]

    for l in range(L):                                   # num_layers: small, static
        src = x_ref if l == 0 else seq_ref
        seq = src[...].astype(jnp.float32)               # (T, BH)

        # Fused hoisted input projection: one matmul for all gates & all steps.
        gi = jnp.dot(seq, w_ih_ref[l],
                     preferred_element_type=jnp.float32) + b_g_ref[l]   # (T, 3*BH)

        w_hh = w_hh_ref[l]                               # (BH, 3*BH)
        b_hn = b_hn_ref[l]                               # (1, BH)
        h = jnp.zeros((1, BH), jnp.float32)

        for t in range(T):                               # static full unroll (T small)
            # One fused hidden matmul per step; gate slices land on vreg boundaries.
            gh = jnp.dot(h, w_hh, preferred_element_type=jnp.float32)   # (1, 3*BH)
            gi_t = gi[t:t + 1, :]                        # single-row (sublane) select
            r = jax.nn.sigmoid(gi_t[:, 0:BH] + gh[:, 0:BH])
            z = jax.nn.sigmoid(gi_t[:, BH:2 * BH] + gh[:, BH:2 * BH])
            n = jnp.tanh(gi_t[:, 2 * BH:3 * BH] + r * (gh[:, 2 * BH:3 * BH] + b_hn))
            h = (1.0 - z) * n + z * h
            seq_ref[t:t + 1, :] = h                      # store row t (overlaps compute)

    # Final FC + sigmoid on the whole sequence; output is already lane-dense.
    y = jnp.dot(seq_ref[...], w_fc_ref[...],
                preferred_element_type=jnp.float32) + b_fc_ref[...]
    out_ref[...] = jax.nn.sigmoid(y).astype(out_ref.dtype)


def _pack_params(params, B):
    """Build packed block-diagonal weights for the batch-in-lanes layout."""
    L, _, H, _ = params["w_ih"].shape
    eye = jnp.eye(B, dtype=jnp.float32)

    def bd(w):                       # (H, H) -> (B*H, B*H) block-diagonal
        return jnp.kron(eye, w)

    def tile_b(b):                   # (1, H) -> (1, B*H)
        return jnp.tile(b, (1, B))

    w_ih_p, w_hh_p, b_g_p, b_hn_p = [], [], [], []
    for l in range(L):
        w_ih_p.append(jnp.concatenate([bd(params["w_ih"][l, g]) for g in range(3)], axis=1))
        w_hh_p.append(jnp.concatenate([bd(params["w_hh"][l, g]) for g in range(3)], axis=1))
        b_r = tile_b(params["b_ih"][l, 0] + params["b_hh"][l, 0])
        b_z = tile_b(params["b_ih"][l, 1] + params["b_hh"][l, 1])
        b_n = tile_b(params["b_ih"][l, 2])
        b_g_p.append(jnp.concatenate([b_r, b_z, b_n], axis=1))
        b_hn_p.append(tile_b(params["b_hh"][l, 2]))

    return (jnp.stack(w_ih_p),                      # (L, BH, 3*BH)
            jnp.stack(w_hh_p),                      # (L, BH, 3*BH)
            jnp.stack(b_g_p),                       # (L, 1, 3*BH)
            jnp.stack(b_hn_p),                      # (L, 1, BH)
            jnp.kron(eye, params["w_fc"]),          # (BH, BH)
            jnp.tile(params["b_fc"], (1, B)))       # (1, BH)


def supervisor_forward(x, params):
    """x: (B, T, H) batch-first, like the PyTorch module. Returns (B, T, H)."""
    B, T, H = x.shape
    L = params["w_ih"].shape[0]
    BH = B * H

    # Batch-in-lanes packing: row t = [x[0, t, :] | x[1, t, :] | ... ].
    x_packed = jnp.transpose(x, (1, 0, 2)).reshape(T, BH)

    w_ih_p, w_hh_p, b_g_p, b_hn_p, w_fc_p, b_fc_p = _pack_params(params, B)

    flops = 12 * L * T * BH * BH + 2 * T * BH * BH
    transcendentals = 3 * L * T * BH + T * BH
    bytes_accessed = 4 * (2 * T * BH + L * (6 * BH * BH + 4 * BH) + BH * BH + BH)

    vmem = pl.BlockSpec(memory_space=pltpu.MemorySpace.VMEM)
    out_packed = pl.pallas_call(
        supervisor_kernel,
        out_shape=jax.ShapeDtypeStruct((T, BH), jnp.float32),
        in_specs=[vmem] * 7,
        out_specs=vmem,
        scratch_shapes=[pltpu.VMEM((T, BH), jnp.float32)],
        cost_estimate=pl.CostEstimate(flops=flops,
                                      transcendentals=transcendentals,
                                      bytes_accessed=bytes_accessed),
    )(x_packed, w_ih_p, w_hh_p, b_g_p, b_hn_p, w_fc_p, b_fc_p)

    # Unpack (T, B*H) -> (B, T, H).
    return jnp.transpose(out_packed.reshape(T, B, H), (1, 0, 2))


def init_params(key, hidden_dim, num_layers):
    """Deterministic init mirroring the module's __init__:
    xavier_uniform over the full (3H, H) GRU matrices, bias_ih=1, bias_hh=0,
    xavier for fc weight, fc bias=0. Stored per-gate & pre-transposed."""
    H, L = hidden_dim, num_layers
    ks = jax.random.split(key, 2 * L + 1)

    def xavier(k, shape):
        fan_out, fan_in = shape  # torch convention: (out_features, in_features)
        a = math.sqrt(6.0 / (fan_in + fan_out))
        return jax.random.uniform(k, shape, jnp.float32, -a, a)

    def per_gate(w_full):        # (3H, H) torch layout -> (3, H, H), y = x @ w[g]
        return jnp.stack([w_full[g * H:(g + 1) * H, :].T for g in range(3)])

    w_ih = jnp.stack([per_gate(xavier(ks[2 * l], (3 * H, H))) for l in range(L)])      # (L,3,H,H)
    w_hh = jnp.stack([per_gate(xavier(ks[2 * l + 1], (3 * H, H))) for l in range(L)])  # (L,3,H,H)
    b_ih = jnp.ones((L, 3, 1, H), jnp.float32)    # bias_ih filled with 1
    b_hh = jnp.zeros((L, 3, 1, H), jnp.float32)   # bias_hh filled with 0
    w_fc = xavier(ks[-1], (H, H)).T               # pre-transposed: y = x @ w_fc + b
    b_fc = jnp.zeros((1, H), jnp.float32)
    return {"w_ih": w_ih, "w_hh": w_hh, "b_ih": b_ih, "b_hh": b_hh,
            "w_fc": w_fc, "b_fc": b_fc}


def supervisor_forward_ref(x, params):
    """Pure-JAX reference (torch GRU semantics) for correctness checking."""
    B, T, H = x.shape
    L = params["w_ih"].shape[0]
    seq = x.astype(jnp.float32)
    for l in range(L):
        w_ir, w_iz, w_in = params["w_ih"][l]
        w_hr, w_hz, w_hn = params["w_hh"][l]
        b_ir, b_iz, b_in = params["b_ih"][l]
        b_hr, b_hz, b_hn = params["b_hh"][l]
        h = jnp.zeros((B, H), jnp.float32)
        outs = []
        for t in range(T):
            x_t = seq[:, t, :]
            r = jax.nn.sigmoid(x_t @ w_ir + b_ir + h @ w_hr + b_hr)
            z = jax.nn.sigmoid(x_t @ w_iz + b_iz + h @ w_hz + b_hz)
            n = jnp.tanh(x_t @ w_in + b_in + r * (h @ w_hn + b_hn))
            h = (1.0 - z) * n + z * h
            outs.append(h)
        seq = jnp.stack(outs, axis=1)
    return jax.nn.sigmoid(seq @ params["w_fc"] + params["b_fc"])


if __name__ == "__main__":
    B, T, H, L = 4, 8, 32, 2   # batch, max_seq_len, hidden_dim, num_layers (B*H = 128)

    key = jax.random.PRNGKey(0)
    k_x, k_p = jax.random.split(key)
    x = jax.random.normal(k_x, (B, T, H), jnp.float32)
    params = init_params(k_p, H, L)

    out = supervisor_forward(x, params)
    out = jax.block_until_ready(out)

    ref = supervisor_forward_ref(x, params)
    assert out.shape == (B, T, H)
    np.testing.assert_allclose(np.asarray(out), np.asarray(ref), rtol=1e-4, atol=1e-4)

    print("KERNEL_OK")
</pallas_src>

<mosaic_0001>
module attributes {stable_mosaic.version = 11 : i64} {
  func.func @supervisor_kernel(%arg0: memref<8x128xf32, #tpu.memory_space<vmem>>, %arg1: memref<2x128x384xf32, #tpu.memory_space<vmem>>, %arg2: memref<2x128x384xf32, #tpu.memory_space<vmem>>, %arg3: memref<2x1x384xf32, #tpu.memory_space<vmem>>, %arg4: memref<2x1x128xf32, #tpu.memory_space<vmem>>, %arg5: memref<128x128xf32, #tpu.memory_space<vmem>>, %arg6: memref<1x128xf32, #tpu.memory_space<vmem>>, %arg7: memref<8x128xf32, #tpu.memory_space<vmem>>, %arg8: memref<8x128xf32, #tpu.memory_space<vmem>>) attributes {dimension_semantics = [], scalar_prefetch = 0 : i64, scratch_operands = 1 : i64, tpu.core_type = #tpu.core_type<tc>} {
    %c0 = arith.constant 0 : index
    %c0_0 = arith.constant 0 : index
    %0 = vector.load %arg0[%c0, %c0_0] : memref<8x128xf32, #tpu.memory_space<vmem>>, vector<8x128xf32>
    %c0_1 = arith.constant 0 : index
    %c0_2 = arith.constant 0 : index
    %c0_3 = arith.constant 0 : index
    %1 = vector.load %arg1[%c0_1, %c0_2, %c0_3] : memref<2x128x384xf32, #tpu.memory_space<vmem>>, vector<1x128x384xf32>
    %2 = vector.shape_cast %1 : vector<1x128x384xf32> to vector<128x384xf32>
    %cst = arith.constant dense<0.000000e+00> : vector<8x384xf32>
    %3 = tpu.matmul %0, %2, %cst {dimension_numbers = #tpu.dot_dimension_numbers<[1], [0], [0], [1], [0, 0, 1, 1], [], []>} : vector<8x128xf32>, vector<128x384xf32>, vector<8x384xf32> -> vector<8x384xf32>
    %c0_4 = arith.constant 0 : index
    %c0_5 = arith.constant 0 : index
    %c0_6 = arith.constant 0 : index
    %4 = vector.load %arg3[%c0_4, %c0_5, %c0_6] : memref<2x1x384xf32, #tpu.memory_space<vmem>>, vector<1x1x384xf32>
    %5 = vector.shape_cast %4 : vector<1x1x384xf32> to vector<1x384xf32>
    %6 = vector.broadcast %5 : vector<1x384xf32> to vector<8x384xf32>
    %7 = arith.addf %3, %6 : vector<8x384xf32>
    %c0_7 = arith.constant 0 : index
    %c0_8 = arith.constant 0 : index
    %c0_9 = arith.constant 0 : index
    %8 = vector.load %arg2[%c0_7, %c0_8, %c0_9] : memref<2x128x384xf32, #tpu.memory_space<vmem>>, vector<1x128x384xf32>
    %9 = vector.shape_cast %8 : vector<1x128x384xf32> to vector<128x384xf32>
    %c0_10 = arith.constant 0 : index
    %c0_11 = arith.constant 0 : index
    %c0_12 = arith.constant 0 : index
    %10 = vector.load %arg4[%c0_10, %c0_11, %c0_12] : memref<2x1x128xf32, #tpu.memory_space<vmem>>, vector<1x1x128xf32>
    %11 = vector.shape_cast %10 : vector<1x1x128xf32> to vector<1x128xf32>
    %cst_13 = arith.constant 0.000000e+00 : f32
    %12 = vector.broadcast %cst_13 : f32 to vector<1x128xf32>
    %cst_14 = arith.constant dense<0.000000e+00> : vector<1x384xf32>
    %13 = tpu.matmul %12, %9, %cst_14 {dimension_numbers = #tpu.dot_dimension_numbers<[1], [0], [0], [1], [0, 0, 1, 1], [], []>} : vector<1x128xf32>, vector<128x384xf32>, vector<1x384xf32> -> vector<1x384xf32>
    %14 = vector.extract_strided_slice %7 {offsets = [0, 0], sizes = [1, 384], strides = [1, 1]} : vector<8x384xf32> to vector<1x384xf32>
    %15 = vector.extract_strided_slice %14 {offsets = [0, 0], sizes = [1, 128], strides = [1, 1]} : vector<1x384xf32> to vector<1x128xf32>
    %16 = vector.extract_strided_slice %13 {offsets = [0, 0], sizes = [1, 128], strides = [1, 1]} : vector<1x384xf32> to vector<1x128xf32>
    %17 = arith.addf %15, %16 : vector<1x128xf32>
    %18 = arith.negf %17 : vector<1x128xf32>
    %19 = math.exp %18 : vector<1x128xf32>
    %cst_15 = arith.constant 1.000000e+00 : f32
    %20 = vector.broadcast %cst_15 : f32 to vector<1x128xf32>
    %21 = arith.addf %20, %19 : vector<1x128xf32>
    %22 = arith.divf %20, %21 : vector<1x128xf32>
    %23 = vector.extract_strided_slice %14 {offsets = [0, 128], sizes = [1, 128], strides = [1, 1]} : vector<1x384xf32> to vector<1x128xf32>
    %24 = vector.extract_strided_slice %13 {offsets = [0, 128], sizes = [1, 128], strides = [1, 1]} : vector<1x384xf32> to vector<1x128xf32>
    %25 = arith.addf %23, %24 : vector<1x128xf32>
    %26 = arith.negf %25 : vector<1x128xf32>
    %27 = math.exp %26 : vector<1x128xf32>
    %cst_16 = arith.constant 1.000000e+00 : f32
    %28 = vector.broadcast %cst_16 : f32 to vector<1x128xf32>
    %29 = arith.addf %28, %27 : vector<1x128xf32>
    %30 = arith.divf %28, %29 : vector<1x128xf32>
    %31 = vector.extract_strided_slice %14 {offsets = [0, 256], sizes = [1, 128], strides = [1, 1]} : vector<1x384xf32> to vector<1x128xf32>
    %32 = vector.extract_strided_slice %13 {offsets = [0, 256], sizes = [1, 128], strides = [1, 1]} : vector<1x384xf32> to vector<1x128xf32>
    %33 = arith.addf %32, %11 : vector<1x128xf32>
    %34 = arith.mulf %22, %33 : vector<1x128xf32>
    %35 = arith.addf %31, %34 : vector<1x128xf32>
    %36 = math.tanh %35 : vector<1x128xf32>
    %cst_17 = arith.constant 1.000000e+00 : f32
    %37 = vector.broadcast %cst_17 : f32 to vector<1x128xf32>
    %38 = arith.subf %37, %30 : vector<1x128xf32>
    %39 = arith.mulf %38, %36 : vector<1x128xf32>
    %40 = arith.mulf %30, %12 : vector<1x128xf32>
    %41 = arith.addf %39, %40 : vector<1x128xf32>
    %c0_18 = arith.constant 0 : index
    %c0_19 = arith.constant 0 : index
    %42 = vector.load %arg8[%c0_18, %c0_19] : memref<8x128xf32, #tpu.memory_space<vmem>>, vector<1x128xf32>
    tpu.vector_store %arg8[%c0_18, %c0_19], %41 {strides = array<i32>} : memref<8x128xf32, #tpu.memory_space<vmem>>, vector<1x128xf32>,
    %cst_20 = arith.constant dense<0.000000e+00> : vector<1x384xf32>
    %43 = tpu.matmul %41, %9, %cst_20 {dimension_numbers = #tpu.dot_dimension_numbers<[1], [0], [0], [1], [0, 0, 1, 1], [], []>} : vector<1x128xf32>, vector<128x384xf32>, vector<1x384xf32> -> vector<1x384xf32>
    %44 = vector.extract_strided_slice %7 {offsets = [1, 0], sizes = [1, 384], strides = [1, 1]} : vector<8x384xf32> to vector<1x384xf32>
    %45 = vector.extract_strided_slice %44 {offsets = [0, 0], sizes = [1, 128], strides = [1, 1]} : vector<1x384xf32> to vector<1x128xf32>
    %46 = vector.extract_strided_slice %43 {offsets = [0, 0], sizes = [1, 128], strides = [1, 1]} : vector<1x384xf32> to vector<1x128xf32>
    %47 = arith.addf %45, %46 : vector<1x128xf32>
    %48 = arith.negf %47 : vector<1x128xf32>
    %49 = math.exp %48 : vector<1x128xf32>
    %cst_21 = arith.constant 1.000000e+00 : f32
    %50 = vector.broadcast %cst_21 : f32 to vector<1x128xf32>
    %51 = arith.addf %50, %49 : vector<1x128xf32>
    %52 = arith.divf %50, %51 : vector<1x128xf32>
    %53 = vector.extract_strided_slice %44 {offsets = [0, 128], sizes = [1, 128], strides = [1, 1]} : vector<1x384xf32> to vector<1x128xf32>
    %54 = vector.extract_strided_slice %43 {offsets = [0, 128], sizes = [1, 128], strides = [1, 1]} : vector<1x384xf32> to vector<1x128xf32>
    %55 = arith.addf %53, %54 : vector<1x128xf32>
    %56 = arith.negf %55 : vector<1x128xf32>
    %57 = math.exp %56 : vector<1x128xf32>
    %cst_22 = arith.constant 1.000000e+00 : f32
    %58 = vector.broadcast %cst_22 : f32 to vector<1x128xf32>
    %59 = arith.addf %58, %57 : vector<1x128xf32>
    %60 = arith.divf %58, %59 : vector<1x128xf32>
    %61 = vector.extract_strided_slice %44 {offsets = [0, 256], sizes = [1, 128], strides = [1, 1]} : vector<1x384xf32> to vector<1x128xf32>
    %62 = vector.extract_strided_slice %43 {offsets = [0, 256], sizes = [1, 128], strides = [1, 1]} : vector<1x384xf32> to vector<1x128xf32>
    %63 = arith.addf %62, %11 : vector<1x128xf32>
    %64 = arith.mulf %52, %63 : vector<1x128xf32>
    %65 = arith.addf %61, %64 : vector<1x128xf32>
    %66 = math.tanh %65 : vector<1x128xf32>
    %cst_23 = arith.constant 1.000000e+00 : f32
    %67 = vector.broadcast %cst_23 : f32 to vector<1x128xf32>
    %68 = arith.subf %67, %60 : vector<1x128xf32>
    %69 = arith.mulf %68, %66 : vector<1x128xf32>
    %70 = arith.mulf %60, %41 : vector<1x128xf32>
    %71 = arith.addf %69, %70 : vector<1x128xf32>
    %c1 = arith.constant 1 : index
    %c0_24 = arith.constant 0 : index
    %72 = vector.load %arg8[%c1, %c0_24] : memref<8x128xf32, #tpu.memory_space<vmem>>, vector<1x128xf32>
    tpu.vector_store %arg8[%c1, %c0_24], %71 {strides = array<i32>} : memref<8x128xf32, #tpu.memory_space<vmem>>, vector<1x128xf32>,
    %cst_25 = arith.constant dense<0.000000e+00> : vector<1x384xf32>
    %73 = tpu.matmul %71, %9, %cst_25 {dimension_numbers = #tpu.dot_dimension_numbers<[1], [0], [0], [1], [0, 0, 1, 1], [], []>} : vector<1x128xf32>, vector<128x384xf32>, vector<1x384xf32> -> vector<1x384xf32>
    %74 = vector.extract_strided_slice %7 {offsets = [2, 0], sizes = [1, 384], strides = [1, 1]} : vector<8x384xf32> to vector<1x384xf32>
    %75 = vector.extract_strided_slice %74 {offsets = [0, 0], sizes = [1, 128], strides = [1, 1]} : vector<1x384xf32> to vector<1x128xf32>
    %76 = vector.extract_strided_slice %73 {offsets = [0, 0], sizes = [1, 128], strides = [1, 1]} : vector<1x384xf32> to vector<1x128xf32>
    %77 = arith.addf %75, %76 : vector<1x128xf32>
    %78 = arith.negf %77 : vector<1x128xf32>
    %79 = math.exp %78 : vector<1x128xf32>
    %cst_26 = arith.constant 1.000000e+00 : f32
    %80 = vector.broadcast %cst_26 : f32 to vector<1x128xf32>
    %81 = arith.addf %80, %79 : vector<1x128xf32>
    %82 = arith.divf %80, %81 : vector<1x128xf32>
    %83 = vector.extract_strided_slice %74 {offsets = [0, 128], sizes = [1, 128], strides = [1, 1]} : vector<1x384xf32> to vector<1x128xf32>
    %84 = vector.extract_strided_slice %73 {offsets = [0, 128], sizes = [1, 128], strides = [1, 1]} : vector<1x384xf32> to vector<1x128xf32>
    %85 = arith.addf %83, %84 : vector<1x128xf32>
    %86 = arith.negf %85 : vector<1x128xf32>
    %87 = math.exp %86 : vector<1x128xf32>
    %cst_27 = arith.constant 1.000000e+00 : f32
    %88 = vector.broadcast %cst_27 : f32 to vector<1x128xf32>
    %89 = arith.addf %88, %87 : vector<1x128xf32>
    %90 = arith.divf %88, %89 : vector<1x128xf32>
    %91 = vector.extract_strided_slice %74 {offsets = [0, 256], sizes = [1, 128], strides = [1, 1]} : vector<1x384xf32> to vector<1x128xf32>
    %92 = vector.extract_strided_slice %73 {offsets = [0, 256], sizes = [1, 128], strides = [1, 1]} : vector<1x384xf32> to vector<1x128xf32>
    %93 = arith.addf %92, %11 : vector<1x128xf32>
    %94 = arith.mulf %82, %93 : vector<1x128xf32>
    %95 = arith.addf %91, %94 : vector<1x128xf32>
    %96 = math.tanh %95 : vector<1x128xf32>
    %cst_28 = arith.constant 1.000000e+00 : f32
    %97 = vector.broadcast %cst_28 : f32 to vector<1x128xf32>
    %98 = arith.subf %97, %90 : vector<1x128xf32>
    %99 = arith.mulf %98, %96 : vector<1x128xf32>
    %100 = arith.mulf %90, %71 : vector<1x128xf32>
    %101 = arith.addf %99, %100 : vector<1x128xf32>
    %c2 = arith.constant 2 : index
    %c0_29 = arith.constant 0 : index
    %102 = vector.load %arg8[%c2, %c0_29] : memref<8x128xf32, #tpu.memory_space<vmem>>, vector<1x128xf32>
    tpu.vector_store %arg8[%c2, %c0_29], %101 {strides = array<i32>} : memref<8x128xf32, #tpu.memory_space<vmem>>, vector<1x128xf32>,
    %cst_30 = arith.constant dense<0.000000e+00> : vector<1x384xf32>
    %103 = tpu.matmul %101, %9, %cst_30 {dimension_numbers = #tpu.dot_dimension_numbers<[1], [0], [0], [1], [0, 0, 1, 1], [], []>} : vector<1x128xf32>, vector<128x384xf32>, vector<1x384xf32> -> vector<1x384xf32>
    %104 = vector.extract_strided_slice %7 {offsets = [3, 0], sizes = [1, 384], strides = [1, 1]} : vector<8x384xf32> to vector<1x384xf32>
    %105 = vector.extract_strided_slice %104 {offsets = [0, 0], sizes = [1, 128], strides = [1, 1]} : vector<1x384xf32> to vector<1x128xf32>
    %106 = vector.extract_strided_slice %103 {offsets = [0, 0], sizes = [1, 128], strides = [1, 1]} : vector<1x384xf32> to vector<1x128xf32>
    %107 = arith.addf %105, %106 : vector<1x128xf32>
    %108 = arith.negf %107 : vector<1x128xf32>
    %109 = math.exp %108 : vector<1x128xf32>
    %cst_31 = arith.constant 1.000000e+00 : f32
    %110 = vector.broadcast %cst_31 : f32 to vector<1x128xf32>
    %111 = arith.addf %110, %109 : vector<1x128xf32>
    %112 = arith.divf %110, %111 : vector<1x128xf32>
    %113 = vector.extract_strided_slice %104 {offsets = [0, 128], sizes = [1, 128], strides = [1, 1]} : vector<1x384xf32> to vector<1x128xf32>
    %114 = vector.extract_strided_slice %103 {offsets = [0, 128], sizes = [1, 128], strides = [1, 1]} : vector<1x384xf32> to vector<1x128xf32>
    %115 = arith.addf %113, %114 : vector<1x128xf32>
    %116 = arith.negf %115 : vector<1x128xf32>
    %117 = math.exp %116 : vector<1x128xf32>
    %cst_32 = arith.constant 1.000000e+00 : f32
    %118 = vector.broadcast %cst_32 : f32 to vector<1x128xf32>
    %119 = arith.addf %118, %117 : vector<1x128xf32>
    %120 = arith.divf %118, %119 : vector<1x128xf32>
    %121 = vector.extract_strided_slice %104 {offsets = [0, 256], sizes = [1, 128], strides = [1, 1]} : vector<1x384xf32> to vector<1x128xf32>
    %122 = vector.extract_strided_slice %103 {offsets = [0, 256], sizes = [1, 128], strides = [1, 1]} : vector<1x384xf32> to vector<1x128xf32>
    %123 = arith.addf %122, %11 : vector<1x128xf32>
    %124 = arith.mulf %112, %123 : vector<1x128xf32>
    %125 = arith.addf %121, %124 : vector<1x128xf32>
    %126 = math.tanh %125 : vector<1x128xf32>
    %cst_33 = arith.constant 1.000000e+00 : f32
    %127 = vector.broadcast %cst_33 : f32 to vector<1x128xf32>
    %128 = arith.subf %127, %120 : vector<1x128xf32>
    %129 = arith.mulf %128, %126 : vector<1x128xf32>
    %130 = arith.mulf %120, %101 : vector<1x128xf32>
    %131 = arith.addf %129, %130 : vector<1x128xf32>
    %c3 = arith.constant 3 : index
    %c0_34 = arith.constant 0 : index
    %132 = vector.load %arg8[%c3, %c0_34] : memref<8x128xf32, #tpu.memory_space<vmem>>, vector<1x128xf32>
    tpu.vector_store %arg8[%c3, %c0_34], %131 {strides = array<i32>} : memref<8x128xf32, #tpu.memory_space<vmem>>, vector<1x128xf32>,
    %cst_35 = arith.constant dense<0.000000e+00> : vector<1x384xf32>
    %133 = tpu.matmul %131, %9, %cst_35 {dimension_numbers = #tpu.dot_dimension_numbers<[1], [0], [0], [1], [0, 0, 1, 1], [], []>} : vector<1x128xf32>, vector<128x384xf32>, vector<1x384xf32> -> vector<1x384xf32>
    %134 = vector.extract_strided_slice %7 {offsets = [4, 0], sizes = [1, 384], strides = [1, 1]} : vector<8x384xf32> to vector<1x384xf32>
    %135 = vector.extract_strided_slice %134 {offsets = [0, 0], sizes = [1, 128], strides = [1, 1]} : vector<1x384xf32> to vector<1x128xf32>
    %136 = vector.extract_strided_slice %133 {offsets = [0, 0], sizes = [1, 128], strides = [1, 1]} : vector<1x384xf32> to vector<1x128xf32>
    %137 = arith.addf %135, %136 : vector<1x128xf32>
    %138 = arith.negf %137 : vector<1x128xf32>
    %139 = math.exp %138 : vector<1x128xf32>
    %cst_36 = arith.constant 1.000000e+00 : f32
    %140 = vector.broadcast %cst_36 : f32 to vector<1x128xf32>
    %141 = arith.addf %140, %139 : vector<1x128xf32>
    %142 = arith.divf %140, %141 : vector<1x128xf32>
    %143 = vector.extract_strided_slice %134 {offsets = [0, 128], sizes = [1, 128], strides = [1, 1]} : vector<1x384xf32> to vector<1x128xf32>
    %144 = vector.extract_strided_slice %133 {offsets = [0, 128], sizes = [1, 128], strides = [1, 1]} : vector<1x384xf32> to vector<1x128xf32>
    %145 = arith.addf %143, %144 : vector<1x128xf32>
    %146 = arith.negf %145 : vector<1x128xf32>
    %147 = math.exp %146 : vector<1x128xf32>
    %cst_37 = arith.constant 1.000000e+00 : f32
    %148 = vector.broadcast %cst_37 : f32 to vector<1x128xf32>
    %149 = arith.addf %148, %147 : vector<1x128xf32>
    %150 = arith.divf %148, %149 : vector<1x128xf32>
    %151 = vector.extract_strided_slice %134 {offsets = [0, 256], sizes = [1, 128], strides = [1, 1]} : vector<1x384xf32> to vector<1x128xf32>
    %152 = vector.extract_strided_slice %133 {offsets = [0, 256], sizes = [1, 128], strides = [1, 1]} : vector<1x384xf32> to vector<1x128xf32>
    %153 = arith.addf %152, %11 : vector<1x128xf32>
    %154 = arith.mulf %142, %153 : vector<1x128xf32>
    %155 = arith.addf %151, %154 : vector<1x128xf32>
    %156 = math.tanh %155 : vector<1x128xf32>
    %cst_38 = arith.constant 1.000000e+00 : f32
    %157 = vector.broadcast %cst_38 : f32 to vector<1x128xf32>
    %158 = arith.subf %157, %150 : vector<1x128xf32>
    %159 = arith.mulf %158, %156 : vector<1x128xf32>
    %160 = arith.mulf %150, %131 : vector<1x128xf32>
    %161 = arith.addf %159, %160 : vector<1x128xf32>
    %c4 = arith.constant 4 : index
    %c0_39 = arith.constant 0 : index
    %162 = vector.load %arg8[%c4, %c0_39] : memref<8x128xf32, #tpu.memory_space<vmem>>, vector<1x128xf32>
    tpu.vector_store %arg8[%c4, %c0_39], %161 {strides = array<i32>} : memref<8x128xf32, #tpu.memory_space<vmem>>, vector<1x128xf32>,
    %cst_40 = arith.constant dense<0.000000e+00> : vector<1x384xf32>
    %163 = tpu.matmul %161, %9, %cst_40 {dimension_numbers = #tpu.dot_dimension_numbers<[1], [0], [0], [1], [0, 0, 1, 1], [], []>} : vector<1x128xf32>, vector<128x384xf32>, vector<1x384xf32> -> vector<1x384xf32>
    %164 = vector.extract_strided_slice %7 {offsets = [5, 0], sizes = [1, 384], strides = [1, 1]} : vector<8x384xf32> to vector<1x384xf32>
    %165 = vector.extract_strided_slice %164 {offsets = [0, 0], sizes = [1, 128], strides = [1, 1]} : vector<1x384xf32> to vector<1x128xf32>
    %166 = vector.extract_strided_slice %163 {offsets = [0, 0], sizes = [1, 128], strides = [1, 1]} : vector<1x384xf32> to vector<1x128xf32>
    %167 = arith.addf %165, %166 : vector<1x128xf32>
    %168 = arith.negf %167 : vector<1x128xf32>
    %169 = math.exp %168 : vector<1x128xf32>
    %cst_41 = arith.constant 1.000000e+00 : f32
    %170 = vector.broadcast %cst_41 : f32 to vector<1x128xf32>
    %171 = arith.addf %170, %169 : vector<1x128xf32>
    %172 = arith.divf %170, %171 : vector<1x128xf32>
    %173 = vector.extract_strided_slice %164 {offsets = [0, 128], sizes = [1, 128], strides = [1, 1]} : vector<1x384xf32> to vector<1x128xf32>
    %174 = vector.extract_strided_slice %163 {offsets = [0, 128], sizes = [1, 128], strides = [1, 1]} : vector<1x384xf32> to vector<1x128xf32>
    %175 = arith.addf %173, %174 : vector<1x128xf32>
    %176 = arith.negf %175 : vector<1x128xf32>
    %177 = math.exp %176 : vector<1x128xf32>
    %cst_42 = arith.constant 1.000000e+00 : f32
    %178 = vector.broadcast %cst_42 : f32 to vector<1x128xf32>
    %179 = arith.addf %178, %177 : vector<1x128xf32>
    %180 = arith.divf %178, %179 : vector<1x128xf32>
    %181 = vector.extract_strided_slice %164 {offsets = [0, 256], sizes = [1, 128], strides = [1, 1]} : vector<1x384xf32> to vector<1x128xf32>
    %182 = vector.extract_strided_slice %163 {offsets = [0, 256], sizes = [1, 128], strides = [1, 1]} : vector<1x384xf32> to vector<1x128xf32>
    %183 = arith.addf %182, %11 : vector<1x128xf32>
    %184 = arith.mulf %172, %183 : vector<1x128xf32>
    %185 = arith.addf %181, %184 : vector<1x128xf32>
    %186 = math.tanh %185 : vector<1x128xf32>
    %cst_43 = arith.constant 1.000000e+00 : f32
    %187 = vector.broadcast %cst_43 : f32 to vector<1x128xf32>
    %188 = arith.subf %187, %180 : vector<1x128xf32>
    %189 = arith.mulf %188, %186 : vector<1x128xf32>
    %190 = arith.mulf %180, %161 : vector<1x128xf32>
    %191 = arith.addf %189, %190 : vector<1x128xf32>
    %c5 = arith.constant 5 : index
    %c0_44 = arith.constant 0 : index
    %192 = vector.load %arg8[%c5, %c0_44] : memref<8x128xf32, #tpu.memory_space<vmem>>, vector<1x128xf32>
    tpu.vector_store %arg8[%c5, %c0_44], %191 {strides = array<i32>} : memref<8x128xf32, #tpu.memory_space<vmem>>, vector<1x128xf32>,
    %cst_45 = arith.constant dense<0.000000e+00> : vector<1x384xf32>
    %193 = tpu.matmul %191, %9, %cst_45 {dimension_numbers = #tpu.dot_dimension_numbers<[1], [0], [0], [1], [0, 0, 1, 1], [], []>} : vector<1x128xf32>, vector<128x384xf32>, vector<1x384xf32> -> vector<1x384xf32>
    %194 = vector.extract_strided_slice %7 {offsets = [6, 0], sizes = [1, 384], strides = [1, 1]} : vector<8x384xf32> to vector<1x384xf32>
    %195 = vector.extract_strided_slice %194 {offsets = [0, 0], sizes = [1, 128], strides = [1, 1]} : vector<1x384xf32> to vector<1x128xf32>
    %196 = vector.extract_strided_slice %193 {offsets = [0, 0], sizes = [1, 128], strides = [1, 1]} : vector<1x384xf32> to vector<1x128xf32>
    %197 = arith.addf %195, %196 : vector<1x128xf32>
    %198 = arith.negf %197 : vector<1x128xf32>
    %199 = math.exp %198 : vector<1x128xf32>
    %cst_46 = arith.constant 1.000000e+00 : f32
    %200 = vector.broadcast %cst_46 : f32 to vector<1x128xf32>
    %201 = arith.addf %200, %199 : vector<1x128xf32>
    %202 = arith.divf %200, %201 : vector<1x128xf32>
    %203 = vector.extract_strided_slice %194 {offsets = [0, 128], sizes = [1, 128], strides = [1, 1]} : vector<1x384xf32> to vector<1x128xf32>
    %204 = vector.extract_strided_slice %193 {offsets = [0, 128], sizes = [1, 128], strides = [1, 1]} : vector<1x384xf32> to vector<1x128xf32>
    %205 = arith.addf %203, %204 : vector<1x128xf32>
    %206 = arith.negf %205 : vector<1x128xf32>
    %207 = math.exp %206 : vector<1x128xf32>
    %cst_47 = arith.constant 1.000000e+00 : f32
    %208 = vector.broadcast %cst_47 : f32 to vector<1x128xf32>
    %209 = arith.addf %208, %207 : vector<1x128xf32>
    %210 = arith.divf %208, %209 : vector<1x128xf32>
    %211 = vector.extract_strided_slice %194 {offsets = [0, 256], sizes = [1, 128], strides = [1, 1]} : vector<1x384xf32> to vector<1x128xf32>
    %212 = vector.extract_strided_slice %193 {offsets = [0, 256], sizes = [1, 128], strides = [1, 1]} : vector<1x384xf32> to vector<1x128xf32>
    %213 = arith.addf %212, %11 : vector<1x128xf32>
    %214 = arith.mulf %202, %213 : vector<1x128xf32>
    %215 = arith.addf %211, %214 : vector<1x128xf32>
    %216 = math.tanh %215 : vector<1x128xf32>
    %cst_48 = arith.constant 1.000000e+00 : f32
    %217 = vector.broadcast %cst_48 : f32 to vector<1x128xf32>
    %218 = arith.subf %217, %210 : vector<1x128xf32>
    %219 = arith.mulf %218, %216 : vector<1x128xf32>
    %220 = arith.mulf %210, %191 : vector<1x128xf32>
    %221 = arith.addf %219, %220 : vector<1x128xf32>
    %c6 = arith.constant 6 : index
    %c0_49 = arith.constant 0 : index
    %222 = vector.load %arg8[%c6, %c0_49] : memref<8x128xf32, #tpu.memory_space<vmem>>, vector<1x128xf32>
    tpu.vector_store %arg8[%c6, %c0_49], %221 {strides = array<i32>} : memref<8x128xf32, #tpu.memory_space<vmem>>, vector<1x128xf32>,
    %cst_50 = arith.constant dense<0.000000e+00> : vector<1x384xf32>
    %223 = tpu.matmul %221, %9, %cst_50 {dimension_numbers = #tpu.dot_dimension_numbers<[1], [0], [0], [1], [0, 0, 1, 1], [], []>} : vector<1x128xf32>, vector<128x384xf32>, vector<1x384xf32> -> vector<1x384xf32>
    %224 = vector.extract_strided_slice %7 {offsets = [7, 0], sizes = [1, 384], strides = [1, 1]} : vector<8x384xf32> to vector<1x384xf32>
    %225 = vector.extract_strided_slice %224 {offsets = [0, 0], sizes = [1, 128], strides = [1, 1]} : vector<1x384xf32> to vector<1x128xf32>
    %226 = vector.extract_strided_slice %223 {offsets = [0, 0], sizes = [1, 128], strides = [1, 1]} : vector<1x384xf32> to vector<1x128xf32>
    %227 = arith.addf %225, %226 : vector<1x128xf32>
    %228 = arith.negf %227 : vector<1x128xf32>
    %229 = math.exp %228 : vector<1x128xf32>
    %cst_51 = arith.constant 1.000000e+00 : f32
    %230 = vector.broadcast %cst_51 : f32 to vector<1x128xf32>
    %231 = arith.addf %230, %229 : vector<1x128xf32>
    %232 = arith.divf %230, %231 : vector<1x128xf32>
    %233 = vector.extract_strided_slice %224 {offsets = [0, 128], sizes = [1, 128], strides = [1, 1]} : vector<1x384xf32> to vector<1x128xf32>
    %234 = vector.extract_strided_slice %223 {offsets = [0, 128], sizes = [1, 128], strides = [1, 1]} : vector<1x384xf32> to vector<1x128xf32>
    %235 = arith.addf %233, %234 : vector<1x128xf32>
    %236 = arith.negf %235 : vector<1x128xf32>
    %237 = math.exp %236 : vector<1x128xf32>
    %cst_52 = arith.constant 1.000000e+00 : f32
    %238 = vector.broadcast %cst_52 : f32 to vector<1x128xf32>
    %239 = arith.addf %238, %237 : vector<1x128xf32>
    %240 = arith.divf %238, %239 : vector<1x128xf32>
    %241 = vector.extract_strided_slice %224 {offsets = [0, 256], sizes = [1, 128], strides = [1, 1]} : vector<1x384xf32> to vector<1x128xf32>
    %242 = vector.extract_strided_slice %223 {offsets = [0, 256], sizes = [1, 128], strides = [1, 1]} : vector<1x384xf32> to vector<1x128xf32>
    %243 = arith.addf %242, %11 : vector<1x128xf32>
    %244 = arith.mulf %232, %243 : vector<1x128xf32>
    %245 = arith.addf %241, %244 : vector<1x128xf32>
    %246 = math.tanh %245 : vector<1x128xf32>
    %cst_53 = arith.constant 1.000000e+00 : f32
    %247 = vector.broadcast %cst_53 : f32 to vector<1x128xf32>
    %248 = arith.subf %247, %240 : vector<1x128xf32>
    %249 = arith.mulf %248, %246 : vector<1x128xf32>
    %250 = arith.mulf %240, %221 : vector<1x128xf32>
    %251 = arith.addf %249, %250 : vector<1x128xf32>
    %c7 = arith.constant 7 : index
    %c0_54 = arith.constant 0 : index
    %252 = vector.load %arg8[%c7, %c0_54] : memref<8x128xf32, #tpu.memory_space<vmem>>, vector<1x128xf32>
    tpu.vector_store %arg8[%c7, %c0_54], %251 {strides = array<i32>} : memref<8x128xf32, #tpu.memory_space<vmem>>, vector<1x128xf32>,
    %c0_55 = arith.constant 0 : index
    %c0_56 = arith.constant 0 : index
    %253 = vector.load %arg8[%c0_55, %c0_56] : memref<8x128xf32, #tpu.memory_space<vmem>>, vector<8x128xf32>
    %c1_57 = arith.constant 1 : index
    %c0_58 = arith.constant 0 : index
    %c0_59 = arith.constant 0 : index
    %254 = vector.load %arg1[%c1_57, %c0_58, %c0_59] : memref<2x128x384xf32, #tpu.memory_space<vmem>>, vector<1x128x384xf32>
    %255 = vector.shape_cast %254 : vector<1x128x384xf32> to vector<128x384xf32>
    %cst_60 = arith.constant dense<0.000000e+00> : vector<8x384xf32>
    %256 = tpu.matmul %253, %255, %cst_60 {dimension_numbers = #tpu.dot_dimension_numbers<[1], [0], [0], [1], [0, 0, 1, 1], [], []>} : vector<8x128xf32>, vector<128x384xf32>, vector<8x384xf32> -> vector<8x384xf32>
    %c1_61 = arith.constant 1 : index
    %c0_62 = arith.constant 0 : index
    %c0_63 = arith.constant 0 : index
    %257 = vector.load %arg3[%c1_61, %c0_62, %c0_63] : memref<2x1x384xf32, #tpu.memory_space<vmem>>, vector<1x1x384xf32>
    %258 = vector.shape_cast %257 : vector<1x1x384xf32> to vector<1x384xf32>
    %259 = vector.broadcast %258 : vector<1x384xf32> to vector<8x384xf32>
    %260 = arith.addf %256, %259 : vector<8x384xf32>
    %c1_64 = arith.constant 1 : index
    %c0_65 = arith.constant 0 : index
    %c0_66 = arith.constant 0 : index
    %261 = vector.load %arg2[%c1_64, %c0_65, %c0_66] : memref<2x128x384xf32, #tpu.memory_space<vmem>>, vector<1x128x384xf32>
    %262 = vector.shape_cast %261 : vector<1x128x384xf32> to vector<128x384xf32>
    %c1_67 = arith.constant 1 : index
    %c0_68 = arith.constant 0 : index
    %c0_69 = arith.constant 0 : index
    %263 = vector.load %arg4[%c1_67, %c0_68, %c0_69] : memref<2x1x128xf32, #tpu.memory_space<vmem>>, vector<1x1x128xf32>
    %264 = vector.shape_cast %263 : vector<1x1x128xf32> to vector<1x128xf32>
    %cst_70 = arith.constant 0.000000e+00 : f32
    %265 = vector.broadcast %cst_70 : f32 to vector<1x128xf32>
    %cst_71 = arith.constant dense<0.000000e+00> : vector<1x384xf32>
    %266 = tpu.matmul %265, %262, %cst_71 {dimension_numbers = #tpu.dot_dimension_numbers<[1], [0], [0], [1], [0, 0, 1, 1], [], []>} : vector<1x128xf32>, vector<128x384xf32>, vector<1x384xf32> -> vector<1x384xf32>
    %267 = vector.extract_strided_slice %260 {offsets = [0, 0], sizes = [1, 384], strides = [1, 1]} : vector<8x384xf32> to vector<1x384xf32>
    %268 = vector.extract_strided_slice %267 {offsets = [0, 0], sizes = [1, 128], strides = [1, 1]} : vector<1x384xf32> to vector<1x128xf32>
    %269 = vector.extract_strided_slice %266 {offsets = [0, 0], sizes = [1, 128], strides = [1, 1]} : vector<1x384xf32> to vector<1x128xf32>
    %270 = arith.addf %268, %269 : vector<1x128xf32>
    %271 = arith.negf %270 : vector<1x128xf32>
    %272 = math.exp %271 : vector<1x128xf32>
    %cst_72 = arith.constant 1.000000e+00 : f32
    %273 = vector.broadcast %cst_72 : f32 to vector<1x128xf32>
    %274 = arith.addf %273, %272 : vector<1x128xf32>
    %275 = arith.divf %273, %274 : vector<1x128xf32>
    %276 = vector.extract_strided_slice %267 {offsets = [0, 128], sizes = [1, 128], strides = [1, 1]} : vector<1x384xf32> to vector<1x128xf32>
    %277 = vector.extract_strided_slice %266 {offsets = [0, 128], sizes = [1, 128], strides = [1, 1]} : vector<1x384xf32> to vector<1x128xf32>
    %278 = arith.addf %276, %277 : vector<1x128xf32>
    %279 = arith.negf %278 : vector<1x128xf32>
    %280 = math.exp %279 : vector<1x128xf32>
    %cst_73 = arith.constant 1.000000e+00 : f32
    %281 = vector.broadcast %cst_73 : f32 to vector<1x128xf32>
    %282 = arith.addf %281, %280 : vector<1x128xf32>
    %283 = arith.divf %281, %282 : vector<1x128xf32>
    %284 = vector.extract_strided_slice %267 {offsets = [0, 256], sizes = [1, 128], strides = [1, 1]} : vector<1x384xf32> to vector<1x128xf32>
    %285 = vector.extract_strided_slice %266 {offsets = [0, 256], sizes = [1, 128], strides = [1, 1]} : vector<1x384xf32> to vector<1x128xf32>
    %286 = arith.addf %285, %264 : vector<1x128xf32>
    %287 = arith.mulf %275, %286 : vector<1x128xf32>
    %288 = arith.addf %284, %287 : vector<1x128xf32>
    %289 = math.tanh %288 : vector<1x128xf32>
    %cst_74 = arith.constant 1.000000e+00 : f32
    %290 = vector.broadcast %cst_74 : f32 to vector<1x128xf32>
    %291 = arith.subf %290, %283 : vector<1x128xf32>
    %292 = arith.mulf %291, %289 : vector<1x128xf32>
    %293 = arith.mulf %283, %265 : vector<1x128xf32>
    %294 = arith.addf %292, %293 : vector<1x128xf32>
    %c0_75 = arith.constant 0 : index
    %c0_76 = arith.constant 0 : index
    %295 = vector.load %arg8[%c0_75, %c0_76] : memref<8x128xf32, #tpu.memory_space<vmem>>, vector<1x128xf32>
    tpu.vector_store %arg8[%c0_75, %c0_76], %294 {strides = array<i32>} : memref<8x128xf32, #tpu.memory_space<vmem>>, vector<1x128xf32>,
    %cst_77 = arith.constant dense<0.000000e+00> : vector<1x384xf32>
    %296 = tpu.matmul %294, %262, %cst_77 {dimension_numbers = #tpu.dot_dimension_numbers<[1], [0], [0], [1], [0, 0, 1, 1], [], []>} : vector<1x128xf32>, vector<128x384xf32>, vector<1x384xf32> -> vector<1x384xf32>
    %297 = vector.extract_strided_slice %260 {offsets = [1, 0], sizes = [1, 384], strides = [1, 1]} : vector<8x384xf32> to vector<1x384xf32>
    %298 = vector.extract_strided_slice %297 {offsets = [0, 0], sizes = [1, 128], strides = [1, 1]} : vector<1x384xf32> to vector<1x128xf32>
    %299 = vector.extract_strided_slice %296 {offsets = [0, 0], sizes = [1, 128], strides = [1, 1]} : vector<1x384xf32> to vector<1x128xf32>
    %300 = arith.addf %298, %299 : vector<1x128xf32>
    %301 = arith.negf %300 : vector<1x128xf32>
    %302 = math.exp %301 : vector<1x128xf32>
    %cst_78 = arith.constant 1.000000e+00 : f32
    %303 = vector.broadcast %cst_78 : f32 to vector<1x128xf32>
    %304 = arith.addf %303, %302 : vector<1x128xf32>
    %305 = arith.divf %303, %304 : vector<1x128xf32>
    %306 = vector.extract_strided_slice %297 {offsets = [0, 128], sizes = [1, 128], strides = [1, 1]} : vector<1x384xf32> to vector<1x128xf32>
    %307 = vector.extract_strided_slice %296 {offsets = [0, 128], sizes = [1, 128], strides = [1, 1]} : vector<1x384xf32> to vector<1x128xf32>
    %308 = arith.addf %306, %307 : vector<1x128xf32>
    %309 = arith.negf %308 : vector<1x128xf32>
    %310 = math.exp %309 : vector<1x128xf32>
    %cst_79 = arith.constant 1.000000e+00 : f32
    %311 = vector.broadcast %cst_79 : f32 to vector<1x128xf32>
    %312 = arith.addf %311, %310 : vector<1x128xf32>
    %313 = arith.divf %311, %312 : vector<1x128xf32>
    %314 = vector.extract_strided_slice %297 {offsets = [0, 256], sizes = [1, 128], strides = [1, 1]} : vector<1x384xf32> to vector<1x128xf32>
    %315 = vector.extract_strided_slice %296 {offsets = [0, 256], sizes = [1, 128], strides = [1, 1]} : vector<1x384xf32> to vector<1x128xf32>
    %316 = arith.addf %315, %264 : vector<1x128xf32>
    %317 = arith.mulf %305, %316 : vector<1x128xf32>
    %318 = arith.addf %314, %317 : vector<1x128xf32>
    %319 = math.tanh %318 : vector<1x128xf32>
    %cst_80 = arith.constant 1.000000e+00 : f32
    %320 = vector.broadcast %cst_80 : f32 to vector<1x128xf32>
    %321 = arith.subf %320, %313 : vector<1x128xf32>
    %322 = arith.mulf %321, %319 : vector<1x128xf32>
    %323 = arith.mulf %313, %294 : vector<1x128xf32>
    %324 = arith.addf %322, %323 : vector<1x128xf32>
    %c1_81 = arith.constant 1 : index
    %c0_82 = arith.constant 0 : index
    %325 = vector.load %arg8[%c1_81, %c0_82] : memref<8x128xf32, #tpu.memory_space<vmem>>, vector<1x128xf32>
    tpu.vector_store %arg8[%c1_81, %c0_82], %324 {strides = array<i32>} : memref<8x128xf32, #tpu.memory_space<vmem>>, vector<1x128xf32>,
    %cst_83 = arith.constant dense<0.000000e+00> : vector<1x384xf32>
    %326 = tpu.matmul %324, %262, %cst_83 {dimension_numbers = #tpu.dot_dimension_numbers<[1], [0], [0], [1], [0, 0, 1, 1], [], []>} : vector<1x128xf32>, vector<128x384xf32>, vector<1x384xf32> -> vector<1x384xf32>
    %327 = vector.extract_strided_slice %260 {offsets = [2, 0], sizes = [1, 384], strides = [1, 1]} : vector<8x384xf32> to vector<1x384xf32>
    %328 = vector.extract_strided_slice %327 {offsets = [0, 0], sizes = [1, 128], strides = [1, 1]} : vector<1x384xf32> to vector<1x128xf32>
    %329 = vector.extract_strided_slice %326 {offsets = [0, 0], sizes = [1, 128], strides = [1, 1]} : vector<1x384xf32> to vector<1x128xf32>
    %330 = arith.addf %328, %329 : vector<1x128xf32>
    %331 = arith.negf %330 : vector<1x128xf32>
    %332 = math.exp %331 : vector<1x128xf32>
    %cst_84 = arith.constant 1.000000e+00 : f32
    %333 = vector.broadcast %cst_84 : f32 to vector<1x128xf32>
    %334 = arith.addf %333, %332 : vector<1x128xf32>
    %335 = arith.divf %333, %334 : vector<1x128xf32>
    %336 = vector.extract_strided_slice %327 {offsets = [0, 128], sizes = [1, 128], strides = [1, 1]} : vector<1x384xf32> to vector<1x128xf32>
    %337 = vector.extract_strided_slice %326 {offsets = [0, 128], sizes = [1, 128], strides = [1, 1]} : vector<1x384xf32> to vector<1x128xf32>
    %338 = arith.addf %336, %337 : vector<1x128xf32>
    %339 = arith.negf %338 : vector<1x128xf32>
    %340 = math.exp %339 : vector<1x128xf32>
    %cst_85 = arith.constant 1.000000e+00 : f32
    %341 = vector.broadcast %cst_85 : f32 to vector<1x128xf32>
    %342 = arith.addf %341, %340 : vector<1x128xf32>
    %343 = arith.divf %341, %342 : vector<1x128xf32>
    %344 = vector.extract_strided_slice %327 {offsets = [0, 256], sizes = [1, 128], strides = [1, 1]} : vector<1x384xf32> to vector<1x128xf32>
    %345 = vector.extract_strided_slice %326 {offsets = [0, 256], sizes = [1, 128], strides = [1, 1]} : vector<1x384xf32> to vector<1x128xf32>
    %346 = arith.addf %345, %264 : vector<1x128xf32>
    %347 = arith.mulf %335, %346 : vector<1x128xf32>
    %348 = arith.addf %344, %347 : vector<1x128xf32>
    %349 = math.tanh %348 : vector<1x128xf32>
    %cst_86 = arith.constant 1.000000e+00 : f32
    %350 = vector.broadcast %cst_86 : f32 to vector<1x128xf32>
    %351 = arith.subf %350, %343 : vector<1x128xf32>
    %352 = arith.mulf %351, %349 : vector<1x128xf32>
    %353 = arith.mulf %343, %324 : vector<1x128xf32>
    %354 = arith.addf %352, %353 : vector<1x128xf32>
    %c2_87 = arith.constant 2 : index
    %c0_88 = arith.constant 0 : index
    %355 = vector.load %arg8[%c2_87, %c0_88] : memref<8x128xf32, #tpu.memory_space<vmem>>, vector<1x128xf32>
    tpu.vector_store %arg8[%c2_87, %c0_88], %354 {strides = array<i32>} : memref<8x128xf32, #tpu.memory_space<vmem>>, vector<1x128xf32>,
    %cst_89 = arith.constant dense<0.000000e+00> : vector<1x384xf32>
    %356 = tpu.matmul %354, %262, %cst_89 {dimension_numbers = #tpu.dot_dimension_numbers<[1], [0], [0], [1], [0, 0, 1, 1], [], []>} : vector<1x128xf32>, vector<128x384xf32>, vector<1x384xf32> -> vector<1x384xf32>
    %357 = vector.extract_strided_slice %260 {offsets = [3, 0], sizes = [1, 384], strides = [1, 1]} : vector<8x384xf32> to vector<1x384xf32>
    %358 = vector.extract_strided_slice %357 {offsets = [0, 0], sizes = [1, 128], strides = [1, 1]} : vector<1x384xf32> to vector<1x128xf32>
    %359 = vector.extract_strided_slice %356 {offsets = [0, 0], sizes = [1, 128], strides = [1, 1]} : vector<1x384xf32> to vector<1x128xf32>
    %360 = arith.addf %358, %359 : vector<1x128xf32>
    %361 = arith.negf %360 : vector<1x128xf32>
    %362 = math.exp %361 : vector<1x128xf32>
    %cst_90 = arith.constant 1.000000e+00 : f32
    %363 = vector.broadcast %cst_90 : f32 to vector<1x128xf32>
    %364 = arith.addf %363, %362 : vector<1x128xf32>
    %365 = arith.divf %363, %364 : vector<1x128xf32>
    %366 = vector.extract_strided_slice %357 {offsets = [0, 128], sizes = [1, 128], strides = [1, 1]} : vector<1x384xf32> to vector<1x128xf32>
    %367 = vector.extract_strided_slice %356 {offsets = [0, 128], sizes = [1, 128], strides = [1, 1]} : vector<1x384xf32> to vector<1x128xf32>
    %368 = arith.addf %366, %367 : vector<1x128xf32>
    %369 = arith.negf %368 : vector<1x128xf32>
    %370 = math.exp %369 : vector<1x128xf32>
    %cst_91 = arith.constant 1.000000e+00 : f32
    %371 = vector.broadcast %cst_91 : f32 to vector<1x128xf32>
    %372 = arith.addf %371, %370 : vector<1x128xf32>
    %373 = arith.divf %371, %372 : vector<1x128xf32>
    %374 = vector.extract_strided_slice %357 {offsets = [0, 256], sizes = [1, 128], strides = [1, 1]} : vector<1x384xf32> to vector<1x128xf32>
    %375 = vector.extract_strided_slice %356 {offsets = [0, 256], sizes = [1, 128], strides = [1, 1]} : vector<1x384xf32> to vector<1x128xf32>
    %376 = arith.addf %375, %264 : vector<1x128xf32>
    %377 = arith.mulf %365, %376 : vector<1x128xf32>
    %378 = arith.addf %374, %377 : vector<1x128xf32>
    %379 = math.tanh %378 : vector<1x128xf32>
    %cst_92 = arith.constant 1.000000e+00 : f32
    %380 = vector.broadcast %cst_92 : f32 to vector<1x128xf32>
    %381 = arith.subf %380, %373 : vector<1x128xf32>
    %382 = arith.mulf %381, %379 : vector<1x128xf32>
    %383 = arith.mulf %373, %354 : vector<1x128xf32>
    %384 = arith.addf %382, %383 : vector<1x128xf32>
    %c3_93 = arith.constant 3 : index
    %c0_94 = arith.constant 0 : index
    %385 = vector.load %arg8[%c3_93, %c0_94] : memref<8x128xf32, #tpu.memory_space<vmem>>, vector<1x128xf32>
    tpu.vector_store %arg8[%c3_93, %c0_94], %384 {strides = array<i32>} : memref<8x128xf32, #tpu.memory_space<vmem>>, vector<1x128xf32>,
    %cst_95 = arith.constant dense<0.000000e+00> : vector<1x384xf32>
    %386 = tpu.matmul %384, %262, %cst_95 {dimension_numbers = #tpu.dot_dimension_numbers<[1], [0], [0], [1], [0, 0, 1, 1], [], []>} : vector<1x128xf32>, vector<128x384xf32>, vector<1x384xf32> -> vector<1x384xf32>
    %387 = vector.extract_strided_slice %260 {offsets = [4, 0], sizes = [1, 384], strides = [1, 1]} : vector<8x384xf32> to vector<1x384xf32>
    %388 = vector.extract_strided_slice %387 {offsets = [0, 0], sizes = [1, 128], strides = [1, 1]} : vector<1x384xf32> to vector<1x128xf32>
    %389 = vector.extract_strided_slice %386 {offsets = [0, 0], sizes = [1, 128], strides = [1, 1]} : vector<1x384xf32> to vector<1x128xf32>
    %390 = arith.addf %388, %389 : vector<1x128xf32>
    %391 = arith.negf %390 : vector<1x128xf32>
    %392 = math.exp %391 : vector<1x128xf32>
    %cst_96 = arith.constant 1.000000e+00 : f32
    %393 = vector.broadcast %cst_96 : f32 to vector<1x128xf32>
    %394 = arith.addf %393, %392 : vector<1x128xf32>
    %395 = arith.divf %393, %394 : vector<1x128xf32>
    %396 = vector.extract_strided_slice %387 {offsets = [0, 128], sizes = [1, 128], strides = [1, 1]} : vector<1x384xf32> to vector<1x128xf32>
    %397 = vector.extract_strided_slice %386 {offsets = [0, 128], sizes = [1, 128], strides = [1, 1]} : vector<1x384xf32> to vector<1x128xf32>
    %398 = arith.addf %396, %397 : vector<1x128xf32>
    %399 = arith.negf %398 : vector<1x128xf32>
    %400 = math.exp %399 : vector<1x128xf32>
    %cst_97 = arith.constant 1.000000e+00 : f32
    %401 = vector.broadcast %cst_97 : f32 to vector<1x128xf32>
    %402 = arith.addf %401, %400 : vector<1x128xf32>
    %403 = arith.divf %401, %402 : vector<1x128xf32>
    %404 = vector.extract_strided_slice %387 {offsets = [0, 256], sizes = [1, 128], strides = [1, 1]} : vector<1x384xf32> to vector<1x128xf32>
    %405 = vector.extract_strided_slice %386 {offsets = [0, 256], sizes = [1, 128], strides = [1, 1]} : vector<1x384xf32> to vector<1x128xf32>
    %406 = arith.addf %405, %264 : vector<1x128xf32>
    %407 = arith.mulf %395, %406 : vector<1x128xf32>
    %408 = arith.addf %404, %407 : vector<1x128xf32>
    %409 = math.tanh %408 : vector<1x128xf32>
    %cst_98 = arith.constant 1.000000e+00 : f32
    %410 = vector.broadcast %cst_98 : f32 to vector<1x128xf32>
    %411 = arith.subf %410, %403 : vector<1x128xf32>
    %412 = arith.mulf %411, %409 : vector<1x128xf32>
    %413 = arith.mulf %403, %384 : vector<1x128xf32>
    %414 = arith.addf %412, %413 : vector<1x128xf32>
    %c4_99 = arith.constant 4 : index
    %c0_100 = arith.constant 0 : index
    %415 = vector.load %arg8[%c4_99, %c0_100] : memref<8x128xf32, #tpu.memory_space<vmem>>, vector<1x128xf32>
    tpu.vector_store %arg8[%c4_99, %c0_100], %414 {strides = array<i32>} : memref<8x128xf32, #tpu.memory_space<vmem>>, vector<1x128xf32>,
    %cst_101 = arith.constant dense<0.000000e+00> : vector<1x384xf32>
    %416 = tpu.matmul %414, %262, %cst_101 {dimension_numbers = #tpu.dot_dimension_numbers<[1], [0], [0], [1], [0, 0, 1, 1], [], []>} : vector<1x128xf32>, vector<128x384xf32>, vector<1x384xf32> -> vector<1x384xf32>
    %417 = vector.extract_strided_slice %260 {offsets = [5, 0], sizes = [1, 384], strides = [1, 1]} : vector<8x384xf32> to vector<1x384xf32>
    %418 = vector.extract_strided_slice %417 {offsets = [0, 0], sizes = [1, 128], strides = [1, 1]} : vector<1x384xf32> to vector<1x128xf32>
    %419 = vector.extract_strided_slice %416 {offsets = [0, 0], sizes = [1, 128], strides = [1, 1]} : vector<1x384xf32> to vector<1x128xf32>
    %420 = arith.addf %418, %419 : vector<1x128xf32>
    %421 = arith.negf %420 : vector<1x128xf32>
    %422 = math.exp %421 : vector<1x128xf32>
    %cst_102 = arith.constant 1.000000e+00 : f32
    %423 = vector.broadcast %cst_102 : f32 to vector<1x128xf32>
    %424 = arith.addf %423, %422 : vector<1x128xf32>
    %425 = arith.divf %423, %424 : vector<1x128xf32>
    %426 = vector.extract_strided_slice %417 {offsets = [0, 128], sizes = [1, 128], strides = [1, 1]} : vector<1x384xf32> to vector<1x128xf32>
    %427 = vector.extract_strided_slice %416 {offsets = [0, 128], sizes = [1, 128], strides = [1, 1]} : vector<1x384xf32> to vector<1x128xf32>
    %428 = arith.addf %426, %427 : vector<1x128xf32>
    %429 = arith.negf %428 : vector<1x128xf32>
    %430 = math.exp %429 : vector<1x128xf32>
    %cst_103 = arith.constant 1.000000e+00 : f32
    %431 = vector.broadcast %cst_103 : f32 to vector<1x128xf32>
    %432 = arith.addf %431, %430 : vector<1x128xf32>
    %433 = arith.divf %431, %432 : vector<1x128xf32>
    %434 = vector.extract_strided_slice %417 {offsets = [0, 256], sizes = [1, 128], strides = [1, 1]} : vector<1x384xf32> to vector<1x128xf32>
    %435 = vector.extract_strided_slice %416 {offsets = [0, 256], sizes = [1, 128], strides = [1, 1]} : vector<1x384xf32> to vector<1x128xf32>
    %436 = arith.addf %435, %264 : vector<1x128xf32>
    %437 = arith.mulf %425, %436 : vector<1x128xf32>
    %438 = arith.addf %434, %437 : vector<1x128xf32>
    %439 = math.tanh %438 : vector<1x128xf32>
    %cst_104 = arith.constant 1.000000e+00 : f32
    %440 = vector.broadcast %cst_104 : f32 to vector<1x128xf32>
    %441 = arith.subf %440, %433 : vector<1x128xf32>
    %442 = arith.mulf %441, %439 : vector<1x128xf32>
    %443 = arith.mulf %433, %414 : vector<1x128xf32>
    %444 = arith.addf %442, %443 : vector<1x128xf32>
    %c5_105 = arith.constant 5 : index
    %c0_106 = arith.constant 0 : index
    %445 = vector.load %arg8[%c5_105, %c0_106] : memref<8x128xf32, #tpu.memory_space<vmem>>, vector<1x128xf32>
    tpu.vector_store %arg8[%c5_105, %c0_106], %444 {strides = array<i32>} : memref<8x128xf32, #tpu.memory_space<vmem>>, vector<1x128xf32>,
    %cst_107 = arith.constant dense<0.000000e+00> : vector<1x384xf32>
    %446 = tpu.matmul %444, %262, %cst_107 {dimension_numbers = #tpu.dot_dimension_numbers<[1], [0], [0], [1], [0, 0, 1, 1], [], []>} : vector<1x128xf32>, vector<128x384xf32>, vector<1x384xf32> -> vector<1x384xf32>
    %447 = vector.extract_strided_slice %260 {offsets = [6, 0], sizes = [1, 384], strides = [1, 1]} : vector<8x384xf32> to vector<1x384xf32>
    %448 = vector.extract_strided_slice %447 {offsets = [0, 0], sizes = [1, 128], strides = [1, 1]} : vector<1x384xf32> to vector<1x128xf32>
    %449 = vector.extract_strided_slice %446 {offsets = [0, 0], sizes = [1, 128], strides = [1, 1]} : vector<1x384xf32> to vector<1x128xf32>
    %450 = arith.addf %448, %449 : vector<1x128xf32>
    %451 = arith.negf %450 : vector<1x128xf32>
    %452 = math.exp %451 : vector<1x128xf32>
    %cst_108 = arith.constant 1.000000e+00 : f32
    %453 = vector.broadcast %cst_108 : f32 to vector<1x128xf32>
    %454 = arith.addf %453, %452 : vector<1x128xf32>
    %455 = arith.divf %453, %454 : vector<1x128xf32>
    %456 = vector.extract_strided_slice %447 {offsets = [0, 128], sizes = [1, 128], strides = [1, 1]} : vector<1x384xf32> to vector<1x128xf32>
    %457 = vector.extract_strided_slice %446 {offsets = [0, 128], sizes = [1, 128], strides = [1, 1]} : vector<1x384xf32> to vector<1x128xf32>
    %458 = arith.addf %456, %457 : vector<1x128xf32>
    %459 = arith.negf %458 : vector<1x128xf32>
    %460 = math.exp %459 : vector<1x128xf32>
    %cst_109 = arith.constant 1.000000e+00 : f32
    %461 = vector.broadcast %cst_109 : f32 to vector<1x128xf32>
    %462 = arith.addf %461, %460 : vector<1x128xf32>
    %463 = arith.divf %461, %462 : vector<1x128xf32>
    %464 = vector.extract_strided_slice %447 {offsets = [0, 256], sizes = [1, 128], strides = [1, 1]} : vector<1x384xf32> to vector<1x128xf32>
    %465 = vector.extract_strided_slice %446 {offsets = [0, 256], sizes = [1, 128], strides = [1, 1]} : vector<1x384xf32> to vector<1x128xf32>
    %466 = arith.addf %465, %264 : vector<1x128xf32>
    %467 = arith.mulf %455, %466 : vector<1x128xf32>
    %468 = arith.addf %464, %467 : vector<1x128xf32>
    %469 = math.tanh %468 : vector<1x128xf32>
    %cst_110 = arith.constant 1.000000e+00 : f32
    %470 = vector.broadcast %cst_110 : f32 to vector<1x128xf32>
    %471 = arith.subf %470, %463 : vector<1x128xf32>
    %472 = arith.mulf %471, %469 : vector<1x128xf32>
    %473 = arith.mulf %463, %444 : vector<1x128xf32>
    %474 = arith.addf %472, %473 : vector<1x128xf32>
    %c6_111 = arith.constant 6 : index
    %c0_112 = arith.constant 0 : index
    %475 = vector.load %arg8[%c6_111, %c0_112] : memref<8x128xf32, #tpu.memory_space<vmem>>, vector<1x128xf32>
    tpu.vector_store %arg8[%c6_111, %c0_112], %474 {strides = array<i32>} : memref<8x128xf32, #tpu.memory_space<vmem>>, vector<1x128xf32>,
    %cst_113 = arith.constant dense<0.000000e+00> : vector<1x384xf32>
    %476 = tpu.matmul %474, %262, %cst_113 {dimension_numbers = #tpu.dot_dimension_numbers<[1], [0], [0], [1], [0, 0, 1, 1], [], []>} : vector<1x128xf32>, vector<128x384xf32>, vector<1x384xf32> -> vector<1x384xf32>
    %477 = vector.extract_strided_slice %260 {offsets = [7, 0], sizes = [1, 384], strides = [1, 1]} : vector<8x384xf32> to vector<1x384xf32>
    %478 = vector.extract_strided_slice %477 {offsets = [0, 0], sizes = [1, 128], strides = [1, 1]} : vector<1x384xf32> to vector<1x128xf32>
    %479 = vector.extract_strided_slice %476 {offsets = [0, 0], sizes = [1, 128], strides = [1, 1]} : vector<1x384xf32> to vector<1x128xf32>
    %480 = arith.addf %478, %479 : vector<1x128xf32>
    %481 = arith.negf %480 : vector<1x128xf32>
    %482 = math.exp %481 : vector<1x128xf32>
    %cst_114 = arith.constant 1.000000e+00 : f32
    %483 = vector.broadcast %cst_114 : f32 to vector<1x128xf32>
    %484 = arith.addf %483, %482 : vector<1x128xf32>
    %485 = arith.divf %483, %484 : vector<1x128xf32>
    %486 = vector.extract_strided_slice %477 {offsets = [0, 128], sizes = [1, 128], strides = [1, 1]} : vector<1x384xf32> to vector<1x128xf32>
    %487 = vector.extract_strided_slice %476 {offsets = [0, 128], sizes = [1, 128], strides = [1, 1]} : vector<1x384xf32> to vector<1x128xf32>
    %488 = arith.addf %486, %487 : vector<1x128xf32>
    %489 = arith.negf %488 : vector<1x128xf32>
    %490 = math.exp %489 : vector<1x128xf32>
    %cst_115 = arith.constant 1.000000e+00 : f32
    %491 = vector.broadcast %cst_115 : f32 to vector<1x128xf32>
    %492 = arith.addf %491, %490 : vector<1x128xf32>
    %493 = arith.divf %491, %492 : vector<1x128xf32>
    %494 = vector.extract_strided_slice %477 {offsets = [0, 256], sizes = [1, 128], strides = [1, 1]} : vector<1x384xf32> to vector<1x128xf32>
    %495 = vector.extract_strided_slice %476 {offsets = [0, 256], sizes = [1, 128], strides = [1, 1]} : vector<1x384xf32> to vector<1x128xf32>
    %496 = arith.addf %495, %264 : vector<1x128xf32>
    %497 = arith.mulf %485, %496 : vector<1x128xf32>
    %498 = arith.addf %494, %497 : vector<1x128xf32>
    %499 = math.tanh %498 : vector<1x128xf32>
    %cst_116 = arith.constant 1.000000e+00 : f32
    %500 = vector.broadcast %cst_116 : f32 to vector<1x128xf32>
    %501 = arith.subf %500, %493 : vector<1x128xf32>
    %502 = arith.mulf %501, %499 : vector<1x128xf32>
    %503 = arith.mulf %493, %474 : vector<1x128xf32>
    %504 = arith.addf %502, %503 : vector<1x128xf32>
    %c7_117 = arith.constant 7 : index
    %c0_118 = arith.constant 0 : index
    %505 = vector.load %arg8[%c7_117, %c0_118] : memref<8x128xf32, #tpu.memory_space<vmem>>, vector<1x128xf32>
    tpu.vector_store %arg8[%c7_117, %c0_118], %504 {strides = array<i32>} : memref<8x128xf32, #tpu.memory_space<vmem>>, vector<1x128xf32>,
    %c0_119 = arith.constant 0 : index
    %c0_120 = arith.constant 0 : index
    %506 = vector.load %arg8[%c0_119, %c0_120] : memref<8x128xf32, #tpu.memory_space<vmem>>, vector<8x128xf32>
    %c0_121 = arith.constant 0 : index
    %c0_122 = arith.constant 0 : index
    %507 = vector.load %arg5[%c0_121, %c0_122] : memref<128x128xf32, #tpu.memory_space<vmem>>, vector<128x128xf32>
    %cst_123 = arith.constant dense<0.000000e+00> : vector<8x128xf32>
    %508 = tpu.matmul %506, %507, %cst_123 {dimension_numbers = #tpu.dot_dimension_numbers<[1], [0], [0], [1], [0, 0, 1, 1], [], []>} : vector<8x128xf32>, vector<128x128xf32>, vector<8x128xf32> -> vector<8x128xf32>
    %c0_124 = arith.constant 0 : index
    %c0_125 = arith.constant 0 : index
    %509 = vector.load %arg6[%c0_124, %c0_125] : memref<1x128xf32, #tpu.memory_space<vmem>>, vector<1x128xf32>
    %510 = vector.broadcast %509 : vector<1x128xf32> to vector<8x128xf32>
    %511 = arith.addf %508, %510 : vector<8x128xf32>
    %512 = arith.negf %511 : vector<8x128xf32>
    %513 = math.exp %512 : vector<8x128xf32>
    %cst_126 = arith.constant 1.000000e+00 : f32
    %514 = vector.broadcast %cst_126 : f32 to vector<8x128xf32>
    %515 = arith.addf %514, %513 : vector<8x128xf32>
    %516 = arith.divf %514, %515 : vector<8x128xf32>
    %c0_127 = arith.constant 0 : index
    %c0_128 = arith.constant 0 : index
    %517 = vector.load %arg7[%c0_127, %c0_128] : memref<8x128xf32, #tpu.memory_space<vmem>>, vector<8x128xf32>
    tpu.vector_store %arg7[%c0_127, %c0_128], %516 {strides = array<i32>} : memref<8x128xf32, #tpu.memory_space<vmem>>, vector<8x128xf32>,
    return
  }
}

</mosaic_0001>

<llo_original>
// kernel: tpu_custom_call.1
$region0: #{tpu_custom_call.1}
  #allocation0 [shape = 'u32[]', space=smem, size = 0x4, offset = 0x4, fixed_abs, tag = 'smem constant byte address 0x4 - core index']
  #allocation1 [shape = 'u32[144,128]{1,0:T(1,128)}', space=vmem, size = 0x12000, scoped, tag = 'internal scratch']
  #allocation2 [shape = 'f32[8,128]{1,0:T(8,128)}', space=vmem, size = 0x1000, scoped, tag = 'scratch operand']
  %s0 = inlined_call_operand.hbm [shape: f32[8,128], index: 0, kind: input, shape index: {}]
  %s1 = inlined_call_operand.hbm [shape: f32[2,128,384], index: 1, kind: input, shape index: {}]
  %s2 = inlined_call_operand.hbm [shape: f32[2,128,384], index: 2, kind: input, shape index: {}]
  %s3 = inlined_call_operand.vmem [shape: f32[2,1,384], index: 3, kind: input, shape index: {}]
  %s4 = inlined_call_operand.vmem [shape: f32[2,1,128], index: 4, kind: input, shape index: {}]
  %s5 = inlined_call_operand.hbm [shape: f32[128,128], index: 5, kind: input, shape index: {}]
  %s6 = inlined_call_operand.vmem [shape: f32[1,128], index: 6, kind: input, shape index: {}]
  %s7 = inlined_call_operand.hbm [shape: f32[8,128], index: 7, kind: output, shape index: {}]
  %s8 = sld [smem:[#allocation0]]
  $region54: #{tpu_custom_call.1} parent=0
    _
  %s10 = ssub.s32 1, %s8
  %s11 = scalar_select 0, %s10, %s8
  $region1: #{tpu_custom_call.1} parent=0
    #allocation3 [shape = 'u8[4096]{0}', space=vmem, size = 0x1000, scoped, tag = 'input window, operand 0, single buffered']
    #allocation4 [shape = 's32[1]{0}', space=sflag, size = 0x4, scoped, tag = 'scoped memory for tpu_custom_call.1']
    #allocation5 [shape = 's32[1]{0}', space=sflag, size = 0x4, scoped, tag = 'scoped memory for tpu_custom_call.1']
    #allocation6 [shape = 'u8[393216]{0}', space=vmem, size = 0x60000, scoped, tag = 'input window, operand 1, single buffered']
    #allocation7 [shape = 's32[1]{0}', space=sflag, size = 0x4, scoped, tag = 'scoped memory for tpu_custom_call.1']
    #allocation8 [shape = 'u8[393216]{0}', space=vmem, size = 0x60000, scoped, tag = 'input window, operand 2, single buffered']
    #allocation9 [shape = 'u8[65536]{0}', space=vmem, size = 0x10000, scoped, tag = 'input window, operand 5, single buffered']
    #allocation10 [shape = 's32[1]{0}', space=sflag, size = 0x4, scoped, tag = 'scoped memory for tpu_custom_call.1']
    #allocation11 [shape = 'u8[4096]{0}', space=vmem, size = 0x1000, scoped, tag = 'output window, operand 0, single buffered']
    %12 = vsyncpa [#allocation4], 0
    %13 = vsyncpa [#allocation7], 0
    %14 = vsyncpa [#allocation10], 0
    %15 = vsyncpa [#allocation5], 0
    // Predicated region
    $region2: #{tpu_custom_call.1} parent=1 // pred_check
      _
    $region3: #{tpu_custom_call.1} parent=1 // pred_check_branch
      %17 = sbr.rel (0) target = $region5
    $region4: #{tpu_custom_call.1} parent=1 // pred_region
      %s19 = ssub.s32 128, 128
      %20 = vsyncadd [#allocation4], %s19
      %s22 = sshll.u32 [#allocation3], 4
      %s23 = int_to_ptr.vmem [resolvable:$true] %s22
      %25 = dma.hbm_to_vmem [thread:$0]  %s0, 128, %s23, [#allocation4]
    $region5: #{tpu_custom_call.1} parent=1 // pred_fallthru
      _
    // Predicated region
    $region6: #{tpu_custom_call.1} parent=1 // pred_check
      _
    $region7: #{tpu_custom_call.1} parent=1 // pred_check_branch
      %27 = sbr.rel (0) target = $region9
    $region8: #{tpu_custom_call.1} parent=1 // pred_region
      %s29 = ssub.s32 12288, 12288
      %30 = vsyncadd [#allocation7], %s29
      %s31 = sshll.u32 [#allocation6], 4
      %s32 = int_to_ptr.vmem [resolvable:$true] %s31
      %37 = dma.hbm_to_vmem [thread:$0]  %s1, 12288, %s32, [#allocation7], 384, 384, 24
    $region9: #{tpu_custom_call.1} parent=1 // pred_fallthru
      _
    // Predicated region
    $region10: #{tpu_custom_call.1} parent=1 // pred_check
      _
    $region11: #{tpu_custom_call.1} parent=1 // pred_check_branch
      %39 = sbr.rel (0) target = $region13
    $region12: #{tpu_custom_call.1} parent=1 // pred_region
      %s41 = ssub.s32 12288, 12288
      %42 = vsyncadd [#allocation7], %s41
      %s43 = sshll.u32 [#allocation8], 4
      %s44 = int_to_ptr.vmem [resolvable:$true] %s43
      %49 = dma.hbm_to_vmem [thread:$0]  %s2, 12288, %s44, [#allocation7], 384, 384, 24
    $region13: #{tpu_custom_call.1} parent=1 // pred_fallthru
      _
    // Predicated region
    $region14: #{tpu_custom_call.1} parent=1 // pred_check
      _
    $region15: #{tpu_custom_call.1} parent=1 // pred_check_branch
      %51 = sbr.rel (0) target = $region17
    $region16: #{tpu_custom_call.1} parent=1 // pred_region
      _
    $region17: #{tpu_custom_call.1} parent=1 // pred_fallthru
      _
    // Predicated region
    $region18: #{tpu_custom_call.1} parent=1 // pred_check
      _
    $region19: #{tpu_custom_call.1} parent=1 // pred_check_branch
      %53 = sbr.rel (0) target = $region21
    $region20: #{tpu_custom_call.1} parent=1 // pred_region
      _
    $region21: #{tpu_custom_call.1} parent=1 // pred_fallthru
      _
    // Predicated region
    $region22: #{tpu_custom_call.1} parent=1 // pred_check
      _
    $region23: #{tpu_custom_call.1} parent=1 // pred_check_branch
      %55 = sbr.rel (0) target = $region25
    $region24: #{tpu_custom_call.1} parent=1 // pred_region
      %s57 = ssub.s32 2048, 2048
      %58 = vsyncadd [#allocation10], %s57
      %s59 = sshll.u32 [#allocation9], 4
      %s60 = int_to_ptr.vmem [resolvable:$true] %s59
      %65 = dma.hbm_to_vmem [thread:$0]  %s5, 2048, %s60, [#allocation10], 128, 128, 8
    $region25: #{tpu_custom_call.1} parent=1 // pred_fallthru
      _
    // Predicated region
    $region26: #{tpu_custom_call.1} parent=1 // pred_check
      _
    $region27: #{tpu_custom_call.1} parent=1 // pred_check_branch
      %67 = sbr.rel (0) target = $region29
    $region28: #{tpu_custom_call.1} parent=1 // pred_region
      _
    $region29: #{tpu_custom_call.1} parent=1 // pred_fallthru
      _
    // Predicated region
    $region30: #{tpu_custom_call.1} parent=1 // pred_check
      _
    $region31: #{tpu_custom_call.1} parent=1 // pred_check_branch
      %69 = sbr.rel (0) target = $region33
    $region32: #{tpu_custom_call.1} parent=1 // pred_region
      %70 = dma.done [#allocation4], 128
    $region33: #{tpu_custom_call.1} parent=1 // pred_fallthru
      _
    // Predicated region
    $region34: #{tpu_custom_call.1} parent=1 // pred_check
      _
    $region35: #{tpu_custom_call.1} parent=1 // pred_check_branch
      %72 = sbr.rel (0) target = $region37
    $region36: #{tpu_custom_call.1} parent=1 // pred_region
      %73 = dma.done [#allocation7], 12288
    $region37: #{tpu_custom_call.1} parent=1 // pred_fallthru
      _
    // Predicated region
    $region38: #{tpu_custom_call.1} parent=1 // pred_check
      _
    $region39: #{tpu_custom_call.1} parent=1 // pred_check_branch
      %75 = sbr.rel (0) target = $region41
    $region40: #{tpu_custom_call.1} parent=1 // pred_region
      %76 = dma.done [#allocation7], 12288
    $region41: #{tpu_custom_call.1} parent=1 // pred_fallthru
      _
    // Predicated region
    $region42: #{tpu_custom_call.1} parent=1 // pred_check
      _
    $region43: #{tpu_custom_call.1} parent=1 // pred_check_branch
      %78 = sbr.rel (0) target = $region45
    $region44: #{tpu_custom_call.1} parent=1 // pred_region
      %79 = dma.done [#allocation10], 2048
    $region45: #{tpu_custom_call.1} parent=1 // pred_fallthru
      _
    %v80 = vld [vmem:[#allocation3] sm:$0xff]
    %v81 = vld [vmem:[#allocation6] sm:$0xff]
    %v82 = vld [vmem:[#allocation6 + $0x8] sm:$0xff]
    %v83 = vld [vmem:[#allocation6 + $0x10] sm:$0xff]
    %v84 = vld [vmem:[#allocation6 + $0x18] sm:$0xff]
    %v85 = vld [vmem:[#allocation6 + $0x20] sm:$0xff]
    %v86 = vld [vmem:[#allocation6 + $0x28] sm:$0xff]
    %v87 = vld [vmem:[#allocation6 + $0x30] sm:$0xff]
    %v88 = vld [vmem:[#allocation6 + $0x38] sm:$0xff]
    %v89 = vld [vmem:[#allocation6 + $0x40] sm:$0xff]
    %v90 = vld [vmem:[#allocation6 + $0x48] sm:$0xff]
    %v91 = vld [vmem:[#allocation6 + $0x50] sm:$0xff]
    %v92 = vld [vmem:[#allocation6 + $0x58] sm:$0xff]
    %v93 = vld [vmem:[#allocation6 + $0x60] sm:$0xff]
    %v94 = vld [vmem:[#allocation6 + $0x68] sm:$0xff]
    %v95 = vld [vmem:[#allocation6 + $0x70] sm:$0xff]
    %v96 = vld [vmem:[#allocation6 + $0x78] sm:$0xff]
    %v97 = vld [vmem:[#allocation6 + $0x80] sm:$0xff]
    %v98 = vld [vmem:[#allocation6 + $0x88] sm:$0xff]
    %v99 = vld [vmem:[#allocation6 + $0x90] sm:$0xff]
    %v100 = vld [vmem:[#allocation6 + $0x98] sm:$0xff]
    %v101 = vld [vmem:[#allocation6 + $0xa0] sm:$0xff]
    %v102 = vld [vmem:[#allocation6 + $0xa8] sm:$0xff]
    %v103 = vld [vmem:[#allocation6 + $0xb0] sm:$0xff]
    %v104 = vld [vmem:[#allocation6 + $0xb8] sm:$0xff]
    %v105 = vld [vmem:[#allocation6 + $0xc0] sm:$0xff]
    %v106 = vld [vmem:[#allocation6 + $0xc8] sm:$0xff]
    %v107 = vld [vmem:[#allocation6 + $0xd0] sm:$0xff]
    %v108 = vld [vmem:[#allocation6 + $0xd8] sm:$0xff]
    %v109 = vld [vmem:[#allocation6 + $0xe0] sm:$0xff]
    %v110 = vld [vmem:[#allocation6 + $0xe8] sm:$0xff]
    %v111 = vld [vmem:[#allocation6 + $0xf0] sm:$0xff]
    %v112 = vld [vmem:[#allocation6 + $0xf8] sm:$0xff]
    %v113 = vld [vmem:[#allocation6 + $0x100] sm:$0xff]
    %v114 = vld [vmem:[#allocation6 + $0x108] sm:$0xff]
    %v115 = vld [vmem:[#allocation6 + $0x110] sm:$0xff]
    %v116 = vld [vmem:[#allocation6 + $0x118] sm:$0xff]
    %v117 = vld [vmem:[#allocation6 + $0x120] sm:$0xff]
    %v118 = vld [vmem:[#allocation6 + $0x128] sm:$0xff]
    %v119 = vld [vmem:[#allocation6 + $0x130] sm:$0xff]
    %v120 = vld [vmem:[#allocation6 + $0x138] sm:$0xff]
    %v121 = vld [vmem:[#allocation6 + $0x140] sm:$0xff]
    %v122 = vld [vmem:[#allocation6 + $0x148] sm:$0xff]
    %v123 = vld [vmem:[#allocation6 + $0x150] sm:$0xff]
    %v124 = vld [vmem:[#allocation6 + $0x158] sm:$0xff]
    %v125 = vld [vmem:[#allocation6 + $0x160] sm:$0xff]
    %v126 = vld [vmem:[#allocation6 + $0x168] sm:$0xff]
    %v127 = vld [vmem:[#allocation6 + $0x170] sm:$0xff]
    %v128 = vld [vmem:[#allocation6 + $0x178] sm:$0xff]
    %v129 = vld [vmem:[%s3] sm:$0x7]
    %v131 = vlaneseq
    %v132 = vshrl.u32 %v131, 7
    %v133 = vsub.s32 0, %v132
    %v134 = vrot.slane %v129, %v133
    %v135 = vlaneseq
    %v136 = vshrl.u32 %v135, 7
    %v137 = vsub.s32 1, %v136
    %v138 = vrot.slane %v129, %v137
    %v139 = vlaneseq
    %v140 = vshrl.u32 %v139, 7
    %v141 = vsub.s32 2, %v140
    %v142 = vrot.slane %v129, %v141
    %146 = vmatprep.subr.mxu0 %v82
    %147 = vmatpush1.msra.mxu0 %v81
    %148 = vmatprep.subr.mxu0 %v85
    %149 = vmatpush1.msra.mxu0 %v84
    %150 = vmatprep.subr.mxu0 %v88
    %151 = vmatpush1.msra.mxu0 %v87
    %152 = vmatprep.subr.mxu0 %v91
    %153 = vmatpush1.msra.mxu0 %v90
    %154 = vmatprep.subr.mxu0 %v94
    %155 = vmatpush1.msra.mxu0 %v93
    %156 = vmatprep.subr.mxu0 %v97
    %157 = vmatpush1.msra.mxu0 %v96
    %158 = vmatprep.subr.mxu0 %v100
    %159 = vmatpush1.msra.mxu0 %v99
    %160 = vmatprep.subr.mxu0 %v103
    %161 = vmatpush1.msra.mxu0 %v102
    %162 = vmatprep.subr.mxu0 %v106
    %163 = vmatpush1.msra.mxu0 %v105
    %164 = vmatprep.subr.mxu0 %v109
    %165 = vmatpush1.msra.mxu0 %v108
    %166 = vmatprep.subr.mxu0 %v112
    %167 = vmatpush1.msra.mxu0 %v111
    %168 = vmatprep.subr.mxu0 %v115
    %169 = vmatpush1.msra.mxu0 %v114
    %170 = vmatprep.subr.mxu0 %v118
    %171 = vmatpush1.msra.mxu0 %v117
    %172 = vmatprep.subr.mxu0 %v121
    %173 = vmatpush1.msra.mxu0 %v120
    %174 = vmatprep.subr.mxu0 %v124
    %175 = vmatpush1.msra.mxu0 %v123
    %176 = vmatprep.subr.mxu0 %v127
    %177 = vmatpush1.msra.mxu0 %v126
    %178 = vmatprep.subr.mxu0 0.0
    %179 = vmatpush1.msra.mxu0 0.0
    %180 = vmatprep.subr.mxu0 0.0
    %181 = vmatpush1.msra.mxu0 0.0
    %182 = vmatprep.subr.mxu0 0.0
    %183 = vmatpush1.msra.mxu0 0.0
    %184 = vmatprep.subr.mxu0 0.0
    %185 = vmatpush1.msra.mxu0 0.0
    %186 = vmatprep.subr.mxu0 0.0
    %187 = vmatpush1.msra.mxu0 0.0
    %188 = vmatprep.subr.mxu0 0.0
    %189 = vmatpush1.msra.mxu0 0.0
    %190 = vmatprep.subr.mxu0 0.0
    %191 = vmatpush1.msra.mxu0 0.0
    %192 = vmatprep.subr.mxu0 0.0
    %193 = vmatpush1.msra.mxu0 0.0
    %194 = vmatprep.subr.mxu0 0.0
    %195 = vmatpush1.msra.mxu0 0.0
    %196 = vmatprep.subr.mxu0 0.0
    %197 = vmatpush1.msra.mxu0 0.0
    %198 = vmatprep.subr.mxu0 0.0
    %199 = vmatpush1.msra.mxu0 0.0
    %200 = vmatprep.subr.mxu0 0.0
    %201 = vmatpush1.msra.mxu0 0.0
    %202 = vmatprep.subr.mxu0 0.0
    %203 = vmatpush1.msra.mxu0 0.0
    %204 = vmatprep.subr.mxu0 0.0
    %205 = vmatpush1.msra.mxu0 0.0
    %206 = vmatprep.subr.mxu0 0.0
    %207 = vmatpush1.msra.mxu0 0.0
    %208 = vmatprep.subr.mxu0 0.0
    %209 = vmatpush1.msra.mxu0 0.0
    %210 = vmatprep.mubr.f32.mxu0 0.0
    %211 = vmatmul.mubr.f32.gmra.mrb[0].mxu0 %v80
    %v212 = vpop.f32.mrb[0].mxu0
    %v213 = vadd.f32 %v134, %v212
    %v214 = vpop.f32.mrb[0].mxu0
    %v215 = vadd.f32 %v138, %v214
    %216 = vdwg.mxu0
    %217 = vmatprep.subr.mxu0 0.0
    %218 = vmatpush1.msra.mxu0 %v83
    %219 = vmatprep.subr.mxu0 0.0
    %220 = vmatpush1.msra.mxu0 %v86
    %221 = vmatprep.subr.mxu0 0.0
    %222 = vmatpush1.msra.mxu0 %v89
    %223 = vmatprep.subr.mxu0 0.0
    %224 = vmatpush1.msra.mxu0 %v92
    %225 = vmatprep.subr.mxu0 0.0
    %226 = vmatpush1.msra.mxu0 %v95
    %227 = vmatprep.subr.mxu0 0.0
    %228 = vmatpush1.msra.mxu0 %v98
    %229 = vmatprep.subr.mxu0 0.0
    %230 = vmatpush1.msra.mxu0 %v101
    %231 = vmatprep.subr.mxu0 0.0
    %232 = vmatpush1.msra.mxu0 %v104
    %233 = vmatprep.subr.mxu0 0.0
    %234 = vmatpush1.msra.mxu0 %v107
    %235 = vmatprep.subr.mxu0 0.0
    %236 = vmatpush1.msra.mxu0 %v110
    %237 = vmatprep.subr.mxu0 0.0
    %238 = vmatpush1.msra.mxu0 %v113
    %239 = vmatprep.subr.mxu0 0.0
    %240 = vmatpush1.msra.mxu0 %v116
    %241 = vmatprep.subr.mxu0 0.0
    %242 = vmatpush1.msra.mxu0 %v119
    %243 = vmatprep.subr.mxu0 0.0
    %244 = vmatpush1.msra.mxu0 %v122
    %245 = vmatprep.subr.mxu0 0.0
    %246 = vmatpush1.msra.mxu0 %v125
    %247 = vmatprep.subr.mxu0 0.0
    %248 = vmatpush1.msra.mxu0 %v128
    %249 = vmatprep.subr.mxu0 0.0
    %250 = vmatpush1.msra.mxu0 0.0
    %251 = vmatprep.subr.mxu0 0.0
    %252 = vmatpush1.msra.mxu0 0.0
    %253 = vmatprep.subr.mxu0 0.0
    %254 = vmatpush1.msra.mxu0 0.0
    %255 = vmatprep.subr.mxu0 0.0
    %256 = vmatpush1.msra.mxu0 0.0
    %257 = vmatprep.subr.mxu0 0.0
    %258 = vmatpush1.msra.mxu0 0.0
    %259 = vmatprep.subr.mxu0 0.0
    %260 = vmatpush1.msra.mxu0 0.0
    %261 = vmatprep.subr.mxu0 0.0
    %262 = vmatpush1.msra.mxu0 0.0
    %263 = vmatprep.subr.mxu0 0.0
    %264 = vmatpush1.msra.mxu0 0.0
    %265 = vmatprep.subr.mxu0 0.0
    %266 = vmatpush1.msra.mxu0 0.0
    %267 = vmatprep.subr.mxu0 0.0
    %268 = vmatpush1.msra.mxu0 0.0
    %269 = vmatprep.subr.mxu0 0.0
    %270 = vmatpush1.msra.mxu0 0.0
    %271 = vmatprep.subr.mxu0 0.0
    %272 = vmatpush1.msra.mxu0 0.0
    %273 = vmatprep.subr.mxu0 0.0
    %274 = vmatpush1.msra.mxu0 0.0
    %275 = vmatprep.subr.mxu0 0.0
    %276 = vmatpush1.msra.mxu0 0.0
    %277 = vmatprep.subr.mxu0 0.0
    %278 = vmatpush1.msra.mxu0 0.0
    %279 = vmatprep.subr.mxu0 0.0
    %280 = vmatpush1.msra.mxu0 0.0
    %281 = vmatprep.mubr.f32.mxu0 0.0
    %282 = vmatmul.mubr.f32.gmra.mrb[0].mxu0 %v80
    %v283 = vpop.f32.mrb[0].mxu0
    %v284 = vadd.f32 %v142, %v283
    %v285 = vpop.f32.mrb[0].mxu0
    %286 = vdwg.mxu0
    %v287 = vld [vmem:[#allocation8] sm:$0xff]
    %v288 = vld [vmem:[#allocation8 + $0x8] sm:$0xff]
    %v289 = vld [vmem:[#allocation8 + $0x10] sm:$0xff]
    %v290 = vld [vmem:[#allocation8 + $0x18] sm:$0xff]
    %v291 = vld [vmem:[#allocation8 + $0x20] sm:$0xff]
    %v292 = vld [vmem:[#allocation8 + $0x28] sm:$0xff]
    %v293 = vld [vmem:[#allocation8 + $0x30] sm:$0xff]
    %v294 = vld [vmem:[#allocation8 + $0x38] sm:$0xff]
    %v295 = vld [vmem:[#allocation8 + $0x40] sm:$0xff]
    %v296 = vld [vmem:[#allocation8 + $0x48] sm:$0xff]
    %v297 = vld [vmem:[#allocation8 + $0x50] sm:$0xff]
    %v298 = vld [vmem:[#allocation8 + $0x58] sm:$0xff]
    %v299 = vld [vmem:[#allocation8 + $0x60] sm:$0xff]
    %v300 = vld [vmem:[#allocation8 + $0x68] sm:$0xff]
    %v301 = vld [vmem:[#allocation8 + $0x70] sm:$0xff]
    %v302 = vld [vmem:[#allocation8 + $0x78] sm:$0xff]
    %v303 = vld [vmem:[#allocation8 + $0x80] sm:$0xff]
    %v304 = vld [vmem:[#allocation8 + $0x88] sm:$0xff]
    %v305 = vld [vmem:[#allocation8 + $0x90] sm:$0xff]
    %v306 = vld [vmem:[#allocation8 + $0x98] sm:$0xff]
    %v307 = vld [vmem:[#allocation8 + $0xa0] sm:$0xff]
    %v308 = vld [vmem:[#allocation8 + $0xa8] sm:$0xff]
    %v309 = vld [vmem:[#allocation8 + $0xb0] sm:$0xff]
    %v310 = vld [vmem:[#allocation8 + $0xb8] sm:$0xff]
    %v311 = vld [vmem:[#allocation8 + $0xc0] sm:$0xff]
    %v312 = vld [vmem:[#allocation8 + $0xc8] sm:$0xff]
    %v313 = vld [vmem:[#allocation8 + $0xd0] sm:$0xff]
    %v314 = vld [vmem:[#allocation8 + $0xd8] sm:$0xff]
    %v315 = vld [vmem:[#allocation8 + $0xe0] sm:$0xff]
    %v316 = vld [vmem:[#allocation8 + $0xe8] sm:$0xff]
    %v317 = vld [vmem:[#allocation8 + $0xf0] sm:$0xff]
    %v318 = vld [vmem:[#allocation8 + $0xf8] sm:$0xff]
    %v319 = vld [vmem:[#allocation8 + $0x100] sm:$0xff]
    %v320 = vld [vmem:[#allocation8 + $0x108] sm:$0xff]
    %v321 = vld [vmem:[#allocation8 + $0x110] sm:$0xff]
    %v322 = vld [vmem:[#allocation8 + $0x118] sm:$0xff]
    %v323 = vld [vmem:[#allocation8 + $0x120] sm:$0xff]
    %v324 = vld [vmem:[#allocation8 + $0x128] sm:$0xff]
    %v325 = vld [vmem:[#allocation8 + $0x130] sm:$0xff]
    %v326 = vld [vmem:[#allocation8 + $0x138] sm:$0xff]
    %v327 = vld [vmem:[#allocation8 + $0x140] sm:$0xff]
    %v328 = vld [vmem:[#allocation8 + $0x148] sm:$0xff]
    %v329 = vld [vmem:[#allocation8 + $0x150] sm:$0xff]
    %v330 = vld [vmem:[#allocation8 + $0x158] sm:$0xff]
    %v331 = vld [vmem:[#allocation8 + $0x160] sm:$0xff]
    %v332 = vld [vmem:[#allocation8 + $0x168] sm:$0xff]
    %v333 = vld [vmem:[#allocation8 + $0x170] sm:$0xff]
    %v334 = vld [vmem:[#allocation8 + $0x178] sm:$0xff]
    %v335 = vld [vmem:[%s4] sm:$0x1]
    %336 = vmatprep.subr.mxu0 %v288
    %337 = vmatpush1.msra.mxu0 %v287
    %338 = vmatprep.subr.mxu0 %v291
    %339 = vmatpush1.msra.mxu0 %v290
    %340 = vmatprep.subr.mxu0 %v294
    %341 = vmatpush1.msra.mxu0 %v293
    %342 = vmatprep.subr.mxu0 %v297
    %343 = vmatpush1.msra.mxu0 %v296
    %344 = vmatprep.subr.mxu0 %v300
    %345 = vmatpush1.msra.mxu0 %v299
    %346 = vmatprep.subr.mxu0 %v303
    %347 = vmatpush1.msra.mxu0 %v302
    %348 = vmatprep.subr.mxu0 %v306
    %349 = vmatpush1.msra.mxu0 %v305
    %350 = vmatprep.subr.mxu0 %v309
    %351 = vmatpush1.msra.mxu0 %v308
    %352 = vmatprep.subr.mxu0 %v312
    %353 = vmatpush1.msra.mxu0 %v311
    %354 = vmatprep.subr.mxu0 %v315
    %355 = vmatpush1.msra.mxu0 %v314
    %356 = vmatprep.subr.mxu0 %v318
    %357 = vmatpush1.msra.mxu0 %v317
    %358 = vmatprep.subr.mxu0 %v321
    %359 = vmatpush1.msra.mxu0 %v320
    %360 = vmatprep.subr.mxu0 %v324
    %361 = vmatpush1.msra.mxu0 %v323
    %362 = vmatprep.subr.mxu0 %v327
    %363 = vmatpush1.msra.mxu0 %v326
    %364 = vmatprep.subr.mxu0 %v330
    %365 = vmatpush1.msra.mxu0 %v329
    %366 = vmatprep.subr.mxu0 %v333
    %367 = vmatpush1.msra.mxu0 %v332
    %368 = vmatprep.subr.mxu0 0.0
    %369 = vmatpush1.msra.mxu0 0.0
    %370 = vmatprep.subr.mxu0 0.0
    %371 = vmatpush1.msra.mxu0 0.0
    %372 = vmatprep.subr.mxu0 0.0
    %373 = vmatpush1.msra.mxu0 0.0
    %374 = vmatprep.subr.mxu0 0.0
    %375 = vmatpush1.msra.mxu0 0.0
    %376 = vmatprep.subr.mxu0 0.0
    %377 = vmatpush1.msra.mxu0 0.0
    %378 = vmatprep.subr.mxu0 0.0
    %379 = vmatpush1.msra.mxu0 0.0
    %380 = vmatprep.subr.mxu0 0.0
    %381 = vmatpush1.msra.mxu0 0.0
    %382 = vmatprep.subr.mxu0 0.0
    %383 = vmatpush1.msra.mxu0 0.0
    %384 = vmatprep.subr.mxu0 0.0
    %385 = vmatpush1.msra.mxu0 0.0
    %386 = vmatprep.subr.mxu0 0.0
    %387 = vmatpush1.msra.mxu0 0.0
    %388 = vmatprep.subr.mxu0 0.0
    %389 = vmatpush1.msra.mxu0 0.0
    %390 = vmatprep.subr.mxu0 0.0
    %391 = vmatpush1.msra.mxu0 0.0
    %392 = vmatprep.subr.mxu0 0.0
    %393 = vmatpush1.msra.mxu0 0.0
    %394 = vmatprep.subr.mxu0 0.0
    %395 = vmatpush1.msra.mxu0 0.0
    %396 = vmatprep.subr.mxu0 0.0
    %397 = vmatpush1.msra.mxu0 0.0
    %398 = vmatprep.subr.mxu0 0.0
    %399 = vmatpush1.msra.mxu0 0.0
    %400 = vmatprep.mubr.f32.mxu0 0.0
    %401 = vmatmul.mubr.f32.gmra.mrb[0].mxu0 0.0
    %v402 = vpop.f32.mrb[0].mxu0
    %v403 = vadd.f32 0.0, %v402
    %v404 = vpop.f32.mrb[0].mxu0
    %v405 = vadd.f32 0.0, %v404
    %406 = vdwg.mxu0
    %407 = vmatprep.subr.mxu0 0.0
    %408 = vmatpush1.msra.mxu0 %v289
    %409 = vmatprep.subr.mxu0 0.0
    %410 = vmatpush1.msra.mxu0 %v292
    %411 = vmatprep.subr.mxu0 0.0
    %412 = vmatpush1.msra.mxu0 %v295
    %413 = vmatprep.subr.mxu0 0.0
    %414 = vmatpush1.msra.mxu0 %v298
    %415 = vmatprep.subr.mxu0 0.0
    %416 = vmatpush1.msra.mxu0 %v301
    %417 = vmatprep.subr.mxu0 0.0
    %418 = vmatpush1.msra.mxu0 %v304
    %419 = vmatprep.subr.mxu0 0.0
    %420 = vmatpush1.msra.mxu0 %v307
    %421 = vmatprep.subr.mxu0 0.0
    %422 = vmatpush1.msra.mxu0 %v310
    %423 = vmatprep.subr.mxu0 0.0
    %424 = vmatpush1.msra.mxu0 %v313
    %425 = vmatprep.subr.mxu0 0.0
    %426 = vmatpush1.msra.mxu0 %v316
    %427 = vmatprep.subr.mxu0 0.0
    %428 = vmatpush1.msra.mxu0 %v319
    %429 = vmatprep.subr.mxu0 0.0
    %430 = vmatpush1.msra.mxu0 %v322
    %431 = vmatprep.subr.mxu0 0.0
    %432 = vmatpush1.msra.mxu0 %v325
    %433 = vmatprep.subr.mxu0 0.0
    %434 = vmatpush1.msra.mxu0 %v328
    %435 = vmatprep.subr.mxu0 0.0
    %436 = vmatpush1.msra.mxu0 %v331
    %437 = vmatprep.subr.mxu0 0.0
    %438 = vmatpush1.msra.mxu0 %v334
    %439 = vmatprep.subr.mxu0 0.0
    %440 = vmatpush1.msra.mxu0 0.0
    %441 = vmatprep.subr.mxu0 0.0
    %442 = vmatpush1.msra.mxu0 0.0
    %443 = vmatprep.subr.mxu0 0.0
    %444 = vmatpush1.msra.mxu0 0.0
    %445 = vmatprep.subr.mxu0 0.0
    %446 = vmatpush1.msra.mxu0 0.0
    %447 = vmatprep.subr.mxu0 0.0
    %448 = vmatpush1.msra.mxu0 0.0
    %449 = vmatprep.subr.mxu0 0.0
    %450 = vmatpush1.msra.mxu0 0.0
    %451 = vmatprep.subr.mxu0 0.0
    %452 = vmatpush1.msra.mxu0 0.0
    %453 = vmatprep.subr.mxu0 0.0
    %454 = vmatpush1.msra.mxu0 0.0
    %455 = vmatprep.subr.mxu0 0.0
    %456 = vmatpush1.msra.mxu0 0.0
    %457 = vmatprep.subr.mxu0 0.0
    %458 = vmatpush1.msra.mxu0 0.0
    %459 = vmatprep.subr.mxu0 0.0
    %460 = vmatpush1.msra.mxu0 0.0
    %461 = vmatprep.subr.mxu0 0.0
    %462 = vmatpush1.msra.mxu0 0.0
    %463 = vmatprep.subr.mxu0 0.0
    %464 = vmatpush1.msra.mxu0 0.0
    %465 = vmatprep.subr.mxu0 0.0
    %466 = vmatpush1.msra.mxu0 0.0
    %467 = vmatprep.subr.mxu0 0.0
    %468 = vmatpush1.msra.mxu0 0.0
    %469 = vmatprep.subr.mxu0 0.0
    %470 = vmatpush1.msra.mxu0 0.0
    %471 = vmatprep.mubr.f32.mxu0 0.0
    %472 = vmatmul.mubr.f32.gmra.mrb[0].mxu0 0.0
    %v473 = vpop.f32.mrb[0].mxu0
    %v474 = vadd.f32 0.0, %v473
    %v475 = vpop.f32.mrb[0].mxu0
    %476 = vdwg.mxu0
    %v477 = vadd.f32 %v213, %v403
    %v478 = vxor.u32 %v477, 2147483648
    %v479 = vmul.f32 %v478, 1.442695
    %v480 = vpow.pop %v479
    %v481 = vadd.f32 %v480, 1.0
    %v482 = vrcp.pop %v481
    %v483 = vmul.f32 1.0, %v482
    %v484 = vadd.f32 %v215, %v405
    %v485 = vxor.u32 %v484, 2147483648
    %v486 = vmul.f32 %v485, 1.442695
    %v487 = vpow.pop %v486
    %v488 = vadd.f32 %v487, 1.0
    %v489 = vrcp.pop %v488
    %v490 = vmul.f32 1.0, %v489
    %v491 = vadd.f32 %v474, %v335
    %v492 = vmul.f32 %v483, %v491
    %v493 = vadd.f32 %v284, %v492
    %v494 = vtanh.pop %v493
    %v495 = vsub.f32 1.0, %v490
    %v496 = vmul.f32 %v495, %v494
    %v497 = vmul.f32 %v490, 0.0
    %v498 = vadd.f32 %v496, %v497
    %499 = vst [vmem:[#allocation2] sm:$0x1] %v498
    %500 = vmatprep.subr.mxu0 %v288
    %501 = vmatpush1.msra.mxu0 %v287
    %502 = vmatprep.subr.mxu0 %v291
    %503 = vmatpush1.msra.mxu0 %v290
    %504 = vmatprep.subr.mxu0 %v294
    %505 = vmatpush1.msra.mxu0 %v293
    %506 = vmatprep.subr.mxu0 %v297
    %507 = vmatpush1.msra.mxu0 %v296
    %508 = vmatprep.subr.mxu0 %v300
    %509 = vmatpush1.msra.mxu0 %v299
    %510 = vmatprep.subr.mxu0 %v303
    %511 = vmatpush1.msra.mxu0 %v302
    %512 = vmatprep.subr.mxu0 %v306
    %513 = vmatpush1.msra.mxu0 %v305
    %514 = vmatprep.subr.mxu0 %v309
    %515 = vmatpush1.msra.mxu0 %v308
    %516 = vmatprep.subr.mxu0 %v312
    %517 = vmatpush1.msra.mxu0 %v311
    %518 = vmatprep.subr.mxu0 %v315
    %519 = vmatpush1.msra.mxu0 %v314
    %520 = vmatprep.subr.mxu0 %v318
    %521 = vmatpush1.msra.mxu0 %v317
    %522 = vmatprep.subr.mxu0 %v321
    %523 = vmatpush1.msra.mxu0 %v320
    %524 = vmatprep.subr.mxu0 %v324
    %525 = vmatpush1.msra.mxu0 %v323
    %526 = vmatprep.subr.mxu0 %v327
    %527 = vmatpush1.msra.mxu0 %v326
    %528 = vmatprep.subr.mxu0 %v330
    %529 = vmatpush1.msra.mxu0 %v329
    %530 = vmatprep.subr.mxu0 %v333
    %531 = vmatpush1.msra.mxu0 %v332
    %532 = vmatprep.subr.mxu0 0.0
    %533 = vmatpush1.msra.mxu0 0.0
    %534 = vmatprep.subr.mxu0 0.0
    %535 = vmatpush1.msra.mxu0 0.0
    %536 = vmatprep.subr.mxu0 0.0
    %537 = vmatpush1.msra.mxu0 0.0
    %538 = vmatprep.subr.mxu0 0.0
    %539 = vmatpush1.msra.mxu0 0.0
    %540 = vmatprep.subr.mxu0 0.0
    %541 = vmatpush1.msra.mxu0 0.0
    %542 = vmatprep.subr.mxu0 0.0
    %543 = vmatpush1.msra.mxu0 0.0
    %544 = vmatprep.subr.mxu0 0.0
    %545 = vmatpush1.msra.mxu0 0.0
    %546 = vmatprep.subr.mxu0 0.0
    %547 = vmatpush1.msra.mxu0 0.0
    %548 = vmatprep.subr.mxu0 0.0
    %549 = vmatpush1.msra.mxu0 0.0
    %550 = vmatprep.subr.mxu0 0.0
    %551 = vmatpush1.msra.mxu0 0.0
    %552 = vmatprep.subr.mxu0 0.0
    %553 = vmatpush1.msra.mxu0 0.0
    %554 = vmatprep.subr.mxu0 0.0
    %555 = vmatpush1.msra.mxu0 0.0
    %556 = vmatprep.subr.mxu0 0.0
    %557 = vmatpush1.msra.mxu0 0.0
    %558 = vmatprep.subr.mxu0 0.0
    %559 = vmatpush1.msra.mxu0 0.0
    %560 = vmatprep.subr.mxu0 0.0
    %561 = vmatpush1.msra.mxu0 0.0
    %562 = vmatprep.subr.mxu0 0.0
    %563 = vmatpush1.msra.mxu0 0.0
    %564 = vmatprep.mubr.f32.mxu0 0.0
    %565 = vmatmul.mubr.f32.gmra.mrb[0].mxu0 %v498
    %v566 = vpop.f32.mrb[0].mxu0
    %v567 = vadd.f32 0.0, %v566
    %v568 = vpop.f32.mrb[0].mxu0
    %v569 = vadd.f32 0.0, %v568
    %570 = vdwg.mxu0
    %571 = vmatprep.subr.mxu0 0.0
    %572 = vmatpush1.msra.mxu0 %v289
    %573 = vmatprep.subr.mxu0 0.0
    %574 = vmatpush1.msra.mxu0 %v292
    %575 = vmatprep.subr.mxu0 0.0
    %576 = vmatpush1.msra.mxu0 %v295
    %577 = vmatprep.subr.mxu0 0.0
    %578 = vmatpush1.msra.mxu0 %v298
    %579 = vmatprep.subr.mxu0 0.0
    %580 = vmatpush1.msra.mxu0 %v301
    %581 = vmatprep.subr.mxu0 0.0
    %582 = vmatpush1.msra.mxu0 %v304
    %583 = vmatprep.subr.mxu0 0.0
    %584 = vmatpush1.msra.mxu0 %v307
    %585 = vmatprep.subr.mxu0 0.0
    %586 = vmatpush1.msra.mxu0 %v310
    %587 = vmatprep.subr.mxu0 0.0
    %588 = vmatpush1.msra.mxu0 %v313
    %589 = vmatprep.subr.mxu0 0.0
    %590 = vmatpush1.msra.mxu0 %v316
    %591 = vmatprep.subr.mxu0 0.0
    %592 = vmatpush1.msra.mxu0 %v319
    %593 = vmatprep.subr.mxu0 0.0
    %594 = vmatpush1.msra.mxu0 %v322
    %595 = vmatprep.subr.mxu0 0.0
    %596 = vmatpush1.msra.mxu0 %v325
    %597 = vmatprep.subr.mxu0 0.0
    %598 = vmatpush1.msra.mxu0 %v328
    %599 = vmatprep.subr.mxu0 0.0
    %600 = vmatpush1.msra.mxu0 %v331
    %601 = vmatprep.subr.mxu0 0.0
    %602 = vmatpush1.msra.mxu0 %v334
    %603 = vmatprep.subr.mxu0 0.0
    %604 = vmatpush1.msra.mxu0 0.0
    %605 = vmatprep.subr.mxu0 0.0
    %606 = vmatpush1.msra.mxu0 0.0
    %607 = vmatprep.subr.mxu0 0.0
    %608 = vmatpush1.msra.mxu0 0.0
    %609 = vmatprep.subr.mxu0 0.0
    %610 = vmatpush1.msra.mxu0 0.0
    %611 = vmatprep.subr.mxu0 0.0
    %612 = vmatpush1.msra.mxu0 0.0
    %613 = vmatprep.subr.mxu0 0.0
    %614 = vmatpush1.msra.mxu0 0.0
    %615 = vmatprep.subr.mxu0 0.0
    %616 = vmatpush1.msra.mxu0 0.0
    %617 = vmatprep.subr.mxu0 0.0
    %618 = vmatpush1.msra.mxu0 0.0
    %619 = vmatprep.subr.mxu0 0.0
    %620 = vmatpush1.msra.mxu0 0.0
    %621 = vmatprep.subr.mxu0 0.0
    %622 = vmatpush1.msra.mxu0 0.0
    %623 = vmatprep.subr.mxu0 0.0
    %624 = vmatpush1.msra.mxu0 0.0
    %625 = vmatprep.subr.mxu0 0.0
    %626 = vmatpush1.msra.mxu0 0.0
    %627 = vmatprep.subr.mxu0 0.0
    %628 = vmatpush1.msra.mxu0 0.0
    %629 = vmatprep.subr.mxu0 0.0
    %630 = vmatpush1.msra.mxu0 0.0
    %631 = vmatprep.subr.mxu0 0.0
    %632 = vmatpush1.msra.mxu0 0.0
    %633 = vmatprep.subr.mxu0 0.0
    %634 = vmatpush1.msra.mxu0 0.0
    %635 = vmatprep.mubr.f32.mxu0 0.0
    %636 = vmatmul.mubr.f32.gmra.mrb[0].mxu0 %v498
    %v637 = vpop.f32.mrb[0].mxu0
    %v638 = vadd.f32 0.0, %v637
    %v639 = vpop.f32.mrb[0].mxu0
    %640 = vdwg.mxu0
    %v642 = vrot.slane %v567, 7
    %v644 = vadd.f32 %v213, %v642
    %v645 = vxor.u32 %v644, 2147483648
    %v646 = vmul.f32 %v645, 1.442695
    %v647 = vpow.pop %v646
    %v648 = vadd.f32 %v647, 1.0
    %v649 = vrcp.pop %v648
    %v650 = vmul.f32 1.0, %v649
    %v652 = vrot.slane %v569, 7
    %v654 = vadd.f32 %v215, %v652
    %v655 = vxor.u32 %v654, 2147483648
    %v656 = vmul.f32 %v655, 1.442695
    %v657 = vpow.pop %v656
    %v658 = vadd.f32 %v657, 1.0
    %v659 = vrcp.pop %v658
    %v660 = vmul.f32 1.0, %v659
    %v661 = vadd.f32 %v638, %v335
    %v663 = vrot.slane %v661, 7
    %v665 = vmul.f32 %v650, %v663
    %v666 = vadd.f32 %v284, %v665
    %v667 = vtanh.pop %v666
    %v668 = vsub.f32 1.0, %v660
    %v669 = vmul.f32 %v668, %v667
    %v671 = vrot.slane %v498, 7
    %v673 = vmul.f32 %v660, %v671
    %v674 = vadd.f32 %v669, %v673
    %675 = vst [vmem:[#allocation2] sm:$0x2] %v674
    %v677 = vrot.slane %v674, 1
    %679 = vmatprep.subr.mxu0 %v288
    %680 = vmatpush1.msra.mxu0 %v287
    %681 = vmatprep.subr.mxu0 %v291
    %682 = vmatpush1.msra.mxu0 %v290
    %683 = vmatprep.subr.mxu0 %v294
    %684 = vmatpush1.msra.mxu0 %v293
    %685 = vmatprep.subr.mxu0 %v297
    %686 = vmatpush1.msra.mxu0 %v296
    %687 = vmatprep.subr.mxu0 %v300
    %688 = vmatpush1.msra.mxu0 %v299
    %689 = vmatprep.subr.mxu0 %v303
    %690 = vmatpush1.msra.mxu0 %v302
    %691 = vmatprep.subr.mxu0 %v306
    %692 = vmatpush1.msra.mxu0 %v305
    %693 = vmatprep.subr.mxu0 %v309
    %694 = vmatpush1.msra.mxu0 %v308
    %695 = vmatprep.subr.mxu0 %v312
    %696 = vmatpush1.msra.mxu0 %v311
    %697 = vmatprep.subr.mxu0 %v315
    %698 = vmatpush1.msra.mxu0 %v314
    %699 = vmatprep.subr.mxu0 %v318
    %700 = vmatpush1.msra.mxu0 %v317
    %701 = vmatprep.subr.mxu0 %v321
    %702 = vmatpush1.msra.mxu0 %v320
    %703 = vmatprep.subr.mxu0 %v324
    %704 = vmatpush1.msra.mxu0 %v323
    %705 = vmatprep.subr.mxu0 %v327
    %706 = vmatpush1.msra.mxu0 %v326
    %707 = vmatprep.subr.mxu0 %v330
    %708 = vmatpush1.msra.mxu0 %v329
    %709 = vmatprep.subr.mxu0 %v333
    %710 = vmatpush1.msra.mxu0 %v332
    %711 = vmatprep.subr.mxu0 0.0
    %712 = vmatpush1.msra.mxu0 0.0
    %713 = vmatprep.subr.mxu0 0.0
    %714 = vmatpush1.msra.mxu0 0.0
    %715 = vmatprep.subr.mxu0 0.0
    %716 = vmatpush1.msra.mxu0 0.0
    %717 = vmatprep.subr.mxu0 0.0
    %718 = vmatpush1.msra.mxu0 0.0
    %719 = vmatprep.subr.mxu0 0.0
    %720 = vmatpush1.msra.mxu0 0.0
    %721 = vmatprep.subr.mxu0 0.0
    %722 = vmatpush1.msra.mxu0 0.0
    %723 = vmatprep.subr.mxu0 0.0
    %724 = vmatpush1.msra.mxu0 0.0
    %725 = vmatprep.subr.mxu0 0.0
    %726 = vmatpush1.msra.mxu0 0.0
    %727 = vmatprep.subr.mxu0 0.0
    %728 = vmatpush1.msra.mxu0 0.0
    %729 = vmatprep.subr.mxu0 0.0
    %730 = vmatpush1.msra.mxu0 0.0
    %731 = vmatprep.subr.mxu0 0.0
    %732 = vmatpush1.msra.mxu0 0.0
    %733 = vmatprep.subr.mxu0 0.0
    %734 = vmatpush1.msra.mxu0 0.0
    %735 = vmatprep.subr.mxu0 0.0
    %736 = vmatpush1.msra.mxu0 0.0
    %737 = vmatprep.subr.mxu0 0.0
    %738 = vmatpush1.msra.mxu0 0.0
    %739 = vmatprep.subr.mxu0 0.0
    %740 = vmatpush1.msra.mxu0 0.0
    %741 = vmatprep.subr.mxu0 0.0
    %742 = vmatpush1.msra.mxu0 0.0
    %743 = vmatprep.mubr.f32.mxu0 0.0
    %744 = vmatmul.mubr.f32.gmra.mrb[0].mxu0 %v677
    %v745 = vpop.f32.mrb[0].mxu0
    %v746 = vadd.f32 0.0, %v745
    %v747 = vpop.f32.mrb[0].mxu0
    %v748 = vadd.f32 0.0, %v747
    %749 = vdwg.mxu0
    %750 = vmatprep.subr.mxu0 0.0
    %751 = vmatpush1.msra.mxu0 %v289
    %752 = vmatprep.subr.mxu0 0.0
    %753 = vmatpush1.msra.mxu0 %v292
    %754 = vmatprep.subr.mxu0 0.0
    %755 = vmatpush1.msra.mxu0 %v295
    %756 = vmatprep.subr.mxu0 0.0
    %757 = vmatpush1.msra.mxu0 %v298
    %758 = vmatprep.subr.mxu0 0.0
    %759 = vmatpush1.msra.mxu0 %v301
    %760 = vmatprep.subr.mxu0 0.0
    %761 = vmatpush1.msra.mxu0 %v304
    %762 = vmatprep.subr.mxu0 0.0
    %763 = vmatpush1.msra.mxu0 %v307
    %764 = vmatprep.subr.mxu0 0.0
    %765 = vmatpush1.msra.mxu0 %v310
    %766 = vmatprep.subr.mxu0 0.0
    %767 = vmatpush1.msra.mxu0 %v313
    %768 = vmatprep.subr.mxu0 0.0
    %769 = vmatpush1.msra.mxu0 %v316
    %770 = vmatprep.subr.mxu0 0.0
    %771 = vmatpush1.msra.mxu0 %v319
    %772 = vmatprep.subr.mxu0 0.0
    %773 = vmatpush1.msra.mxu0 %v322
    %774 = vmatprep.subr.mxu0 0.0
    %775 = vmatpush1.msra.mxu0 %v325
    %776 = vmatprep.subr.mxu0 0.0
    %777 = vmatpush1.msra.mxu0 %v328
    %778 = vmatprep.subr.mxu0 0.0
    %779 = vmatpush1.msra.mxu0 %v331
    %780 = vmatprep.subr.mxu0 0.0
    %781 = vmatpush1.msra.mxu0 %v334
    %782 = vmatprep.subr.mxu0 0.0
    %783 = vmatpush1.msra.mxu0 0.0
    %784 = vmatprep.subr.mxu0 0.0
    %785 = vmatpush1.msra.mxu0 0.0
    %786 = vmatprep.subr.mxu0 0.0
    %787 = vmatpush1.msra.mxu0 0.0
    %788 = vmatprep.subr.mxu0 0.0
    %789 = vmatpush1.msra.mxu0 0.0
    %790 = vmatprep.subr.mxu0 0.0
    %791 = vmatpush1.msra.mxu0 0.0
    %792 = vmatprep.subr.mxu0 0.0
    %793 = vmatpush1.msra.mxu0 0.0
    %794 = vmatprep.subr.mxu0 0.0
    %795 = vmatpush1.msra.mxu0 0.0
    %796 = vmatprep.subr.mxu0 0.0
    %797 = vmatpush1.msra.mxu0 0.0
    %798 = vmatprep.subr.mxu0 0.0
    %799 = vmatpush1.msra.mxu0 0.0
    %800 = vmatprep.subr.mxu0 0.0
    %801 = vmatpush1.msra.mxu0 0.0
    %802 = vmatprep.subr.mxu0 0.0
    %803 = vmatpush1.msra.mxu0 0.0
    %804 = vmatprep.subr.mxu0 0.0
    %805 = vmatpush1.msra.mxu0 0.0
    %806 = vmatprep.subr.mxu0 0.0
    %807 = vmatpush1.msra.mxu0 0.0
    %808 = vmatprep.subr.mxu0 0.0
    %809 = vmatpush1.msra.mxu0 0.0
    %810 = vmatprep.subr.mxu0 0.0
    %811 = vmatpush1.msra.mxu0 0.0
    %812 = vmatprep.subr.mxu0 0.0
    %813 = vmatpush1.msra.mxu0 0.0
    %814 = vmatprep.mubr.f32.mxu0 0.0
    %815 = vmatmul.mubr.f32.gmra.mrb[0].mxu0 %v677
    %v816 = vpop.f32.mrb[0].mxu0
    %v817 = vadd.f32 0.0, %v816
    %v818 = vpop.f32.mrb[0].mxu0
    %819 = vdwg.mxu0
    %v821 = vrot.slane %v746, 6
    %v823 = vadd.f32 %v213, %v821
    %v824 = vxor.u32 %v823, 2147483648
    %v825 = vmul.f32 %v824, 1.442695
    %v826 = vpow.pop %v825
    %v827 = vadd.f32 %v826, 1.0
    %v828 = vrcp.pop %v827
    %v829 = vmul.f32 1.0, %v828
    %v831 = vrot.slane %v748, 6
    %v833 = vadd.f32 %v215, %v831
    %v834 = vxor.u32 %v833, 2147483648
    %v835 = vmul.f32 %v834, 1.442695
    %v836 = vpow.pop %v835
    %v837 = vadd.f32 %v836, 1.0
    %v838 = vrcp.pop %v837
    %v839 = vmul.f32 1.0, %v838
    %v840 = vadd.f32 %v817, %v335
    %v842 = vrot.slane %v840, 6
    %v844 = vmul.f32 %v829, %v842
    %v845 = vadd.f32 %v284, %v844
    %v846 = vtanh.pop %v845
    %v847 = vsub.f32 1.0, %v839
    %v848 = vmul.f32 %v847, %v846
    %v849 = vrot.slane %v674, 7
    %v851 = vmul.f32 %v839, %v849
    %v852 = vadd.f32 %v848, %v851
    %853 = vst [vmem:[#allocation2] sm:$0x4] %v852
    %v855 = vrot.slane %v852, 2
    %857 = vmatprep.subr.mxu0 %v288
    %858 = vmatpush1.msra.mxu0 %v287
    %859 = vmatprep.subr.mxu0 %v291
    %860 = vmatpush1.msra.mxu0 %v290
    %861 = vmatprep.subr.mxu0 %v294
    %862 = vmatpush1.msra.mxu0 %v293
    %863 = vmatprep.subr.mxu0 %v297
    %864 = vmatpush1.msra.mxu0 %v296
    %865 = vmatprep.subr.mxu0 %v300
    %866 = vmatpush1.msra.mxu0 %v299
    %867 = vmatprep.subr.mxu0 %v303
    %868 = vmatpush1.msra.mxu0 %v302
    %869 = vmatprep.subr.mxu0 %v306
    %870 = vmatpush1.msra.mxu0 %v305
    %871 = vmatprep.subr.mxu0 %v309
    %872 = vmatpush1.msra.mxu0 %v308
    %873 = vmatprep.subr.mxu0 %v312
    %874 = vmatpush1.msra.mxu0 %v311
    %875 = vmatprep.subr.mxu0 %v315
    %876 = vmatpush1.msra.mxu0 %v314
    %877 = vmatprep.subr.mxu0 %v318
    %878 = vmatpush1.msra.mxu0 %v317
    %879 = vmatprep.subr.mxu0 %v321
    %880 = vmatpush1.msra.mxu0 %v320
    %881 = vmatprep.subr.mxu0 %v324
    %882 = vmatpush1.msra.mxu0 %v323
    %883 = vmatprep.subr.mxu0 %v327
    %884 = vmatpush1.msra.mxu0 %v326
    %885 = vmatprep.subr.mxu0 %v330
    %886 = vmatpush1.msra.mxu0 %v329
    %887 = vmatprep.subr.mxu0 %v333
    %888 = vmatpush1.msra.mxu0 %v332
    %889 = vmatprep.subr.mxu0 0.0
    %890 = vmatpush1.msra.mxu0 0.0
    %891 = vmatprep.subr.mxu0 0.0
    %892 = vmatpush1.msra.mxu0 0.0
    %893 = vmatprep.subr.mxu0 0.0
    %894 = vmatpush1.msra.mxu0 0.0
    %895 = vmatprep.subr.mxu0 0.0
    %896 = vmatpush1.msra.mxu0 0.0
    %897 = vmatprep.subr.mxu0 0.0
    %898 = vmatpush1.msra.mxu0 0.0
    %899 = vmatprep.subr.mxu0 0.0
    %900 = vmatpush1.msra.mxu0 0.0
    %901 = vmatprep.subr.mxu0 0.0
    %902 = vmatpush1.msra.mxu0 0.0
    %903 = vmatprep.subr.mxu0 0.0
    %904 = vmatpush1.msra.mxu0 0.0
    %905 = vmatprep.subr.mxu0 0.0
    %906 = vmatpush1.msra.mxu0 0.0
    %907 = vmatprep.subr.mxu0 0.0
    %908 = vmatpush1.msra.mxu0 0.0
    %909 = vmatprep.subr.mxu0 0.0
    %910 = vmatpush1.msra.mxu0 0.0
    %911 = vmatprep.subr.mxu0 0.0
    %912 = vmatpush1.msra.mxu0 0.0
    %913 = vmatprep.subr.mxu0 0.0
    %914 = vmatpush1.msra.mxu0 0.0
    %915 = vmatprep.subr.mxu0 0.0
    %916 = vmatpush1.msra.mxu0 0.0
    %917 = vmatprep.subr.mxu0 0.0
    %918 = vmatpush1.msra.mxu0 0.0
    %919 = vmatprep.subr.mxu0 0.0
    %920 = vmatpush1.msra.mxu0 0.0
    %921 = vmatprep.mubr.f32.mxu0 0.0
    %922 = vmatmul.mubr.f32.gmra.mrb[0].mxu0 %v855
    %v923 = vpop.f32.mrb[0].mxu0
    %v924 = vadd.f32 0.0, %v923
    %v925 = vpop.f32.mrb[0].mxu0
    %v926 = vadd.f32 0.0, %v925
    %927 = vdwg.mxu0
    %928 = vmatprep.subr.mxu0 0.0
    %929 = vmatpush1.msra.mxu0 %v289
    %930 = vmatprep.subr.mxu0 0.0
    %931 = vmatpush1.msra.mxu0 %v292
    %932 = vmatprep.subr.mxu0 0.0
    %933 = vmatpush1.msra.mxu0 %v295
    %934 = vmatprep.subr.mxu0 0.0
    %935 = vmatpush1.msra.mxu0 %v298
    %936 = vmatprep.subr.mxu0 0.0
    %937 = vmatpush1.msra.mxu0 %v301
    %938 = vmatprep.subr.mxu0 0.0
    %939 = vmatpush1.msra.mxu0 %v304
    %940 = vmatprep.subr.mxu0 0.0
    %941 = vmatpush1.msra.mxu0 %v307
    %942 = vmatprep.subr.mxu0 0.0
    %943 = vmatpush1.msra.mxu0 %v310
    %944 = vmatprep.subr.mxu0 0.0
    %945 = vmatpush1.msra.mxu0 %v313
    %946 = vmatprep.subr.mxu0 0.0
    %947 = vmatpush1.msra.mxu0 %v316
    %948 = vmatprep.subr.mxu0 0.0
    %949 = vmatpush1.msra.mxu0 %v319
    %950 = vmatprep.subr.mxu0 0.0
    %951 = vmatpush1.msra.mxu0 %v322
    %952 = vmatprep.subr.mxu0 0.0
    %953 = vmatpush1.msra.mxu0 %v325
    %954 = vmatprep.subr.mxu0 0.0
    %955 = vmatpush1.msra.mxu0 %v328
    %956 = vmatprep.subr.mxu0 0.0
    %957 = vmatpush1.msra.mxu0 %v331
    %958 = vmatprep.subr.mxu0 0.0
    %959 = vmatpush1.msra.mxu0 %v334
    %960 = vmatprep.subr.mxu0 0.0
    %961 = vmatpush1.msra.mxu0 0.0
    %962 = vmatprep.subr.mxu0 0.0
    %963 = vmatpush1.msra.mxu0 0.0
    %964 = vmatprep.subr.mxu0 0.0
    %965 = vmatpush1.msra.mxu0 0.0
    %966 = vmatprep.subr.mxu0 0.0
    %967 = vmatpush1.msra.mxu0 0.0
    %968 = vmatprep.subr.mxu0 0.0
    %969 = vmatpush1.msra.mxu0 0.0
    %970 = vmatprep.subr.mxu0 0.0
    %971 = vmatpush1.msra.mxu0 0.0
    %972 = vmatprep.subr.mxu0 0.0
    %973 = vmatpush1.msra.mxu0 0.0
    %974 = vmatprep.subr.mxu0 0.0
    %975 = vmatpush1.msra.mxu0 0.0
    %976 = vmatprep.subr.mxu0 0.0
    %977 = vmatpush1.msra.mxu0 0.0
    %978 = vmatprep.subr.mxu0 0.0
    %979 = vmatpush1.msra.mxu0 0.0
    %980 = vmatprep.subr.mxu0 0.0
    %981 = vmatpush1.msra.mxu0 0.0
    %982 = vmatprep.subr.mxu0 0.0
    %983 = vmatpush1.msra.mxu0 0.0
    %984 = vmatprep.subr.mxu0 0.0
    %985 = vmatpush1.msra.mxu0 0.0
    %986 = vmatprep.subr.mxu0 0.0
    %987 = vmatpush1.msra.mxu0 0.0
    %988 = vmatprep.subr.mxu0 0.0
    %989 = vmatpush1.msra.mxu0 0.0
    %990 = vmatprep.subr.mxu0 0.0
    %991 = vmatpush1.msra.mxu0 0.0
    %992 = vmatprep.mubr.f32.mxu0 0.0
    %993 = vmatmul.mubr.f32.gmra.mrb[0].mxu0 %v855
    %v994 = vpop.f32.mrb[0].mxu0
    %v995 = vadd.f32 0.0, %v994
    %v996 = vpop.f32.mrb[0].mxu0
    %997 = vdwg.mxu0
    %v999 = vrot.slane %v924, 5
    %v1001 = vadd.f32 %v213, %v999
    %v1002 = vxor.u32 %v1001, 2147483648
    %v1003 = vmul.f32 %v1002, 1.442695
    %v1004 = vpow.pop %v1003
    %v1005 = vadd.f32 %v1004, 1.0
    %v1006 = vrcp.pop %v1005
    %v1007 = vmul.f32 1.0, %v1006
    %v1009 = vrot.slane %v926, 5
    %v1011 = vadd.f32 %v215, %v1009
    %v1012 = vxor.u32 %v1011, 2147483648
    %v1013 = vmul.f32 %v1012, 1.442695
    %v1014 = vpow.pop %v1013
    %v1015 = vadd.f32 %v1014, 1.0
    %v1016 = vrcp.pop %v1015
    %v1017 = vmul.f32 1.0, %v1016
    %v1018 = vadd.f32 %v995, %v335
    %v1020 = vrot.slane %v1018, 5
    %v1022 = vmul.f32 %v1007, %v1020
    %v1023 = vadd.f32 %v284, %v1022
    %v1024 = vtanh.pop %v1023
    %v1025 = vsub.f32 1.0, %v1017
    %v1026 = vmul.f32 %v1025, %v1024
    %v1027 = vrot.slane %v852, 7
    %v1029 = vmul.f32 %v1017, %v1027
    %v1030 = vadd.f32 %v1026, %v1029
    %1031 = vst [vmem:[#allocation2] sm:$0x8] %v1030
    %v1033 = vrot.slane %v1030, 3
    %1035 = vmatprep.subr.mxu0 %v288
    %1036 = vmatpush1.msra.mxu0 %v287
    %1037 = vmatprep.subr.mxu0 %v291
    %1038 = vmatpush1.msra.mxu0 %v290
    %1039 = vmatprep.subr.mxu0 %v294
    %1040 = vmatpush1.msra.mxu0 %v293
    %1041 = vmatprep.subr.mxu0 %v297
    %1042 = vmatpush1.msra.mxu0 %v296
    %1043 = vmatprep.subr.mxu0 %v300
    %1044 = vmatpush1.msra.mxu0 %v299
    %1045 = vmatprep.subr.mxu0 %v303
    %1046 = vmatpush1.msra.mxu0 %v302
    %1047 = vmatprep.subr.mxu0 %v306
    %1048 = vmatpush1.msra.mxu0 %v305
    %1049 = vmatprep.subr.mxu0 %v309
    %1050 = vmatpush1.msra.mxu0 %v308
    %1051 = vmatprep.subr.mxu0 %v312
    %1052 = vmatpush1.msra.mxu0 %v311
    %1053 = vmatprep.subr.mxu0 %v315
    %1054 = vmatpush1.msra.mxu0 %v314
    %1055 = vmatprep.subr.mxu0 %v318
    %1056 = vmatpush1.msra.mxu0 %v317
    %1057 = vmatprep.subr.mxu0 %v321
    %1058 = vmatpush1.msra.mxu0 %v320
    %1059 = vmatprep.subr.mxu0 %v324
    %1060 = vmatpush1.msra.mxu0 %v323
    %1061 = vmatprep.subr.mxu0 %v327
    %1062 = vmatpush1.msra.mxu0 %v326
    %1063 = vmatprep.subr.mxu0 %v330
    %1064 = vmatpush1.msra.mxu0 %v329
    %1065 = vmatprep.subr.mxu0 %v333
    %1066 = vmatpush1.msra.mxu0 %v332
    %1067 = vmatprep.subr.mxu0 0.0
    %1068 = vmatpush1.msra.mxu0 0.0
    %1069 = vmatprep.subr.mxu0 0.0
    %1070 = vmatpush1.msra.mxu0 0.0
    %1071 = vmatprep.subr.mxu0 0.0
    %1072 = vmatpush1.msra.mxu0 0.0
    %1073 = vmatprep.subr.mxu0 0.0
    %1074 = vmatpush1.msra.mxu0 0.0
    %1075 = vmatprep.subr.mxu0 0.0
    %1076 = vmatpush1.msra.mxu0 0.0
    %1077 = vmatprep.subr.mxu0 0.0
    %1078 = vmatpush1.msra.mxu0 0.0
    %1079 = vmatprep.subr.mxu0 0.0
    %1080 = vmatpush1.msra.mxu0 0.0
    %1081 = vmatprep.subr.mxu0 0.0
    %1082 = vmatpush1.msra.mxu0 0.0
    %1083 = vmatprep.subr.mxu0 0.0
    %1084 = vmatpush1.msra.mxu0 0.0
    %1085 = vmatprep.subr.mxu0 0.0
    %1086 = vmatpush1.msra.mxu0 0.0
    %1087 = vmatprep.subr.mxu0 0.0
    %1088 = vmatpush1.msra.mxu0 0.0
    %1089 = vmatprep.subr.mxu0 0.0
    %1090 = vmatpush1.msra.mxu0 0.0
    %1091 = vmatprep.subr.mxu0 0.0
    %1092 = vmatpush1.msra.mxu0 0.0
    %1093 = vmatprep.subr.mxu0 0.0
    %1094 = vmatpush1.msra.mxu0 0.0
    %1095 = vmatprep.subr.mxu0 0.0
    %1096 = vmatpush1.msra.mxu0 0.0
    %1097 = vmatprep.subr.mxu0 0.0
    %1098 = vmatpush1.msra.mxu0 0.0
    %1099 = vmatprep.mubr.f32.mxu0 0.0
    %1100 = vmatmul.mubr.f32.gmra.mrb[0].mxu0 %v1033
    %v1101 = vpop.f32.mrb[0].mxu0
    %v1102 = vadd.f32 0.0, %v1101
    %v1103 = vpop.f32.mrb[0].mxu0
    %v1104 = vadd.f32 0.0, %v1103
    %1105 = vdwg.mxu0
    %1106 = vmatprep.subr.mxu0 0.0
    %1107 = vmatpush1.msra.mxu0 %v289
    %1108 = vmatprep.subr.mxu0 0.0
    %1109 = vmatpush1.msra.mxu0 %v292
    %1110 = vmatprep.subr.mxu0 0.0
    %1111 = vmatpush1.msra.mxu0 %v295
    %1112 = vmatprep.subr.mxu0 0.0
    %1113 = vmatpush1.msra.mxu0 %v298
    %1114 = vmatprep.subr.mxu0 0.0
    %1115 = vmatpush1.msra.mxu0 %v301
    %1116 = vmatprep.subr.mxu0 0.0
    %1117 = vmatpush1.msra.mxu0 %v304
    %1118 = vmatprep.subr.mxu0 0.0
    %1119 = vmatpush1.msra.mxu0 %v307
    %1120 = vmatprep.subr.mxu0 0.0
    %1121 = vmatpush1.msra.mxu0 %v310
    %1122 = vmatprep.subr.mxu0 0.0
    %1123 = vmatpush1.msra.mxu0 %v313
    %1124 = vmatprep.subr.mxu0 0.0
    %1125 = vmatpush1.msra.mxu0 %v316
    %1126 = vmatprep.subr.mxu0 0.0
    %1127 = vmatpush1.msra.mxu0 %v319
    %1128 = vmatprep.subr.mxu0 0.0
    %1129 = vmatpush1.msra.mxu0 %v322
    %1130 = vmatprep.subr.mxu0 0.0
    %1131 = vmatpush1.msra.mxu0 %v325
    %1132 = vmatprep.subr.mxu0 0.0
    %1133 = vmatpush1.msra.mxu0 %v328
    %1134 = vmatprep.subr.mxu0 0.0
    %1135 = vmatpush1.msra.mxu0 %v331
    %1136 = vmatprep.subr.mxu0 0.0
    %1137 = vmatpush1.msra.mxu0 %v334
    %1138 = vmatprep.subr.mxu0 0.0
    %1139 = vmatpush1.msra.mxu0 0.0
    %1140 = vmatprep.subr.mxu0 0.0
    %1141 = vmatpush1.msra.mxu0 0.0
    %1142 = vmatprep.subr.mxu0 0.0
    %1143 = vmatpush1.msra.mxu0 0.0
    %1144 = vmatprep.subr.mxu0 0.0
    %1145 = vmatpush1.msra.mxu0 0.0
    %1146 = vmatprep.subr.mxu0 0.0
    %1147 = vmatpush1.msra.mxu0 0.0
    %1148 = vmatprep.subr.mxu0 0.0
    %1149 = vmatpush1.msra.mxu0 0.0
    %1150 = vmatprep.subr.mxu0 0.0
    %1151 = vmatpush1.msra.mxu0 0.0
    %1152 = vmatprep.subr.mxu0 0.0
    %1153 = vmatpush1.msra.mxu0 0.0
    %1154 = vmatprep.subr.mxu0 0.0
    %1155 = vmatpush1.msra.mxu0 0.0
    %1156 = vmatprep.subr.mxu0 0.0
    %1157 = vmatpush1.msra.mxu0 0.0
    %1158 = vmatprep.subr.mxu0 0.0
    %1159 = vmatpush1.msra.mxu0 0.0
    %1160 = vmatprep.subr.mxu0 0.0
    %1161 = vmatpush1.msra.mxu0 0.0
    %1162 = vmatprep.subr.mxu0 0.0
    %1163 = vmatpush1.msra.mxu0 0.0
    %1164 = vmatprep.subr.mxu0 0.0
    %1165 = vmatpush1.msra.mxu0 0.0
    %1166 = vmatprep.subr.mxu0 0.0
    %1167 = vmatpush1.msra.mxu0 0.0
    %1168 = vmatprep.subr.mxu0 0.0
    %1169 = vmatpush1.msra.mxu0 0.0
    %1170 = vmatprep.mubr.f32.mxu0 0.0
    %1171 = vmatmul.mubr.f32.gmra.mrb[0].mxu0 %v1033
    %v1172 = vpop.f32.mrb[0].mxu0
    %v1173 = vadd.f32 0.0, %v1172
    %v1174 = vpop.f32.mrb[0].mxu0
    %1175 = vdwg.mxu0
    %v1177 = vrot.slane %v1102, 4
    %v1179 = vadd.f32 %v213, %v1177
    %v1180 = vxor.u32 %v1179, 2147483648
    %v1181 = vmul.f32 %v1180, 1.442695
    %v1182 = vpow.pop %v1181
    %v1183 = vadd.f32 %v1182, 1.0
    %v1184 = vrcp.pop %v1183
    %v1185 = vmul.f32 1.0, %v1184
    %v1187 = vrot.slane %v1104, 4
    %v1189 = vadd.f32 %v215, %v1187
    %v1190 = vxor.u32 %v1189, 2147483648
    %v1191 = vmul.f32 %v1190, 1.442695
    %v1192 = vpow.pop %v1191
    %v1193 = vadd.f32 %v1192, 1.0
    %v1194 = vrcp.pop %v1193
    %v1195 = vmul.f32 1.0, %v1194
    %v1196 = vadd.f32 %v1173, %v335
    %v1198 = vrot.slane %v1196, 4
    %v1200 = vmul.f32 %v1185, %v1198
    %v1201 = vadd.f32 %v284, %v1200
    %v1202 = vtanh.pop %v1201
    %v1203 = vsub.f32 1.0, %v1195
    %v1204 = vmul.f32 %v1203, %v1202
    %v1205 = vrot.slane %v1030, 7
    %v1207 = vmul.f32 %v1195, %v1205
    %v1208 = vadd.f32 %v1204, %v1207
    %1209 = vst [vmem:[#allocation2] sm:$0x10] %v1208
    %v1211 = vrot.slane %v1208, 4
    %1213 = vmatprep.subr.mxu0 %v288
    %1214 = vmatpush1.msra.mxu0 %v287
    %1215 = vmatprep.subr.mxu0 %v291
    %1216 = vmatpush1.msra.mxu0 %v290
    %1217 = vmatprep.subr.mxu0 %v294
    %1218 = vmatpush1.msra.mxu0 %v293
    %1219 = vmatprep.subr.mxu0 %v297
    %1220 = vmatpush1.msra.mxu0 %v296
    %1221 = vmatprep.subr.mxu0 %v300
    %1222 = vmatpush1.msra.mxu0 %v299
    %1223 = vmatprep.subr.mxu0 %v303
    %1224 = vmatpush1.msra.mxu0 %v302
    %1225 = vmatprep.subr.mxu0 %v306
    %1226 = vmatpush1.msra.mxu0 %v305
    %1227 = vmatprep.subr.mxu0 %v309
    %1228 = vmatpush1.msra.mxu0 %v308
    %1229 = vmatprep.subr.mxu0 %v312
    %1230 = vmatpush1.msra.mxu0 %v311
    %1231 = vmatprep.subr.mxu0 %v315
    %1232 = vmatpush1.msra.mxu0 %v314
    %1233 = vmatprep.subr.mxu0 %v318
    %1234 = vmatpush1.msra.mxu0 %v317
    %1235 = vmatprep.subr.mxu0 %v321
    %1236 = vmatpush1.msra.mxu0 %v320
    %1237 = vmatprep.subr.mxu0 %v324
    %1238 = vmatpush1.msra.mxu0 %v323
    %1239 = vmatprep.subr.mxu0 %v327
    %1240 = vmatpush1.msra.mxu0 %v326
    %1241 = vmatprep.subr.mxu0 %v330
    %1242 = vmatpush1.msra.mxu0 %v329
    %1243 = vmatprep.subr.mxu0 %v333
    %1244 = vmatpush1.msra.mxu0 %v332
    %1245 = vmatprep.subr.mxu0 0.0
    %1246 = vmatpush1.msra.mxu0 0.0
    %1247 = vmatprep.subr.mxu0 0.0
    %1248 = vmatpush1.msra.mxu0 0.0
    %1249 = vmatprep.subr.mxu0 0.0
    %1250 = vmatpush1.msra.mxu0 0.0
    %1251 = vmatprep.subr.mxu0 0.0
    %1252 = vmatpush1.msra.mxu0 0.0
    %1253 = vmatprep.subr.mxu0 0.0
    %1254 = vmatpush1.msra.mxu0 0.0
    %1255 = vmatprep.subr.mxu0 0.0
    %1256 = vmatpush1.msra.mxu0 0.0
    %1257 = vmatprep.subr.mxu0 0.0
    %1258 = vmatpush1.msra.mxu0 0.0
    %1259 = vmatprep.subr.mxu0 0.0
    %1260 = vmatpush1.msra.mxu0 0.0
    %1261 = vmatprep.subr.mxu0 0.0
    %1262 = vmatpush1.msra.mxu0 0.0
    %1263 = vmatprep.subr.mxu0 0.0
    %1264 = vmatpush1.msra.mxu0 0.0
    %1265 = vmatprep.subr.mxu0 0.0
    %1266 = vmatpush1.msra.mxu0 0.0
    %1267 = vmatprep.subr.mxu0 0.0
    %1268 = vmatpush1.msra.mxu0 0.0
    %1269 = vmatprep.subr.mxu0 0.0
    %1270 = vmatpush1.msra.mxu0 0.0
    %1271 = vmatprep.subr.mxu0 0.0
    %1272 = vmatpush1.msra.mxu0 0.0
    %1273 = vmatprep.subr.mxu0 0.0
    %1274 = vmatpush1.msra.mxu0 0.0
    %1275 = vmatprep.subr.mxu0 0.0
    %1276 = vmatpush1.msra.mxu0 0.0
    %1277 = vmatprep.mubr.f32.mxu0 0.0
    %1278 = vmatmul.mubr.f32.gmra.mrb[0].mxu0 %v1211
    %v1279 = vpop.f32.mrb[0].mxu0
    %v1280 = vadd.f32 0.0, %v1279
    %v1281 = vpop.f32.mrb[0].mxu0
    %v1282 = vadd.f32 0.0, %v1281
    %1283 = vdwg.mxu0
    %1284 = vmatprep.subr.mxu0 0.0
    %1285 = vmatpush1.msra.mxu0 %v289
    %1286 = vmatprep.subr.mxu0 0.0
    %1287 = vmatpush1.msra.mxu0 %v292
    %1288 = vmatprep.subr.mxu0 0.0
    %1289 = vmatpush1.msra.mxu0 %v295
    %1290 = vmatprep.subr.mxu0 0.0
    %1291 = vmatpush1.msra.mxu0 %v298
    %1292 = vmatprep.subr.mxu0 0.0
    %1293 = vmatpush1.msra.mxu0 %v301
    %1294 = vmatprep.subr.mxu0 0.0
    %1295 = vmatpush1.msra.mxu0 %v304
    %1296 = vmatprep.subr.mxu0 0.0
    %1297 = vmatpush1.msra.mxu0 %v307
    %1298 = vmatprep.subr.mxu0 0.0
    %1299 = vmatpush1.msra.mxu0 %v310
    %1300 = vmatprep.subr.mxu0 0.0
    %1301 = vmatpush1.msra.mxu0 %v313
    %1302 = vmatprep.subr.mxu0 0.0
    %1303 = vmatpush1.msra.mxu0 %v316
    %1304 = vmatprep.subr.mxu0 0.0
    %1305 = vmatpush1.msra.mxu0 %v319
    %1306 = vmatprep.subr.mxu0 0.0
    %1307 = vmatpush1.msra.mxu0 %v322
    %1308 = vmatprep.subr.mxu0 0.0
    %1309 = vmatpush1.msra.mxu0 %v325
    %1310 = vmatprep.subr.mxu0 0.0
    %1311 = vmatpush1.msra.mxu0 %v328
    %1312 = vmatprep.subr.mxu0 0.0
    %1313 = vmatpush1.msra.mxu0 %v331
    %1314 = vmatprep.subr.mxu0 0.0
    %1315 = vmatpush1.msra.mxu0 %v334
    %1316 = vmatprep.subr.mxu0 0.0
    %1317 = vmatpush1.msra.mxu0 0.0
    %1318 = vmatprep.subr.mxu0 0.0
    %1319 = vmatpush1.msra.mxu0 0.0
    %1320 = vmatprep.subr.mxu0 0.0
    %1321 = vmatpush1.msra.mxu0 0.0
    %1322 = vmatprep.subr.mxu0 0.0
    %1323 = vmatpush1.msra.mxu0 0.0
    %1324 = vmatprep.subr.mxu0 0.0
    %1325 = vmatpush1.msra.mxu0 0.0
    %1326 = vmatprep.subr.mxu0 0.0
    %1327 = vmatpush1.msra.mxu0 0.0
    %1328 = vmatprep.subr.mxu0 0.0
    %1329 = vmatpush1.msra.mxu0 0.0
    %1330 = vmatprep.subr.mxu0 0.0
    %1331 = vmatpush1.msra.mxu0 0.0
    %1332 = vmatprep.subr.mxu0 0.0
    %1333 = vmatpush1.msra.mxu0 0.0
    %1334 = vmatprep.subr.mxu0 0.0
    %1335 = vmatpush1.msra.mxu0 0.0
    %1336 = vmatprep.subr.mxu0 0.0
    %1337 = vmatpush1.msra.mxu0 0.0
    %1338 = vmatprep.subr.mxu0 0.0
    %1339 = vmatpush1.msra.mxu0 0.0
    %1340 = vmatprep.subr.mxu0 0.0
    %1341 = vmatpush1.msra.mxu0 0.0
    %1342 = vmatprep.subr.mxu0 0.0
    %1343 = vmatpush1.msra.mxu0 0.0
    %1344 = vmatprep.subr.mxu0 0.0
    %1345 = vmatpush1.msra.mxu0 0.0
    %1346 = vmatprep.subr.mxu0 0.0
    %1347 = vmatpush1.msra.mxu0 0.0
    %1348 = vmatprep.mubr.f32.mxu0 0.0
    %1349 = vmatmul.mubr.f32.gmra.mrb[0].mxu0 %v1211
    %v1350 = vpop.f32.mrb[0].mxu0
    %v1351 = vadd.f32 0.0, %v1350
    %v1352 = vpop.f32.mrb[0].mxu0
    %1353 = vdwg.mxu0
    %v1355 = vrot.slane %v1280, 3
    %v1357 = vadd.f32 %v213, %v1355
    %v1358 = vxor.u32 %v1357, 2147483648
    %v1359 = vmul.f32 %v1358, 1.442695
    %v1360 = vpow.pop %v1359
    %v1361 = vadd.f32 %v1360, 1.0
    %v1362 = vrcp.pop %v1361
    %v1363 = vmul.f32 1.0, %v1362
    %v1365 = vrot.slane %v1282, 3
    %v1367 = vadd.f32 %v215, %v1365
    %v1368 = vxor.u32 %v1367, 2147483648
    %v1369 = vmul.f32 %v1368, 1.442695
    %v1370 = vpow.pop %v1369
    %v1371 = vadd.f32 %v1370, 1.0
    %v1372 = vrcp.pop %v1371
    %v1373 = vmul.f32 1.0, %v1372
    %v1374 = vadd.f32 %v1351, %v335
    %v1376 = vrot.slane %v1374, 3
    %v1378 = vmul.f32 %v1363, %v1376
    %v1379 = vadd.f32 %v284, %v1378
    %v1380 = vtanh.pop %v1379
    %v1381 = vsub.f32 1.0, %v1373
    %v1382 = vmul.f32 %v1381, %v1380
    %v1383 = vrot.slane %v1208, 7
    %v1385 = vmul.f32 %v1373, %v1383
    %v1386 = vadd.f32 %v1382, %v1385
    %1387 = vst [vmem:[#allocation2] sm:$0x20] %v1386
    %v1389 = vrot.slane %v1386, 5
    %1391 = vmatprep.subr.mxu0 %v288
    %1392 = vmatpush1.msra.mxu0 %v287
    %1393 = vmatprep.subr.mxu0 %v291
    %1394 = vmatpush1.msra.mxu0 %v290
    %1395 = vmatprep.subr.mxu0 %v294
    %1396 = vmatpush1.msra.mxu0 %v293
    %1397 = vmatprep.subr.mxu0 %v297
    %1398 = vmatpush1.msra.mxu0 %v296
    %1399 = vmatprep.subr.mxu0 %v300
    %1400 = vmatpush1.msra.mxu0 %v299
    %1401 = vmatprep.subr.mxu0 %v303
    %1402 = vmatpush1.msra.mxu0 %v302
    %1403 = vmatprep.subr.mxu0 %v306
    %1404 = vmatpush1.msra.mxu0 %v305
    %1405 = vmatprep.subr.mxu0 %v309
    %1406 = vmatpush1.msra.mxu0 %v308
    %1407 = vmatprep.subr.mxu0 %v312
    %1408 = vmatpush1.msra.mxu0 %v311
    %1409 = vmatprep.subr.mxu0 %v315
    %1410 = vmatpush1.msra.mxu0 %v314
    %1411 = vmatprep.subr.mxu0 %v318
    %1412 = vmatpush1.msra.mxu0 %v317
    %1413 = vmatprep.subr.mxu0 %v321
    %1414 = vmatpush1.msra.mxu0 %v320
    %1415 = vmatprep.subr.mxu0 %v324
    %1416 = vmatpush1.msra.mxu0 %v323
    %1417 = vmatprep.subr.mxu0 %v327
    %1418 = vmatpush1.msra.mxu0 %v326
    %1419 = vmatprep.subr.mxu0 %v330
    %1420 = vmatpush1.msra.mxu0 %v329
    %1421 = vmatprep.subr.mxu0 %v333
    %1422 = vmatpush1.msra.mxu0 %v332
    %1423 = vmatprep.subr.mxu0 0.0
    %1424 = vmatpush1.msra.mxu0 0.0
    %1425 = vmatprep.subr.mxu0 0.0
    %1426 = vmatpush1.msra.mxu0 0.0
    %1427 = vmatprep.subr.mxu0 0.0
    %1428 = vmatpush1.msra.mxu0 0.0
    %1429 = vmatprep.subr.mxu0 0.0
    %1430 = vmatpush1.msra.mxu0 0.0
    %1431 = vmatprep.subr.mxu0 0.0
    %1432 = vmatpush1.msra.mxu0 0.0
    %1433 = vmatprep.subr.mxu0 0.0
    %1434 = vmatpush1.msra.mxu0 0.0
    %1435 = vmatprep.subr.mxu0 0.0
    %1436 = vmatpush1.msra.mxu0 0.0
    %1437 = vmatprep.subr.mxu0 0.0
    %1438 = vmatpush1.msra.mxu0 0.0
    %1439 = vmatprep.subr.mxu0 0.0
    %1440 = vmatpush1.msra.mxu0 0.0
    %1441 = vmatprep.subr.mxu0 0.0
    %1442 = vmatpush1.msra.mxu0 0.0
    %1443 = vmatprep.subr.mxu0 0.0
    %1444 = vmatpush1.msra.mxu0 0.0
    %1445 = vmatprep.subr.mxu0 0.0
    %1446 = vmatpush1.msra.mxu0 0.0
    %1447 = vmatprep.subr.mxu0 0.0
    %1448 = vmatpush1.msra.mxu0 0.0
    %1449 = vmatprep.subr.mxu0 0.0
    %1450 = vmatpush1.msra.mxu0 0.0
    %1451 = vmatprep.subr.mxu0 0.0
    %1452 = vmatpush1.msra.mxu0 0.0
    %1453 = vmatprep.subr.mxu0 0.0
    %1454 = vmatpush1.msra.mxu0 0.0
    %1455 = vmatprep.mubr.f32.mxu0 0.0
    %1456 = vmatmul.mubr.f32.gmra.mrb[0].mxu0 %v1389
    %v1457 = vpop.f32.mrb[0].mxu0
    %v1458 = vadd.f32 0.0, %v1457
    %v1459 = vpop.f32.mrb[0].mxu0
    %v1460 = vadd.f32 0.0, %v1459
    %1461 = vdwg.mxu0
    %1462 = vmatprep.subr.mxu0 0.0
    %1463 = vmatpush1.msra.mxu0 %v289
    %1464 = vmatprep.subr.mxu0 0.0
    %1465 = vmatpush1.msra.mxu0 %v292
    %1466 = vmatprep.subr.mxu0 0.0
    %1467 = vmatpush1.msra.mxu0 %v295
    %1468 = vmatprep.subr.mxu0 0.0
    %1469 = vmatpush1.msra.mxu0 %v298
    %1470 = vmatprep.subr.mxu0 0.0
    %1471 = vmatpush1.msra.mxu0 %v301
    %1472 = vmatprep.subr.mxu0 0.0
    %1473 = vmatpush1.msra.mxu0 %v304
    %1474 = vmatprep.subr.mxu0 0.0
    %1475 = vmatpush1.msra.mxu0 %v307
    %1476 = vmatprep.subr.mxu0 0.0
    %1477 = vmatpush1.msra.mxu0 %v310
    %1478 = vmatprep.subr.mxu0 0.0
    %1479 = vmatpush1.msra.mxu0 %v313
    %1480 = vmatprep.subr.mxu0 0.0
    %1481 = vmatpush1.msra.mxu0 %v316
    %1482 = vmatprep.subr.mxu0 0.0
    %1483 = vmatpush1.msra.mxu0 %v319
    %1484 = vmatprep.subr.mxu0 0.0
    %1485 = vmatpush1.msra.mxu0 %v322
    %1486 = vmatprep.subr.mxu0 0.0
    %1487 = vmatpush1.msra.mxu0 %v325
    %1488 = vmatprep.subr.mxu0 0.0
    %1489 = vmatpush1.msra.mxu0 %v328
    %1490 = vmatprep.subr.mxu0 0.0
    %1491 = vmatpush1.msra.mxu0 %v331
    %1492 = vmatprep.subr.mxu0 0.0
    %1493 = vmatpush1.msra.mxu0 %v334
    %1494 = vmatprep.subr.mxu0 0.0
    %1495 = vmatpush1.msra.mxu0 0.0
    %1496 = vmatprep.subr.mxu0 0.0
    %1497 = vmatpush1.msra.mxu0 0.0
    %1498 = vmatprep.subr.mxu0 0.0
    %1499 = vmatpush1.msra.mxu0 0.0
    %1500 = vmatprep.subr.mxu0 0.0
    %1501 = vmatpush1.msra.mxu0 0.0
    %1502 = vmatprep.subr.mxu0 0.0
    %1503 = vmatpush1.msra.mxu0 0.0
    %1504 = vmatprep.subr.mxu0 0.0
    %1505 = vmatpush1.msra.mxu0 0.0
    %1506 = vmatprep.subr.mxu0 0.0
    %1507 = vmatpush1.msra.mxu0 0.0
    %1508 = vmatprep.subr.mxu0 0.0
    %1509 = vmatpush1.msra.mxu0 0.0
    %1510 = vmatprep.subr.mxu0 0.0
    %1511 = vmatpush1.msra.mxu0 0.0
    %1512 = vmatprep.subr.mxu0 0.0
    %1513 = vmatpush1.msra.mxu0 0.0
    %1514 = vmatprep.subr.mxu0 0.0
    %1515 = vmatpush1.msra.mxu0 0.0
    %1516 = vmatprep.subr.mxu0 0.0
    %1517 = vmatpush1.msra.mxu0 0.0
    %1518 = vmatprep.subr.mxu0 0.0
    %1519 = vmatpush1.msra.mxu0 0.0
    %1520 = vmatprep.subr.mxu0 0.0
    %1521 = vmatpush1.msra.mxu0 0.0
    %1522 = vmatprep.subr.mxu0 0.0
    %1523 = vmatpush1.msra.mxu0 0.0
    %1524 = vmatprep.subr.mxu0 0.0
    %1525 = vmatpush1.msra.mxu0 0.0
    %1526 = vmatprep.mubr.f32.mxu0 0.0
    %1527 = vmatmul.mubr.f32.gmra.mrb[0].mxu0 %v1389
    %v1528 = vpop.f32.mrb[0].mxu0
    %v1529 = vadd.f32 0.0, %v1528
    %v1530 = vpop.f32.mrb[0].mxu0
    %1531 = vdwg.mxu0
    %v1533 = vrot.slane %v1458, 2
    %v1535 = vadd.f32 %v213, %v1533
    %v1536 = vxor.u32 %v1535, 2147483648
    %v1537 = vmul.f32 %v1536, 1.442695
    %v1538 = vpow.pop %v1537
    %v1539 = vadd.f32 %v1538, 1.0
    %v1540 = vrcp.pop %v1539
    %v1541 = vmul.f32 1.0, %v1540
    %v1543 = vrot.slane %v1460, 2
    %v1545 = vadd.f32 %v215, %v1543
    %v1546 = vxor.u32 %v1545, 2147483648
    %v1547 = vmul.f32 %v1546, 1.442695
    %v1548 = vpow.pop %v1547
    %v1549 = vadd.f32 %v1548, 1.0
    %v1550 = vrcp.pop %v1549
    %v1551 = vmul.f32 1.0, %v1550
    %v1552 = vadd.f32 %v1529, %v335
    %v1554 = vrot.slane %v1552, 2
    %v1556 = vmul.f32 %v1541, %v1554
    %v1557 = vadd.f32 %v284, %v1556
    %v1558 = vtanh.pop %v1557
    %v1559 = vsub.f32 1.0, %v1551
    %v1560 = vmul.f32 %v1559, %v1558
    %v1561 = vrot.slane %v1386, 7
    %v1563 = vmul.f32 %v1551, %v1561
    %v1564 = vadd.f32 %v1560, %v1563
    %1565 = vst [vmem:[#allocation2] sm:$0x40] %v1564
    %v1567 = vrot.slane %v1564, 6
    %1569 = vmatprep.subr.mxu0 %v288
    %1570 = vmatpush1.msra.mxu0 %v287
    %1571 = vmatprep.subr.mxu0 %v291
    %1572 = vmatpush1.msra.mxu0 %v290
    %1573 = vmatprep.subr.mxu0 %v294
    %1574 = vmatpush1.msra.mxu0 %v293
    %1575 = vmatprep.subr.mxu0 %v297
    %1576 = vmatpush1.msra.mxu0 %v296
    %1577 = vmatprep.subr.mxu0 %v300
    %1578 = vmatpush1.msra.mxu0 %v299
    %1579 = vmatprep.subr.mxu0 %v303
    %1580 = vmatpush1.msra.mxu0 %v302
    %1581 = vmatprep.subr.mxu0 %v306
    %1582 = vmatpush1.msra.mxu0 %v305
    %1583 = vmatprep.subr.mxu0 %v309
    %1584 = vmatpush1.msra.mxu0 %v308
    %1585 = vmatprep.subr.mxu0 %v312
    %1586 = vmatpush1.msra.mxu0 %v311
    %1587 = vmatprep.subr.mxu0 %v315
    %1588 = vmatpush1.msra.mxu0 %v314
    %1589 = vmatprep.subr.mxu0 %v318
    %1590 = vmatpush1.msra.mxu0 %v317
    %1591 = vmatprep.subr.mxu0 %v321
    %1592 = vmatpush1.msra.mxu0 %v320
    %1593 = vmatprep.subr.mxu0 %v324
    %1594 = vmatpush1.msra.mxu0 %v323
    %1595 = vmatprep.subr.mxu0 %v327
    %1596 = vmatpush1.msra.mxu0 %v326
    %1597 = vmatprep.subr.mxu0 %v330
    %1598 = vmatpush1.msra.mxu0 %v329
    %1599 = vmatprep.subr.mxu0 %v333
    %1600 = vmatpush1.msra.mxu0 %v332
    %1601 = vmatprep.subr.mxu0 0.0
    %1602 = vmatpush1.msra.mxu0 0.0
    %1603 = vmatprep.subr.mxu0 0.0
    %1604 = vmatpush1.msra.mxu0 0.0
    %1605 = vmatprep.subr.mxu0 0.0
    %1606 = vmatpush1.msra.mxu0 0.0
    %1607 = vmatprep.subr.mxu0 0.0
    %1608 = vmatpush1.msra.mxu0 0.0
    %1609 = vmatprep.subr.mxu0 0.0
    %1610 = vmatpush1.msra.mxu0 0.0
    %1611 = vmatprep.subr.mxu0 0.0
    %1612 = vmatpush1.msra.mxu0 0.0
    %1613 = vmatprep.subr.mxu0 0.0
    %1614 = vmatpush1.msra.mxu0 0.0
    %1615 = vmatprep.subr.mxu0 0.0
    %1616 = vmatpush1.msra.mxu0 0.0
    %1617 = vmatprep.subr.mxu0 0.0
    %1618 = vmatpush1.msra.mxu0 0.0
    %1619 = vmatprep.subr.mxu0 0.0
    %1620 = vmatpush1.msra.mxu0 0.0
    %1621 = vmatprep.subr.mxu0 0.0
    %1622 = vmatpush1.msra.mxu0 0.0
    %1623 = vmatprep.subr.mxu0 0.0
    %1624 = vmatpush1.msra.mxu0 0.0
    %1625 = vmatprep.subr.mxu0 0.0
    %1626 = vmatpush1.msra.mxu0 0.0
    %1627 = vmatprep.subr.mxu0 0.0
    %1628 = vmatpush1.msra.mxu0 0.0
    %1629 = vmatprep.subr.mxu0 0.0
    %1630 = vmatpush1.msra.mxu0 0.0
    %1631 = vmatprep.subr.mxu0 0.0
    %1632 = vmatpush1.msra.mxu0 0.0
    %1633 = vmatprep.mubr.f32.mxu0 0.0
    %1634 = vmatmul.mubr.f32.gmra.mrb[0].mxu0 %v1567
    %v1635 = vpop.f32.mrb[0].mxu0
    %v1636 = vadd.f32 0.0, %v1635
    %v1637 = vpop.f32.mrb[0].mxu0
    %v1638 = vadd.f32 0.0, %v1637
    %1639 = vdwg.mxu0
    %1640 = vmatprep.subr.mxu0 0.0
    %1641 = vmatpush1.msra.mxu0 %v289
    %1642 = vmatprep.subr.mxu0 0.0
    %1643 = vmatpush1.msra.mxu0 %v292
    %1644 = vmatprep.subr.mxu0 0.0
    %1645 = vmatpush1.msra.mxu0 %v295
    %1646 = vmatprep.subr.mxu0 0.0
    %1647 = vmatpush1.msra.mxu0 %v298
    %1648 = vmatprep.subr.mxu0 0.0
    %1649 = vmatpush1.msra.mxu0 %v301
    %1650 = vmatprep.subr.mxu0 0.0
    %1651 = vmatpush1.msra.mxu0 %v304
    %1652 = vmatprep.subr.mxu0 0.0
    %1653 = vmatpush1.msra.mxu0 %v307
    %1654 = vmatprep.subr.mxu0 0.0
    %1655 = vmatpush1.msra.mxu0 %v310
    %1656 = vmatprep.subr.mxu0 0.0
    %1657 = vmatpush1.msra.mxu0 %v313
    %1658 = vmatprep.subr.mxu0 0.0
    %1659 = vmatpush1.msra.mxu0 %v316
    %1660 = vmatprep.subr.mxu0 0.0
    %1661 = vmatpush1.msra.mxu0 %v319
    %1662 = vmatprep.subr.mxu0 0.0
    %1663 = vmatpush1.msra.mxu0 %v322
    %1664 = vmatprep.subr.mxu0 0.0
    %1665 = vmatpush1.msra.mxu0 %v325
    %1666 = vmatprep.subr.mxu0 0.0
    %1667 = vmatpush1.msra.mxu0 %v328
    %1668 = vmatprep.subr.mxu0 0.0
    %1669 = vmatpush1.msra.mxu0 %v331
    %1670 = vmatprep.subr.mxu0 0.0
    %1671 = vmatpush1.msra.mxu0 %v334
    %1672 = vmatprep.subr.mxu0 0.0
    %1673 = vmatpush1.msra.mxu0 0.0
    %1674 = vmatprep.subr.mxu0 0.0
    %1675 = vmatpush1.msra.mxu0 0.0
    %1676 = vmatprep.subr.mxu0 0.0
    %1677 = vmatpush1.msra.mxu0 0.0
    %1678 = vmatprep.subr.mxu0 0.0
    %1679 = vmatpush1.msra.mxu0 0.0
    %1680 = vmatprep.subr.mxu0 0.0
    %1681 = vmatpush1.msra.mxu0 0.0
    %1682 = vmatprep.subr.mxu0 0.0
    %1683 = vmatpush1.msra.mxu0 0.0
    %1684 = vmatprep.subr.mxu0 0.0
    %1685 = vmatpush1.msra.mxu0 0.0
    %1686 = vmatprep.subr.mxu0 0.0
    %1687 = vmatpush1.msra.mxu0 0.0
    %1688 = vmatprep.subr.mxu0 0.0
    %1689 = vmatpush1.msra.mxu0 0.0
    %1690 = vmatprep.subr.mxu0 0.0
    %1691 = vmatpush1.msra.mxu0 0.0
    %1692 = vmatprep.subr.mxu0 0.0
    %1693 = vmatpush1.msra.mxu0 0.0
    %1694 = vmatprep.subr.mxu0 0.0
    %1695 = vmatpush1.msra.mxu0 0.0
    %1696 = vmatprep.subr.mxu0 0.0
    %1697 = vmatpush1.msra.mxu0 0.0
    %1698 = vmatprep.subr.mxu0 0.0
    %1699 = vmatpush1.msra.mxu0 0.0
    %1700 = vmatprep.subr.mxu0 0.0
    %1701 = vmatpush1.msra.mxu0 0.0
    %1702 = vmatprep.subr.mxu0 0.0
    %1703 = vmatpush1.msra.mxu0 0.0
    %1704 = vmatprep.mubr.f32.mxu0 0.0
    %1705 = vmatmul.mubr.f32.gmra.mrb[0].mxu0 %v1567
    %v1706 = vpop.f32.mrb[0].mxu0
    %v1707 = vadd.f32 0.0, %v1706
    %v1708 = vpop.f32.mrb[0].mxu0
    %1709 = vdwg.mxu0
    %v1711 = vrot.slane %v1636, 1
    %v1713 = vadd.f32 %v213, %v1711
    %v1714 = vxor.u32 %v1713, 2147483648
    %v1715 = vmul.f32 %v1714, 1.442695
    %v1716 = vpow.pop %v1715
    %v1717 = vadd.f32 %v1716, 1.0
    %v1718 = vrcp.pop %v1717
    %v1719 = vmul.f32 1.0, %v1718
    %v1721 = vrot.slane %v1638, 1
    %v1723 = vadd.f32 %v215, %v1721
    %v1724 = vxor.u32 %v1723, 2147483648
    %v1725 = vmul.f32 %v1724, 1.442695
    %v1726 = vpow.pop %v1725
    %v1727 = vadd.f32 %v1726, 1.0
    %v1728 = vrcp.pop %v1727
    %v1729 = vmul.f32 1.0, %v1728
    %v1730 = vadd.f32 %v1707, %v335
    %v1732 = vrot.slane %v1730, 1
    %v1734 = vmul.f32 %v1719, %v1732
    %v1735 = vadd.f32 %v284, %v1734
    %v1736 = vtanh.pop %v1735
    %v1737 = vsub.f32 1.0, %v1729
    %v1738 = vmul.f32 %v1737, %v1736
    %v1739 = vrot.slane %v1564, 7
    %v1741 = vmul.f32 %v1729, %v1739
    %v1742 = vadd.f32 %v1738, %v1741
    %1743 = vst [vmem:[#allocation2] sm:$0x80] %v1742
    %v1744 = vld [vmem:[#allocation2] sm:$0xff]
    %s1745 = scalar_lea.vmem [#allocation6], 384
    %v1746 = vld [vmem:[%s1745] sm:$0xff]
    %v1747 = vld [vmem:[%s1745 + $0x8] sm:$0xff]
    %v1748 = vld [vmem:[%s1745 + $0x10] sm:$0xff]
    %v1749 = vld [vmem:[%s1745 + $0x18] sm:$0xff]
    %v1750 = vld [vmem:[%s1745 + $0x20] sm:$0xff]
    %v1751 = vld [vmem:[%s1745 + $0x28] sm:$0xff]
    %v1752 = vld [vmem:[%s1745 + $0x30] sm:$0xff]
    %v1753 = vld [vmem:[%s1745 + $0x38] sm:$0xff]
    %v1754 = vld [vmem:[%s1745 + $0x40] sm:$0xff]
    %v1755 = vld [vmem:[%s1745 + $0x48] sm:$0xff]
    %v1756 = vld [vmem:[%s1745 + $0x50] sm:$0xff]
    %v1757 = vld [vmem:[%s1745 + $0x58] sm:$0xff]
    %v1758 = vld [vmem:[%s1745 + $0x60] sm:$0xff]
    %v1759 = vld [vmem:[%s1745 + $0x68] sm:$0xff]
    %v1760 = vld [vmem:[%s1745 + $0x70] sm:$0xff]
    %v1761 = vld [vmem:[%s1745 + $0x78] sm:$0xff]
    %v1762 = vld [vmem:[%s1745 + $0x80] sm:$0xff]
    %v1763 = vld [vmem:[%s1745 + $0x88] sm:$0xff]
    %v1764 = vld [vmem:[%s1745 + $0x90] sm:$0xff]
    %v1765 = vld [vmem:[%s1745 + $0x98] sm:$0xff]
    %v1766 = vld [vmem:[%s1745 + $0xa0] sm:$0xff]
    %v1767 = vld [vmem:[%s1745 + $0xa8] sm:$0xff]
    %v1768 = vld [vmem:[%s1745 + $0xb0] sm:$0xff]
    %v1769 = vld [vmem:[%s1745 + $0xb8] sm:$0xff]
    %v1770 = vld [vmem:[%s1745 + $0xc0] sm:$0xff]
    %v1771 = vld [vmem:[%s1745 + $0xc8] sm:$0xff]
    %v1772 = vld [vmem:[%s1745 + $0xd0] sm:$0xff]
    %v1773 = vld [vmem:[%s1745 + $0xd8] sm:$0xff]
    %v1774 = vld [vmem:[%s1745 + $0xe0] sm:$0xff]
    %v1775 = vld [vmem:[%s1745 + $0xe8] sm:$0xff]
    %v1776 = vld [vmem:[%s1745 + $0xf0] sm:$0xff]
    %v1777 = vld [vmem:[%s1745 + $0xf8] sm:$0xff]
    %v1778 = vld [vmem:[%s1745 + $0x100] sm:$0xff]
    %v1779 = vld [vmem:[%s1745 + $0x108] sm:$0xff]
    %v1780 = vld [vmem:[%s1745 + $0x110] sm:$0xff]
    %v1781 = vld [vmem:[%s1745 + $0x118] sm:$0xff]
    %v1782 = vld [vmem:[%s1745 + $0x120] sm:$0xff]
    %v1783 = vld [vmem:[%s1745 + $0x128] sm:$0xff]
    %v1784 = vld [vmem:[%s1745 + $0x130] sm:$0xff]
    %v1785 = vld [vmem:[%s1745 + $0x138] sm:$0xff]
    %v1786 = vld [vmem:[%s1745 + $0x140] sm:$0xff]
    %v1787 = vld [vmem:[%s1745 + $0x148] sm:$0xff]
    %v1788 = vld [vmem:[%s1745 + $0x150] sm:$0xff]
    %v1789 = vld [vmem:[%s1745 + $0x158] sm:$0xff]
    %v1790 = vld [vmem:[%s1745 + $0x160] sm:$0xff]
    %v1791 = vld [vmem:[%s1745 + $0x168] sm:$0xff]
    %v1792 = vld [vmem:[%s1745 + $0x170] sm:$0xff]
    %v1793 = vld [vmem:[%s1745 + $0x178] sm:$0xff]
    %s1794 = scalar_lea.vmem %s3, 3
    %v1795 = vld [vmem:[%s1794] sm:$0x7]
    %v1797 = vlaneseq
    %v1798 = vshrl.u32 %v1797, 7
    %v1799 = vsub.s32 0, %v1798
    %v1800 = vrot.slane %v1795, %v1799
    %v1801 = vlaneseq
    %v1802 = vshrl.u32 %v1801, 7
    %v1803 = vsub.s32 1, %v1802
    %v1804 = vrot.slane %v1795, %v1803
    %v1805 = vlaneseq
    %v1806 = vshrl.u32 %v1805, 7
    %v1807 = vsub.s32 2, %v1806
    %v1808 = vrot.slane %v1795, %v1807
    %1812 = vmatprep.subr.mxu0 %v1747
    %1813 = vmatpush1.msra.mxu0 %v1746
    %1814 = vmatprep.subr.mxu0 %v1750
    %1815 = vmatpush1.msra.mxu0 %v1749
    %1816 = vmatprep.subr.mxu0 %v1753
    %1817 = vmatpush1.msra.mxu0 %v1752
    %1818 = vmatprep.subr.mxu0 %v1756
    %1819 = vmatpush1.msra.mxu0 %v1755
    %1820 = vmatprep.subr.mxu0 %v1759
    %1821 = vmatpush1.msra.mxu0 %v1758
    %1822 = vmatprep.subr.mxu0 %v1762
    %1823 = vmatpush1.msra.mxu0 %v1761
    %1824 = vmatprep.subr.mxu0 %v1765
    %1825 = vmatpush1.msra.mxu0 %v1764
    %1826 = vmatprep.subr.mxu0 %v1768
    %1827 = vmatpush1.msra.mxu0 %v1767
    %1828 = vmatprep.subr.mxu0 %v1771
    %1829 = vmatpush1.msra.mxu0 %v1770
    %1830 = vmatprep.subr.mxu0 %v1774
    %1831 = vmatpush1.msra.mxu0 %v1773
    %1832 = vmatprep.subr.mxu0 %v1777
    %1833 = vmatpush1.msra.mxu0 %v1776
    %1834 = vmatprep.subr.mxu0 %v1780
    %1835 = vmatpush1.msra.mxu0 %v1779
    %1836 = vmatprep.subr.mxu0 %v1783
    %1837 = vmatpush1.msra.mxu0 %v1782
    %1838 = vmatprep.subr.mxu0 %v1786
    %1839 = vmatpush1.msra.mxu0 %v1785
    %1840 = vmatprep.subr.mxu0 %v1789
    %1841 = vmatpush1.msra.mxu0 %v1788
    %1842 = vmatprep.subr.mxu0 %v1792
    %1843 = vmatpush1.msra.mxu0 %v1791
    %1844 = vmatprep.subr.mxu0 0.0
    %1845 = vmatpush1.msra.mxu0 0.0
    %1846 = vmatprep.subr.mxu0 0.0
    %1847 = vmatpush1.msra.mxu0 0.0
    %1848 = vmatprep.subr.mxu0 0.0
    %1849 = vmatpush1.msra.mxu0 0.0
    %1850 = vmatprep.subr.mxu0 0.0
    %1851 = vmatpush1.msra.mxu0 0.0
    %1852 = vmatprep.subr.mxu0 0.0
    %1853 = vmatpush1.msra.mxu0 0.0
    %1854 = vmatprep.subr.mxu0 0.0
    %1855 = vmatpush1.msra.mxu0 0.0
    %1856 = vmatprep.subr.mxu0 0.0
    %1857 = vmatpush1.msra.mxu0 0.0
    %1858 = vmatprep.subr.mxu0 0.0
    %1859 = vmatpush1.msra.mxu0 0.0
    %1860 = vmatprep.subr.mxu0 0.0
    %1861 = vmatpush1.msra.mxu0 0.0
    %1862 = vmatprep.subr.mxu0 0.0
    %1863 = vmatpush1.msra.mxu0 0.0
    %1864 = vmatprep.subr.mxu0 0.0
    %1865 = vmatpush1.msra.mxu0 0.0
    %1866 = vmatprep.subr.mxu0 0.0
    %1867 = vmatpush1.msra.mxu0 0.0
    %1868 = vmatprep.subr.mxu0 0.0
    %1869 = vmatpush1.msra.mxu0 0.0
    %1870 = vmatprep.subr.mxu0 0.0
    %1871 = vmatpush1.msra.mxu0 0.0
    %1872 = vmatprep.subr.mxu0 0.0
    %1873 = vmatpush1.msra.mxu0 0.0
    %1874 = vmatprep.subr.mxu0 0.0
    %1875 = vmatpush1.msra.mxu0 0.0
    %1876 = vmatprep.mubr.f32.mxu0 0.0
    %1877 = vmatmul.mubr.f32.gmra.mrb[0].mxu0 %v1744
    %v1878 = vpop.f32.mrb[0].mxu0
    %v1879 = vadd.f32 %v1800, %v1878
    %v1880 = vpop.f32.mrb[0].mxu0
    %v1881 = vadd.f32 %v1804, %v1880
    %1882 = vdwg.mxu0
    %1883 = vmatprep.subr.mxu0 0.0
    %1884 = vmatpush1.msra.mxu0 %v1748
    %1885 = vmatprep.subr.mxu0 0.0
    %1886 = vmatpush1.msra.mxu0 %v1751
    %1887 = vmatprep.subr.mxu0 0.0
    %1888 = vmatpush1.msra.mxu0 %v1754
    %1889 = vmatprep.subr.mxu0 0.0
    %1890 = vmatpush1.msra.mxu0 %v1757
    %1891 = vmatprep.subr.mxu0 0.0
    %1892 = vmatpush1.msra.mxu0 %v1760
    %1893 = vmatprep.subr.mxu0 0.0
    %1894 = vmatpush1.msra.mxu0 %v1763
    %1895 = vmatprep.subr.mxu0 0.0
    %1896 = vmatpush1.msra.mxu0 %v1766
    %1897 = vmatprep.subr.mxu0 0.0
    %1898 = vmatpush1.msra.mxu0 %v1769
    %1899 = vmatprep.subr.mxu0 0.0
    %1900 = vmatpush1.msra.mxu0 %v1772
    %1901 = vmatprep.subr.mxu0 0.0
    %1902 = vmatpush1.msra.mxu0 %v1775
    %1903 = vmatprep.subr.mxu0 0.0
    %1904 = vmatpush1.msra.mxu0 %v1778
    %1905 = vmatprep.subr.mxu0 0.0
    %1906 = vmatpush1.msra.mxu0 %v1781
    %1907 = vmatprep.subr.mxu0 0.0
    %1908 = vmatpush1.msra.mxu0 %v1784
    %1909 = vmatprep.subr.mxu0 0.0
    %1910 = vmatpush1.msra.mxu0 %v1787
    %1911 = vmatprep.subr.mxu0 0.0
    %1912 = vmatpush1.msra.mxu0 %v1790
    %1913 = vmatprep.subr.mxu0 0.0
    %1914 = vmatpush1.msra.mxu0 %v1793
    %1915 = vmatprep.subr.mxu0 0.0
    %1916 = vmatpush1.msra.mxu0 0.0
    %1917 = vmatprep.subr.mxu0 0.0
    %1918 = vmatpush1.msra.mxu0 0.0
    %1919 = vmatprep.subr.mxu0 0.0
    %1920 = vmatpush1.msra.mxu0 0.0
    %1921 = vmatprep.subr.mxu0 0.0
    %1922 = vmatpush1.msra.mxu0 0.0
    %1923 = vmatprep.subr.mxu0 0.0
    %1924 = vmatpush1.msra.mxu0 0.0
    %1925 = vmatprep.subr.mxu0 0.0
    %1926 = vmatpush1.msra.mxu0 0.0
    %1927 = vmatprep.subr.mxu0 0.0
    %1928 = vmatpush1.msra.mxu0 0.0
    %1929 = vmatprep.subr.mxu0 0.0
    %1930 = vmatpush1.msra.mxu0 0.0
    %1931 = vmatprep.subr.mxu0 0.0
    %1932 = vmatpush1.msra.mxu0 0.0
    %1933 = vmatprep.subr.mxu0 0.0
    %1934 = vmatpush1.msra.mxu0 0.0
    %1935 = vmatprep.subr.mxu0 0.0
    %1936 = vmatpush1.msra.mxu0 0.0
    %1937 = vmatprep.subr.mxu0 0.0
    %1938 = vmatpush1.msra.mxu0 0.0
    %1939 = vmatprep.subr.mxu0 0.0
    %1940 = vmatpush1.msra.mxu0 0.0
    %1941 = vmatprep.subr.mxu0 0.0
    %1942 = vmatpush1.msra.mxu0 0.0
    %1943 = vmatprep.subr.mxu0 0.0
    %1944 = vmatpush1.msra.mxu0 0.0
    %1945 = vmatprep.subr.mxu0 0.0
    %1946 = vmatpush1.msra.mxu0 0.0
    %1947 = vmatprep.mubr.f32.mxu0 0.0
    %1948 = vmatmul.mubr.f32.gmra.mrb[0].mxu0 %v1744
    %v1949 = vpop.f32.mrb[0].mxu0
    %v1950 = vadd.f32 %v1808, %v1949
    %v1951 = vpop.f32.mrb[0].mxu0
    %1952 = vdwg.mxu0
    %s1953 = scalar_lea.vmem [#allocation8], 384
    %v1954 = vld [vmem:[%s1953] sm:$0xff]
    %v1955 = vld [vmem:[%s1953 + $0x8] sm:$0xff]
    %v1956 = vld [vmem:[%s1953 + $0x10] sm:$0xff]
    %v1957 = vld [vmem:[%s1953 + $0x18] sm:$0xff]
    %v1958 = vld [vmem:[%s1953 + $0x20] sm:$0xff]
    %v1959 = vld [vmem:[%s1953 + $0x28] sm:$0xff]
    %v1960 = vld [vmem:[%s1953 + $0x30] sm:$0xff]
    %v1961 = vld [vmem:[%s1953 + $0x38] sm:$0xff]
    %v1962 = vld [vmem:[%s1953 + $0x40] sm:$0xff]
    %v1963 = vld [vmem:[%s1953 + $0x48] sm:$0xff]
    %v1964 = vld [vmem:[%s1953 + $0x50] sm:$0xff]
    %v1965 = vld [vmem:[%s1953 + $0x58] sm:$0xff]
    %v1966 = vld [vmem:[%s1953 + $0x60] sm:$0xff]
    %v1967 = vld [vmem:[%s1953 + $0x68] sm:$0xff]
    %v1968 = vld [vmem:[%s1953 + $0x70] sm:$0xff]
    %v1969 = vld [vmem:[%s1953 + $0x78] sm:$0xff]
    %v1970 = vld [vmem:[%s1953 + $0x80] sm:$0xff]
    %v1971 = vld [vmem:[%s1953 + $0x88] sm:$0xff]
    %v1972 = vld [vmem:[%s1953 + $0x90] sm:$0xff]
    %v1973 = vld [vmem:[%s1953 + $0x98] sm:$0xff]
    %v1974 = vld [vmem:[%s1953 + $0xa0] sm:$0xff]
    %v1975 = vld [vmem:[%s1953 + $0xa8] sm:$0xff]
    %v1976 = vld [vmem:[%s1953 + $0xb0] sm:$0xff]
    %v1977 = vld [vmem:[%s1953 + $0xb8] sm:$0xff]
    %v1978 = vld [vmem:[%s1953 + $0xc0] sm:$0xff]
    %v1979 = vld [vmem:[%s1953 + $0xc8] sm:$0xff]
    %v1980 = vld [vmem:[%s1953 + $0xd0] sm:$0xff]
    %v1981 = vld [vmem:[%s1953 + $0xd8] sm:$0xff]
    %v1982 = vld [vmem:[%s1953 + $0xe0] sm:$0xff]
    %v1983 = vld [vmem:[%s1953 + $0xe8] sm:$0xff]
    %v1984 = vld [vmem:[%s1953 + $0xf0] sm:$0xff]
    %v1985 = vld [vmem:[%s1953 + $0xf8] sm:$0xff]
    %v1986 = vld [vmem:[%s1953 + $0x100] sm:$0xff]
    %v1987 = vld [vmem:[%s1953 + $0x108] sm:$0xff]
    %v1988 = vld [vmem:[%s1953 + $0x110] sm:$0xff]
    %v1989 = vld [vmem:[%s1953 + $0x118] sm:$0xff]
    %v1990 = vld [vmem:[%s1953 + $0x120] sm:$0xff]
    %v1991 = vld [vmem:[%s1953 + $0x128] sm:$0xff]
    %v1992 = vld [vmem:[%s1953 + $0x130] sm:$0xff]
    %v1993 = vld [vmem:[%s1953 + $0x138] sm:$0xff]
    %v1994 = vld [vmem:[%s1953 + $0x140] sm:$0xff]
    %v1995 = vld [vmem:[%s1953 + $0x148] sm:$0xff]
    %v1996 = vld [vmem:[%s1953 + $0x150] sm:$0xff]
    %v1997 = vld [vmem:[%s1953 + $0x158] sm:$0xff]
    %v1998 = vld [vmem:[%s1953 + $0x160] sm:$0xff]
    %v1999 = vld [vmem:[%s1953 + $0x168] sm:$0xff]
    %v2000 = vld [vmem:[%s1953 + $0x170] sm:$0xff]
    %v2001 = vld [vmem:[%s1953 + $0x178] sm:$0xff]
    %s2002 = scalar_lea.vmem %s4, 1
    %v2003 = vld [vmem:[%s2002] sm:$0x1]
    %2004 = vmatprep.subr.mxu0 %v1955
    %2005 = vmatpush1.msra.mxu0 %v1954
    %2006 = vmatprep.subr.mxu0 %v1958
    %2007 = vmatpush1.msra.mxu0 %v1957
    %2008 = vmatprep.subr.mxu0 %v1961
    %2009 = vmatpush1.msra.mxu0 %v1960
    %2010 = vmatprep.subr.mxu0 %v1964
    %2011 = vmatpush1.msra.mxu0 %v1963
    %2012 = vmatprep.subr.mxu0 %v1967
    %2013 = vmatpush1.msra.mxu0 %v1966
    %2014 = vmatprep.subr.mxu0 %v1970
    %2015 = vmatpush1.msra.mxu0 %v1969
    %2016 = vmatprep.subr.mxu0 %v1973
    %2017 = vmatpush1.msra.mxu0 %v1972
    %2018 = vmatprep.subr.mxu0 %v1976
    %2019 = vmatpush1.msra.mxu0 %v1975
    %2020 = vmatprep.subr.mxu0 %v1979
    %2021 = vmatpush1.msra.mxu0 %v1978
    %2022 = vmatprep.subr.mxu0 %v1982
    %2023 = vmatpush1.msra.mxu0 %v1981
    %2024 = vmatprep.subr.mxu0 %v1985
    %2025 = vmatpush1.msra.mxu0 %v1984
    %2026 = vmatprep.subr.mxu0 %v1988
    %2027 = vmatpush1.msra.mxu0 %v1987
    %2028 = vmatprep.subr.mxu0 %v1991
    %2029 = vmatpush1.msra.mxu0 %v1990
    %2030 = vmatprep.subr.mxu0 %v1994
    %2031 = vmatpush1.msra.mxu0 %v1993
    %2032 = vmatprep.subr.mxu0 %v1997
    %2033 = vmatpush1.msra.mxu0 %v1996
    %2034 = vmatprep.subr.mxu0 %v2000
    %2035 = vmatpush1.msra.mxu0 %v1999
    %2036 = vmatprep.subr.mxu0 0.0
    %2037 = vmatpush1.msra.mxu0 0.0
    %2038 = vmatprep.subr.mxu0 0.0
    %2039 = vmatpush1.msra.mxu0 0.0
    %2040 = vmatprep.subr.mxu0 0.0
    %2041 = vmatpush1.msra.mxu0 0.0
    %2042 = vmatprep.subr.mxu0 0.0
    %2043 = vmatpush1.msra.mxu0 0.0
    %2044 = vmatprep.subr.mxu0 0.0
    %2045 = vmatpush1.msra.mxu0 0.0
    %2046 = vmatprep.subr.mxu0 0.0
    %2047 = vmatpush1.msra.mxu0 0.0
    %2048 = vmatprep.subr.mxu0 0.0
    %2049 = vmatpush1.msra.mxu0 0.0
    %2050 = vmatprep.subr.mxu0 0.0
    %2051 = vmatpush1.msra.mxu0 0.0
    %2052 = vmatprep.subr.mxu0 0.0
    %2053 = vmatpush1.msra.mxu0 0.0
    %2054 = vmatprep.subr.mxu0 0.0
    %2055 = vmatpush1.msra.mxu0 0.0
    %2056 = vmatprep.subr.mxu0 0.0
    %2057 = vmatpush1.msra.mxu0 0.0
    %2058 = vmatprep.subr.mxu0 0.0
    %2059 = vmatpush1.msra.mxu0 0.0
    %2060 = vmatprep.subr.mxu0 0.0
    %2061 = vmatpush1.msra.mxu0 0.0
    %2062 = vmatprep.subr.mxu0 0.0
    %2063 = vmatpush1.msra.mxu0 0.0
    %2064 = vmatprep.subr.mxu0 0.0
    %2065 = vmatpush1.msra.mxu0 0.0
    %2066 = vmatprep.subr.mxu0 0.0
    %2067 = vmatpush1.msra.mxu0 0.0
    %2068 = vmatprep.mubr.f32.mxu0 0.0
    %2069 = vmatmul.mubr.f32.gmra.mrb[0].mxu0 0.0
    %v2070 = vpop.f32.mrb[0].mxu0
    %v2071 = vadd.f32 0.0, %v2070
    %v2072 = vpop.f32.mrb[0].mxu0
    %v2073 = vadd.f32 0.0, %v2072
    %2074 = vdwg.mxu0
    %2075 = vmatprep.subr.mxu0 0.0
    %2076 = vmatpush1.msra.mxu0 %v1956
    %2077 = vmatprep.subr.mxu0 0.0
    %2078 = vmatpush1.msra.mxu0 %v1959
    %2079 = vmatprep.subr.mxu0 0.0
    %2080 = vmatpush1.msra.mxu0 %v1962
    %2081 = vmatprep.subr.mxu0 0.0
    %2082 = vmatpush1.msra.mxu0 %v1965
    %2083 = vmatprep.subr.mxu0 0.0
    %2084 = vmatpush1.msra.mxu0 %v1968
    %2085 = vmatprep.subr.mxu0 0.0
    %2086 = vmatpush1.msra.mxu0 %v1971
    %2087 = vmatprep.subr.mxu0 0.0
    %2088 = vmatpush1.msra.mxu0 %v1974
    %2089 = vmatprep.subr.mxu0 0.0
    %2090 = vmatpush1.msra.mxu0 %v1977
    %2091 = vmatprep.subr.mxu0 0.0
    %2092 = vmatpush1.msra.mxu0 %v1980
    %2093 = vmatprep.subr.mxu0 0.0
    %2094 = vmatpush1.msra.mxu0 %v1983
    %2095 = vmatprep.subr.mxu0 0.0
    %2096 = vmatpush1.msra.mxu0 %v1986
    %2097 = vmatprep.subr.mxu0 0.0
    %2098 = vmatpush1.msra.mxu0 %v1989
    %2099 = vmatprep.subr.mxu0 0.0
    %2100 = vmatpush1.msra.mxu0 %v1992
    %2101 = vmatprep.subr.mxu0 0.0
    %2102 = vmatpush1.msra.mxu0 %v1995
    %2103 = vmatprep.subr.mxu0 0.0
    %2104 = vmatpush1.msra.mxu0 %v1998
    %2105 = vmatprep.subr.mxu0 0.0
    %2106 = vmatpush1.msra.mxu0 %v2001
    %2107 = vmatprep.subr.mxu0 0.0
    %2108 = vmatpush1.msra.mxu0 0.0
    %2109 = vmatprep.subr.mxu0 0.0
    %2110 = vmatpush1.msra.mxu0 0.0
    %2111 = vmatprep.subr.mxu0 0.0
    %2112 = vmatpush1.msra.mxu0 0.0
    %2113 = vmatprep.subr.mxu0 0.0
    %2114 = vmatpush1.msra.mxu0 0.0
    %2115 = vmatprep.subr.mxu0 0.0
    %2116 = vmatpush1.msra.mxu0 0.0
    %2117 = vmatprep.subr.mxu0 0.0
    %2118 = vmatpush1.msra.mxu0 0.0
    %2119 = vmatprep.subr.mxu0 0.0
    %2120 = vmatpush1.msra.mxu0 0.0
    %2121 = vmatprep.subr.mxu0 0.0
    %2122 = vmatpush1.msra.mxu0 0.0
    %2123 = vmatprep.subr.mxu0 0.0
    %2124 = vmatpush1.msra.mxu0 0.0
    %2125 = vmatprep.subr.mxu0 0.0
    %2126 = vmatpush1.msra.mxu0 0.0
    %2127 = vmatprep.subr.mxu0 0.0
    %2128 = vmatpush1.msra.mxu0 0.0
    %2129 = vmatprep.subr.mxu0 0.0
    %2130 = vmatpush1.msra.mxu0 0.0
    %2131 = vmatprep.subr.mxu0 0.0
    %2132 = vmatpush1.msra.mxu0 0.0
    %2133 = vmatprep.subr.mxu0 0.0
    %2134 = vmatpush1.msra.mxu0 0.0
    %2135 = vmatprep.subr.mxu0 0.0
    %2136 = vmatpush1.msra.mxu0 0.0
    %2137 = vmatprep.subr.mxu0 0.0
    %2138 = vmatpush1.msra.mxu0 0.0
    %2139 = vmatprep.mubr.f32.mxu0 0.0
    %2140 = vmatmul.mubr.f32.gmra.mrb[0].mxu0 0.0
    %v2141 = vpop.f32.mrb[0].mxu0
    %v2142 = vadd.f32 0.0, %v2141
    %v2143 = vpop.f32.mrb[0].mxu0
    %2144 = vdwg.mxu0
    %v2145 = vadd.f32 %v1879, %v2071
    %v2146 = vxor.u32 %v2145, 2147483648
    %v2147 = vmul.f32 %v2146, 1.442695
    %v2148 = vpow.pop %v2147
    %v2149 = vadd.f32 %v2148, 1.0
    %v2150 = vrcp.pop %v2149
    %v2151 = vmul.f32 1.0, %v2150
    %v2152 = vadd.f32 %v1881, %v2073
    %v2153 = vxor.u32 %v2152, 2147483648
    %v2154 = vmul.f32 %v2153, 1.442695
    %v2155 = vpow.pop %v2154
    %v2156 = vadd.f32 %v2155, 1.0
    %v2157 = vrcp.pop %v2156
    %v2158 = vmul.f32 1.0, %v2157
    %v2159 = vadd.f32 %v2142, %v2003
    %v2160 = vmul.f32 %v2151, %v2159
    %v2161 = vadd.f32 %v1950, %v2160
    %v2162 = vtanh.pop %v2161
    %v2163 = vsub.f32 1.0, %v2158
    %v2164 = vmul.f32 %v2163, %v2162
    %v2165 = vmul.f32 %v2158, 0.0
    %v2166 = vadd.f32 %v2164, %v2165
    %2167 = vst [vmem:[#allocation2] sm:$0x1] %v2166
    %2168 = vmatprep.subr.mxu0 %v1955
    %2169 = vmatpush1.msra.mxu0 %v1954
    %2170 = vmatprep.subr.mxu0 %v1958
    %2171 = vmatpush1.msra.mxu0 %v1957
    %2172 = vmatprep.subr.mxu0 %v1961
    %2173 = vmatpush1.msra.mxu0 %v1960
    %2174 = vmatprep.subr.mxu0 %v1964
    %2175 = vmatpush1.msra.mxu0 %v1963
    %2176 = vmatprep.subr.mxu0 %v1967
    %2177 = vmatpush1.msra.mxu0 %v1966
    %2178 = vmatprep.subr.mxu0 %v1970
    %2179 = vmatpush1.msra.mxu0 %v1969
    %2180 = vmatprep.subr.mxu0 %v1973
    %2181 = vmatpush1.msra.mxu0 %v1972
    %2182 = vmatprep.subr.mxu0 %v1976
    %2183 = vmatpush1.msra.mxu0 %v1975
    %2184 = vmatprep.subr.mxu0 %v1979
    %2185 = vmatpush1.msra.mxu0 %v1978
    %2186 = vmatprep.subr.mxu0 %v1982
    %2187 = vmatpush1.msra.mxu0 %v1981
    %2188 = vmatprep.subr.mxu0 %v1985
    %2189 = vmatpush1.msra.mxu0 %v1984
    %2190 = vmatprep.subr.mxu0 %v1988
    %2191 = vmatpush1.msra.mxu0 %v1987
    %2192 = vmatprep.subr.mxu0 %v1991
    %2193 = vmatpush1.msra.mxu0 %v1990
    %2194 = vmatprep.subr.mxu0 %v1994
    %2195 = vmatpush1.msra.mxu0 %v1993
    %2196 = vmatprep.subr.mxu0 %v1997
    %2197 = vmatpush1.msra.mxu0 %v1996
    %2198 = vmatprep.subr.mxu0 %v2000
    %2199 = vmatpush1.msra.mxu0 %v1999
    %2200 = vmatprep.subr.mxu0 0.0
    %2201 = vmatpush1.msra.mxu0 0.0
    %2202 = vmatprep.subr.mxu0 0.0
    %2203 = vmatpush1.msra.mxu0 0.0
    %2204 = vmatprep.subr.mxu0 0.0
    %2205 = vmatpush1.msra.mxu0 0.0
    %2206 = vmatprep.subr.mxu0 0.0
    %2207 = vmatpush1.msra.mxu0 0.0
    %2208 = vmatprep.subr.mxu0 0.0
    %2209 = vmatpush1.msra.mxu0 0.0
    %2210 = vmatprep.subr.mxu0 0.0
    %2211 = vmatpush1.msra.mxu0 0.0
    %2212 = vmatprep.subr.mxu0 0.0
    %2213 = vmatpush1.msra.mxu0 0.0
    %2214 = vmatprep.subr.mxu0 0.0
    %2215 = vmatpush1.msra.mxu0 0.0
    %2216 = vmatprep.subr.mxu0 0.0
    %2217 = vmatpush1.msra.mxu0 0.0
    %2218 = vmatprep.subr.mxu0 0.0
    %2219 = vmatpush1.msra.mxu0 0.0
    %2220 = vmatprep.subr.mxu0 0.0
    %2221 = vmatpush1.msra.mxu0 0.0
    %2222 = vmatprep.subr.mxu0 0.0
    %2223 = vmatpush1.msra.mxu0 0.0
    %2224 = vmatprep.subr.mxu0 0.0
    %2225 = vmatpush1.msra.mxu0 0.0
    %2226 = vmatprep.subr.mxu0 0.0
    %2227 = vmatpush1.msra.mxu0 0.0
    %2228 = vmatprep.subr.mxu0 0.0
    %2229 = vmatpush1.msra.mxu0 0.0
    %2230 = vmatprep.subr.mxu0 0.0
    %2231 = vmatpush1.msra.mxu0 0.0
    %2232 = vmatprep.mubr.f32.mxu0 0.0
    %2233 = vmatmul.mubr.f32.gmra.mrb[0].mxu0 %v2166
    %v2234 = vpop.f32.mrb[0].mxu0
    %v2235 = vadd.f32 0.0, %v2234
    %v2236 = vpop.f32.mrb[0].mxu0
    %v2237 = vadd.f32 0.0, %v2236
    %2238 = vdwg.mxu0
    %2239 = vmatprep.subr.mxu0 0.0
    %2240 = vmatpush1.msra.mxu0 %v1956
    %2241 = vmatprep.subr.mxu0 0.0
    %2242 = vmatpush1.msra.mxu0 %v1959
    %2243 = vmatprep.subr.mxu0 0.0
    %2244 = vmatpush1.msra.mxu0 %v1962
    %2245 = vmatprep.subr.mxu0 0.0
    %2246 = vmatpush1.msra.mxu0 %v1965
    %2247 = vmatprep.subr.mxu0 0.0
    %2248 = vmatpush1.msra.mxu0 %v1968
    %2249 = vmatprep.subr.mxu0 0.0
    %2250 = vmatpush1.msra.mxu0 %v1971
    %2251 = vmatprep.subr.mxu0 0.0
    %2252 = vmatpush1.msra.mxu0 %v1974
    %2253 = vmatprep.subr.mxu0 0.0
    %2254 = vmatpush1.msra.mxu0 %v1977
    %2255 = vmatprep.subr.mxu0 0.0
    %2256 = vmatpush1.msra.mxu0 %v1980
    %2257 = vmatprep.subr.mxu0 0.0
    %2258 = vmatpush1.msra.mxu0 %v1983
    %2259 = vmatprep.subr.mxu0 0.0
    %2260 = vmatpush1.msra.mxu0 %v1986
    %2261 = vmatprep.subr.mxu0 0.0
    %2262 = vmatpush1.msra.mxu0 %v1989
    %2263 = vmatprep.subr.mxu0 0.0
    %2264 = vmatpush1.msra.mxu0 %v1992
    %2265 = vmatprep.subr.mxu0 0.0
    %2266 = vmatpush1.msra.mxu0 %v1995
    %2267 = vmatprep.subr.mxu0 0.0
    %2268 = vmatpush1.msra.mxu0 %v1998
    %2269 = vmatprep.subr.mxu0 0.0
    %2270 = vmatpush1.msra.mxu0 %v2001
    %2271 = vmatprep.subr.mxu0 0.0
    %2272 = vmatpush1.msra.mxu0 0.0
    %2273 = vmatprep.subr.mxu0 0.0
    %2274 = vmatpush1.msra.mxu0 0.0
    %2275 = vmatprep.subr.mxu0 0.0
    %2276 = vmatpush1.msra.mxu0 0.0
    %2277 = vmatprep.subr.mxu0 0.0
    %2278 = vmatpush1.msra.mxu0 0.0
    %2279 = vmatprep.subr.mxu0 0.0
    %2280 = vmatpush1.msra.mxu0 0.0
    %2281 = vmatprep.subr.mxu0 0.0
    %2282 = vmatpush1.msra.mxu0 0.0
    %2283 = vmatprep.subr.mxu0 0.0
    %2284 = vmatpush1.msra.mxu0 0.0
    %2285 = vmatprep.subr.mxu0 0.0
    %2286 = vmatpush1.msra.mxu0 0.0
    %2287 = vmatprep.subr.mxu0 0.0
    %2288 = vmatpush1.msra.mxu0 0.0
    %2289 = vmatprep.subr.mxu0 0.0
    %2290 = vmatpush1.msra.mxu0 0.0
    %2291 = vmatprep.subr.mxu0 0.0
    %2292 = vmatpush1.msra.mxu0 0.0
    %2293 = vmatprep.subr.mxu0 0.0
    %2294 = vmatpush1.msra.mxu0 0.0
    %2295 = vmatprep.subr.mxu0 0.0
    %2296 = vmatpush1.msra.mxu0 0.0
    %2297 = vmatprep.subr.mxu0 0.0
    %2298 = vmatpush1.msra.mxu0 0.0
    %2299 = vmatprep.subr.mxu0 0.0
    %2300 = vmatpush1.msra.mxu0 0.0
    %2301 = vmatprep.subr.mxu0 0.0
    %2302 = vmatpush1.msra.mxu0 0.0
    %2303 = vmatprep.mubr.f32.mxu0 0.0
    %2304 = vmatmul.mubr.f32.gmra.mrb[0].mxu0 %v2166
    %v2305 = vpop.f32.mrb[0].mxu0
    %v2306 = vadd.f32 0.0, %v2305
    %v2307 = vpop.f32.mrb[0].mxu0
    %2308 = vdwg.mxu0
    %v2310 = vrot.slane %v2235, 7
    %v2312 = vadd.f32 %v1879, %v2310
    %v2313 = vxor.u32 %v2312, 2147483648
    %v2314 = vmul.f32 %v2313, 1.442695
    %v2315 = vpow.pop %v2314
    %v2316 = vadd.f32 %v2315, 1.0
    %v2317 = vrcp.pop %v2316
    %v2318 = vmul.f32 1.0, %v2317
    %v2320 = vrot.slane %v2237, 7
    %v2322 = vadd.f32 %v1881, %v2320
    %v2323 = vxor.u32 %v2322, 2147483648
    %v2324 = vmul.f32 %v2323, 1.442695
    %v2325 = vpow.pop %v2324
    %v2326 = vadd.f32 %v2325, 1.0
    %v2327 = vrcp.pop %v2326
    %v2328 = vmul.f32 1.0, %v2327
    %v2329 = vadd.f32 %v2306, %v2003
    %v2331 = vrot.slane %v2329, 7
    %v2333 = vmul.f32 %v2318, %v2331
    %v2334 = vadd.f32 %v1950, %v2333
    %v2335 = vtanh.pop %v2334
    %v2336 = vsub.f32 1.0, %v2328
    %v2337 = vmul.f32 %v2336, %v2335
    %v2339 = vrot.slane %v2166, 7
    %v2341 = vmul.f32 %v2328, %v2339
    %v2342 = vadd.f32 %v2337, %v2341
    %2343 = vst [vmem:[#allocation2] sm:$0x2] %v2342
    %v2345 = vrot.slane %v2342, 1
    %2347 = vmatprep.subr.mxu0 %v1955
    %2348 = vmatpush1.msra.mxu0 %v1954
    %2349 = vmatprep.subr.mxu0 %v1958
    %2350 = vmatpush1.msra.mxu0 %v1957
    %2351 = vmatprep.subr.mxu0 %v1961
    %2352 = vmatpush1.msra.mxu0 %v1960
    %2353 = vmatprep.subr.mxu0 %v1964
    %2354 = vmatpush1.msra.mxu0 %v1963
    %2355 = vmatprep.subr.mxu0 %v1967
    %2356 = vmatpush1.msra.mxu0 %v1966
    %2357 = vmatprep.subr.mxu0 %v1970
    %2358 = vmatpush1.msra.mxu0 %v1969
    %2359 = vmatprep.subr.mxu0 %v1973
    %2360 = vmatpush1.msra.mxu0 %v1972
    %2361 = vmatprep.subr.mxu0 %v1976
    %2362 = vmatpush1.msra.mxu0 %v1975
    %2363 = vmatprep.subr.mxu0 %v1979
    %2364 = vmatpush1.msra.mxu0 %v1978
    %2365 = vmatprep.subr.mxu0 %v1982
    %2366 = vmatpush1.msra.mxu0 %v1981
    %2367 = vmatprep.subr.mxu0 %v1985
    %2368 = vmatpush1.msra.mxu0 %v1984
    %2369 = vmatprep.subr.mxu0 %v1988
    %2370 = vmatpush1.msra.mxu0 %v1987
    %2371 = vmatprep.subr.mxu0 %v1991
    %2372 = vmatpush1.msra.mxu0 %v1990
    %2373 = vmatprep.subr.mxu0 %v1994
    %2374 = vmatpush1.msra.mxu0 %v1993
    %2375 = vmatprep.subr.mxu0 %v1997
    %2376 = vmatpush1.msra.mxu0 %v1996
    %2377 = vmatprep.subr.mxu0 %v2000
    %2378 = vmatpush1.msra.mxu0 %v1999
    %2379 = vmatprep.subr.mxu0 0.0
    %2380 = vmatpush1.msra.mxu0 0.0
    %2381 = vmatprep.subr.mxu0 0.0
    %2382 = vmatpush1.msra.mxu0 0.0
    %2383 = vmatprep.subr.mxu0 0.0
    %2384 = vmatpush1.msra.mxu0 0.0
    %2385 = vmatprep.subr.mxu0 0.0
    %2386 = vmatpush1.msra.mxu0 0.0
    %2387 = vmatprep.subr.mxu0 0.0
    %2388 = vmatpush1.msra.mxu0 0.0
    %2389 = vmatprep.subr.mxu0 0.0
    %2390 = vmatpush1.msra.mxu0 0.0
    %2391 = vmatprep.subr.mxu0 0.0
    %2392 = vmatpush1.msra.mxu0 0.0
    %2393 = vmatprep.subr.mxu0 0.0
    %2394 = vmatpush1.msra.mxu0 0.0
    %2395 = vmatprep.subr.mxu0 0.0
    %2396 = vmatpush1.msra.mxu0 0.0
    %2397 = vmatprep.subr.mxu0 0.0
    %2398 = vmatpush1.msra.mxu0 0.0
    %2399 = vmatprep.subr.mxu0 0.0
    %2400 = vmatpush1.msra.mxu0 0.0
    %2401 = vmatprep.subr.mxu0 0.0
    %2402 = vmatpush1.msra.mxu0 0.0
    %2403 = vmatprep.subr.mxu0 0.0
    %2404 = vmatpush1.msra.mxu0 0.0
    %2405 = vmatprep.subr.mxu0 0.0
    %2406 = vmatpush1.msra.mxu0 0.0
    %2407 = vmatprep.subr.mxu0 0.0
    %2408 = vmatpush1.msra.mxu0 0.0
    %2409 = vmatprep.subr.mxu0 0.0
    %2410 = vmatpush1.msra.mxu0 0.0
    %2411 = vmatprep.mubr.f32.mxu0 0.0
    %2412 = vmatmul.mubr.f32.gmra.mrb[0].mxu0 %v2345
    %v2413 = vpop.f32.mrb[0].mxu0
    %v2414 = vadd.f32 0.0, %v2413
    %v2415 = vpop.f32.mrb[0].mxu0
    %v2416 = vadd.f32 0.0, %v2415
    %2417 = vdwg.mxu0
    %2418 = vmatprep.subr.mxu0 0.0
    %2419 = vmatpush1.msra.mxu0 %v1956
    %2420 = vmatprep.subr.mxu0 0.0
    %2421 = vmatpush1.msra.mxu0 %v1959
    %2422 = vmatprep.subr.mxu0 0.0
    %2423 = vmatpush1.msra.mxu0 %v1962
    %2424 = vmatprep.subr.mxu0 0.0
    %2425 = vmatpush1.msra.mxu0 %v1965
    %2426 = vmatprep.subr.mxu0 0.0
    %2427 = vmatpush1.msra.mxu0 %v1968
    %2428 = vmatprep.subr.mxu0 0.0
    %2429 = vmatpush1.msra.mxu0 %v1971
    %2430 = vmatprep.subr.mxu0 0.0
    %2431 = vmatpush1.msra.mxu0 %v1974
    %2432 = vmatprep.subr.mxu0 0.0
    %2433 = vmatpush1.msra.mxu0 %v1977
    %2434 = vmatprep.subr.mxu0 0.0
    %2435 = vmatpush1.msra.mxu0 %v1980
    %2436 = vmatprep.subr.mxu0 0.0
    %2437 = vmatpush1.msra.mxu0 %v1983
    %2438 = vmatprep.subr.mxu0 0.0
    %2439 = vmatpush1.msra.mxu0 %v1986
    %2440 = vmatprep.subr.mxu0 0.0
    %2441 = vmatpush1.msra.mxu0 %v1989
    %2442 = vmatprep.subr.mxu0 0.0
    %2443 = vmatpush1.msra.mxu0 %v1992
    %2444 = vmatprep.subr.mxu0 0.0
    %2445 = vmatpush1.msra.mxu0 %v1995
    %2446 = vmatprep.subr.mxu0 0.0
    %2447 = vmatpush1.msra.mxu0 %v1998
    %2448 = vmatprep.subr.mxu0 0.0
    %2449 = vmatpush1.msra.mxu0 %v2001
    %2450 = vmatprep.subr.mxu0 0.0
    %2451 = vmatpush1.msra.mxu0 0.0
    %2452 = vmatprep.subr.mxu0 0.0
    %2453 = vmatpush1.msra.mxu0 0.0
    %2454 = vmatprep.subr.mxu0 0.0
    %2455 = vmatpush1.msra.mxu0 0.0
    %2456 = vmatprep.subr.mxu0 0.0
    %2457 = vmatpush1.msra.mxu0 0.0
    %2458 = vmatprep.subr.mxu0 0.0
    %2459 = vmatpush1.msra.mxu0 0.0
    %2460 = vmatprep.subr.mxu0 0.0
    %2461 = vmatpush1.msra.mxu0 0.0
    %2462 = vmatprep.subr.mxu0 0.0
    %2463 = vmatpush1.msra.mxu0 0.0
    %2464 = vmatprep.subr.mxu0 0.0
    %2465 = vmatpush1.msra.mxu0 0.0
    %2466 = vmatprep.subr.mxu0 0.0
    %2467 = vmatpush1.msra.mxu0 0.0
    %2468 = vmatprep.subr.mxu0 0.0
    %2469 = vmatpush1.msra.mxu0 0.0
    %2470 = vmatprep.subr.mxu0 0.0
    %2471 = vmatpush1.msra.mxu0 0.0
    %2472 = vmatprep.subr.mxu0 0.0
    %2473 = vmatpush1.msra.mxu0 0.0
    %2474 = vmatprep.subr.mxu0 0.0
    %2475 = vmatpush1.msra.mxu0 0.0
    %2476 = vmatprep.subr.mxu0 0.0
    %2477 = vmatpush1.msra.mxu0 0.0
    %2478 = vmatprep.subr.mxu0 0.0
    %2479 = vmatpush1.msra.mxu0 0.0
    %2480 = vmatprep.subr.mxu0 0.0
    %2481 = vmatpush1.msra.mxu0 0.0
    %2482 = vmatprep.mubr.f32.mxu0 0.0
    %2483 = vmatmul.mubr.f32.gmra.mrb[0].mxu0 %v2345
    %v2484 = vpop.f32.mrb[0].mxu0
    %v2485 = vadd.f32 0.0, %v2484
    %v2486 = vpop.f32.mrb[0].mxu0
    %2487 = vdwg.mxu0
    %v2489 = vrot.slane %v2414, 6
    %v2491 = vadd.f32 %v1879, %v2489
    %v2492 = vxor.u32 %v2491, 2147483648
    %v2493 = vmul.f32 %v2492, 1.442695
    %v2494 = vpow.pop %v2493
    %v2495 = vadd.f32 %v2494, 1.0
    %v2496 = vrcp.pop %v2495
    %v2497 = vmul.f32 1.0, %v2496
    %v2499 = vrot.slane %v2416, 6
    %v2501 = vadd.f32 %v1881, %v2499
    %v2502 = vxor.u32 %v2501, 2147483648
    %v2503 = vmul.f32 %v2502, 1.442695
    %v2504 = vpow.pop %v2503
    %v2505 = vadd.f32 %v2504, 1.0
    %v2506 = vrcp.pop %v2505
    %v2507 = vmul.f32 1.0, %v2506
    %v2508 = vadd.f32 %v2485, %v2003
    %v2510 = vrot.slane %v2508, 6
    %v2512 = vmul.f32 %v2497, %v2510
    %v2513 = vadd.f32 %v1950, %v2512
    %v2514 = vtanh.pop %v2513
    %v2515 = vsub.f32 1.0, %v2507
    %v2516 = vmul.f32 %v2515, %v2514
    %v2517 = vrot.slane %v2342, 7
    %v2519 = vmul.f32 %v2507, %v2517
    %v2520 = vadd.f32 %v2516, %v2519
    %2521 = vst [vmem:[#allocation2] sm:$0x4] %v2520
    %v2523 = vrot.slane %v2520, 2
    %2525 = vmatprep.subr.mxu0 %v1955
    %2526 = vmatpush1.msra.mxu0 %v1954
    %2527 = vmatprep.subr.mxu0 %v1958
    %2528 = vmatpush1.msra.mxu0 %v1957
    %2529 = vmatprep.subr.mxu0 %v1961
    %2530 = vmatpush1.msra.mxu0 %v1960
    %2531 = vmatprep.subr.mxu0 %v1964
    %2532 = vmatpush1.msra.mxu0 %v1963
    %2533 = vmatprep.subr.mxu0 %v1967
    %2534 = vmatpush1.msra.mxu0 %v1966
    %2535 = vmatprep.subr.mxu0 %v1970
    %2536 = vmatpush1.msra.mxu0 %v1969
    %2537 = vmatprep.subr.mxu0 %v1973
    %2538 = vmatpush1.msra.mxu0 %v1972
    %2539 = vmatprep.subr.mxu0 %v1976
    %2540 = vmatpush1.msra.mxu0 %v1975
    %2541 = vmatprep.subr.mxu0 %v1979
    %2542 = vmatpush1.msra.mxu0 %v1978
    %2543 = vmatprep.subr.mxu0 %v1982
    %2544 = vmatpush1.msra.mxu0 %v1981
    %2545 = vmatprep.subr.mxu0 %v1985
    %2546 = vmatpush1.msra.mxu0 %v1984
    %2547 = vmatprep.subr.mxu0 %v1988
    %2548 = vmatpush1.msra.mxu0 %v1987
    %2549 = vmatprep.subr.mxu0 %v1991
    %2550 = vmatpush1.msra.mxu0 %v1990
    %2551 = vmatprep.subr.mxu0 %v1994
    %2552 = vmatpush1.msra.mxu0 %v1993
    %2553 = vmatprep.subr.mxu0 %v1997
    %2554 = vmatpush1.msra.mxu0 %v1996
    %2555 = vmatprep.subr.mxu0 %v2000
    %2556 = vmatpush1.msra.mxu0 %v1999
    %2557 = vmatprep.subr.mxu0 0.0
    %2558 = vmatpush1.msra.mxu0 0.0
    %2559 = vmatprep.subr.mxu0 0.0
    %2560 = vmatpush1.msra.mxu0 0.0
    %2561 = vmatprep.subr.mxu0 0.0
    %2562 = vmatpush1.msra.mxu0 0.0
    %2563 = vmatprep.subr.mxu0 0.0
    %2564 = vmatpush1.msra.mxu0 0.0
    %2565 = vmatprep.subr.mxu0 0.0
    %2566 = vmatpush1.msra.mxu0 0.0
    %2567 = vmatprep.subr.mxu0 0.0
    %2568 = vmatpush1.msra.mxu0 0.0
    %2569 = vmatprep.subr.mxu0 0.0
    %2570 = vmatpush1.msra.mxu0 0.0
    %2571 = vmatprep.subr.mxu0 0.0
    %2572 = vmatpush1.msra.mxu0 0.0
    %2573 = vmatprep.subr.mxu0 0.0
    %2574 = vmatpush1.msra.mxu0 0.0
    %2575 = vmatprep.subr.mxu0 0.0
    %2576 = vmatpush1.msra.mxu0 0.0
    %2577 = vmatprep.subr.mxu0 0.0
    %2578 = vmatpush1.msra.mxu0 0.0
    %2579 = vmatprep.subr.mxu0 0.0
    %2580 = vmatpush1.msra.mxu0 0.0
    %2581 = vmatprep.subr.mxu0 0.0
    %2582 = vmatpush1.msra.mxu0 0.0
    %2583 = vmatprep.subr.mxu0 0.0
    %2584 = vmatpush1.msra.mxu0 0.0
    %2585 = vmatprep.subr.mxu0 0.0
    %2586 = vmatpush1.msra.mxu0 0.0
    %2587 = vmatprep.subr.mxu0 0.0
    %2588 = vmatpush1.msra.mxu0 0.0
    %2589 = vmatprep.mubr.f32.mxu0 0.0
    %2590 = vmatmul.mubr.f32.gmra.mrb[0].mxu0 %v2523
    %v2591 = vpop.f32.mrb[0].mxu0
    %v2592 = vadd.f32 0.0, %v2591
    %v2593 = vpop.f32.mrb[0].mxu0
    %v2594 = vadd.f32 0.0, %v2593
    %2595 = vdwg.mxu0
    %2596 = vmatprep.subr.mxu0 0.0
    %2597 = vmatpush1.msra.mxu0 %v1956
    %2598 = vmatprep.subr.mxu0 0.0
    %2599 = vmatpush1.msra.mxu0 %v1959
    %2600 = vmatprep.subr.mxu0 0.0
    %2601 = vmatpush1.msra.mxu0 %v1962
    %2602 = vmatprep.subr.mxu0 0.0
    %2603 = vmatpush1.msra.mxu0 %v1965
    %2604 = vmatprep.subr.mxu0 0.0
    %2605 = vmatpush1.msra.mxu0 %v1968
    %2606 = vmatprep.subr.mxu0 0.0
    %2607 = vmatpush1.msra.mxu0 %v1971
    %2608 = vmatprep.subr.mxu0 0.0
    %2609 = vmatpush1.msra.mxu0 %v1974
    %2610 = vmatprep.subr.mxu0 0.0
    %2611 = vmatpush1.msra.mxu0 %v1977
    %2612 = vmatprep.subr.mxu0 0.0
    %2613 = vmatpush1.msra.mxu0 %v1980
    %2614 = vmatprep.subr.mxu0 0.0
    %2615 = vmatpush1.msra.mxu0 %v1983
    %2616 = vmatprep.subr.mxu0 0.0
    %2617 = vmatpush1.msra.mxu0 %v1986
    %2618 = vmatprep.subr.mxu0 0.0
    %2619 = vmatpush1.msra.mxu0 %v1989
    %2620 = vmatprep.subr.mxu0 0.0
    %2621 = vmatpush1.msra.mxu0 %v1992
    %2622 = vmatprep.subr.mxu0 0.0
    %2623 = vmatpush1.msra.mxu0 %v1995
    %2624 = vmatprep.subr.mxu0 0.0
    %2625 = vmatpush1.msra.mxu0 %v1998
    %2626 = vmatprep.subr.mxu0 0.0
    %2627 = vmatpush1.msra.mxu0 %v2001
    %2628 = vmatprep.subr.mxu0 0.0
    %2629 = vmatpush1.msra.mxu0 0.0
    %2630 = vmatprep.subr.mxu0 0.0
    %2631 = vmatpush1.msra.mxu0 0.0
    %2632 = vmatprep.subr.mxu0 0.0
    %2633 = vmatpush1.msra.mxu0 0.0
    %2634 = vmatprep.subr.mxu0 0.0
    %2635 = vmatpush1.msra.mxu0 0.0
    %2636 = vmatprep.subr.mxu0 0.0
    %2637 = vmatpush1.msra.mxu0 0.0
    %2638 = vmatprep.subr.mxu0 0.0
    %2639 = vmatpush1.msra.mxu0 0.0
    %2640 = vmatprep.subr.mxu0 0.0
    %2641 = vmatpush1.msra.mxu0 0.0
    %2642 = vmatprep.subr.mxu0 0.0
    %2643 = vmatpush1.msra.mxu0 0.0
    %2644 = vmatprep.subr.mxu0 0.0
    %2645 = vmatpush1.msra.mxu0 0.0
    %2646 = vmatprep.subr.mxu0 0.0
    %2647 = vmatpush1.msra.mxu0 0.0
    %2648 = vmatprep.subr.mxu0 0.0
    %2649 = vmatpush1.msra.mxu0 0.0
    %2650 = vmatprep.subr.mxu0 0.0
    %2651 = vmatpush1.msra.mxu0 0.0
    %2652 = vmatprep.subr.mxu0 0.0
    %2653 = vmatpush1.msra.mxu0 0.0
    %2654 = vmatprep.subr.mxu0 0.0
    %2655 = vmatpush1.msra.mxu0 0.0
    %2656 = vmatprep.subr.mxu0 0.0
    %2657 = vmatpush1.msra.mxu0 0.0
    %2658 = vmatprep.subr.mxu0 0.0
    %2659 = vmatpush1.msra.mxu0 0.0
    %2660 = vmatprep.mubr.f32.mxu0 0.0
    %2661 = vmatmul.mubr.f32.gmra.mrb[0].mxu0 %v2523
    %v2662 = vpop.f32.mrb[0].mxu0
    %v2663 = vadd.f32 0.0, %v2662
    %v2664 = vpop.f32.mrb[0].mxu0
    %2665 = vdwg.mxu0
    %v2667 = vrot.slane %v2592, 5
    %v2669 = vadd.f32 %v1879, %v2667
    %v2670 = vxor.u32 %v2669, 2147483648
    %v2671 = vmul.f32 %v2670, 1.442695
    %v2672 = vpow.pop %v2671
    %v2673 = vadd.f32 %v2672, 1.0
    %v2674 = vrcp.pop %v2673
    %v2675 = vmul.f32 1.0, %v2674
    %v2677 = vrot.slane %v2594, 5
    %v2679 = vadd.f32 %v1881, %v2677
    %v2680 = vxor.u32 %v2679, 2147483648
    %v2681 = vmul.f32 %v2680, 1.442695
    %v2682 = vpow.pop %v2681
    %v2683 = vadd.f32 %v2682, 1.0
    %v2684 = vrcp.pop %v2683
    %v2685 = vmul.f32 1.0, %v2684
    %v2686 = vadd.f32 %v2663, %v2003
    %v2688 = vrot.slane %v2686, 5
    %v2690 = vmul.f32 %v2675, %v2688
    %v2691 = vadd.f32 %v1950, %v2690
    %v2692 = vtanh.pop %v2691
    %v2693 = vsub.f32 1.0, %v2685
    %v2694 = vmul.f32 %v2693, %v2692
    %v2695 = vrot.slane %v2520, 7
    %v2697 = vmul.f32 %v2685, %v2695
    %v2698 = vadd.f32 %v2694, %v2697
    %2699 = vst [vmem:[#allocation2] sm:$0x8] %v2698
    %v2701 = vrot.slane %v2698, 3
    %2703 = vmatprep.subr.mxu0 %v1955
    %2704 = vmatpush1.msra.mxu0 %v1954
    %2705 = vmatprep.subr.mxu0 %v1958
    %2706 = vmatpush1.msra.mxu0 %v1957
    %2707 = vmatprep.subr.mxu0 %v1961
    %2708 = vmatpush1.msra.mxu0 %v1960
    %2709 = vmatprep.subr.mxu0 %v1964
    %2710 = vmatpush1.msra.mxu0 %v1963
    %2711 = vmatprep.subr.mxu0 %v1967
    %2712 = vmatpush1.msra.mxu0 %v1966
    %2713 = vmatprep.subr.mxu0 %v1970
    %2714 = vmatpush1.msra.mxu0 %v1969
    %2715 = vmatprep.subr.mxu0 %v1973
    %2716 = vmatpush1.msra.mxu0 %v1972
    %2717 = vmatprep.subr.mxu0 %v1976
    %2718 = vmatpush1.msra.mxu0 %v1975
    %2719 = vmatprep.subr.mxu0 %v1979
    %2720 = vmatpush1.msra.mxu0 %v1978
    %2721 = vmatprep.subr.mxu0 %v1982
    %2722 = vmatpush1.msra.mxu0 %v1981
    %2723 = vmatprep.subr.mxu0 %v1985
    %2724 = vmatpush1.msra.mxu0 %v1984
    %2725 = vmatprep.subr.mxu0 %v1988
    %2726 = vmatpush1.msra.mxu0 %v1987
    %2727 = vmatprep.subr.mxu0 %v1991
    %2728 = vmatpush1.msra.mxu0 %v1990
    %2729 = vmatprep.subr.mxu0 %v1994
    %2730 = vmatpush1.msra.mxu0 %v1993
    %2731 = vmatprep.subr.mxu0 %v1997
    %2732 = vmatpush1.msra.mxu0 %v1996
    %2733 = vmatprep.subr.mxu0 %v2000
    %2734 = vmatpush1.msra.mxu0 %v1999
    %2735 = vmatprep.subr.mxu0 0.0
    %2736 = vmatpush1.msra.mxu0 0.0
    %2737 = vmatprep.subr.mxu0 0.0
    %2738 = vmatpush1.msra.mxu0 0.0
    %2739 = vmatprep.subr.mxu0 0.0
    %2740 = vmatpush1.msra.mxu0 0.0
    %2741 = vmatprep.subr.mxu0 0.0
    %2742 = vmatpush1.msra.mxu0 0.0
    %2743 = vmatprep.subr.mxu0 0.0
    %2744 = vmatpush1.msra.mxu0 0.0
    %2745 = vmatprep.subr.mxu0 0.0
    %2746 = vmatpush1.msra.mxu0 0.0
    %2747 = vmatprep.subr.mxu0 0.0
    %2748 = vmatpush1.msra.mxu0 0.0
    %2749 = vmatprep.subr.mxu0 0.0
    %2750 = vmatpush1.msra.mxu0 0.0
    %2751 = vmatprep.subr.mxu0 0.0
    %2752 = vmatpush1.msra.mxu0 0.0
    %2753 = vmatprep.subr.mxu0 0.0
    %2754 = vmatpush1.msra.mxu0 0.0
    %2755 = vmatprep.subr.mxu0 0.0
    %2756 = vmatpush1.msra.mxu0 0.0
    %2757 = vmatprep.subr.mxu0 0.0
    %2758 = vmatpush1.msra.mxu0 0.0
    %2759 = vmatprep.subr.mxu0 0.0
    %2760 = vmatpush1.msra.mxu0 0.0
    %2761 = vmatprep.subr.mxu0 0.0
    %2762 = vmatpush1.msra.mxu0 0.0
    %2763 = vmatprep.subr.mxu0 0.0
    %2764 = vmatpush1.msra.mxu0 0.0
    %2765 = vmatprep.subr.mxu0 0.0
    %2766 = vmatpush1.msra.mxu0 0.0
    %2767 = vmatprep.mubr.f32.mxu0 0.0
    %2768 = vmatmul.mubr.f32.gmra.mrb[0].mxu0 %v2701
    %v2769 = vpop.f32.mrb[0].mxu0
    %v2770 = vadd.f32 0.0, %v2769
    %v2771 = vpop.f32.mrb[0].mxu0
    %v2772 = vadd.f32 0.0, %v2771
    %2773 = vdwg.mxu0
    %2774 = vmatprep.subr.mxu0 0.0
    %2775 = vmatpush1.msra.mxu0 %v1956
    %2776 = vmatprep.subr.mxu0 0.0
    %2777 = vmatpush1.msra.mxu0 %v1959
    %2778 = vmatprep.subr.mxu0 0.0
    %2779 = vmatpush1.msra.mxu0 %v1962
    %2780 = vmatprep.subr.mxu0 0.0
    %2781 = vmatpush1.msra.mxu0 %v1965
    %2782 = vmatprep.subr.mxu0 0.0
    %2783 = vmatpush1.msra.mxu0 %v1968
    %2784 = vmatprep.subr.mxu0 0.0
    %2785 = vmatpush1.msra.mxu0 %v1971
    %2786 = vmatprep.subr.mxu0 0.0
    %2787 = vmatpush1.msra.mxu0 %v1974
    %2788 = vmatprep.subr.mxu0 0.0
    %2789 = vmatpush1.msra.mxu0 %v1977
    %2790 = vmatprep.subr.mxu0 0.0
    %2791 = vmatpush1.msra.mxu0 %v1980
    %2792 = vmatprep.subr.mxu0 0.0
    %2793 = vmatpush1.msra.mxu0 %v1983
    %2794 = vmatprep.subr.mxu0 0.0
    %2795 = vmatpush1.msra.mxu0 %v1986
    %2796 = vmatprep.subr.mxu0 0.0
    %2797 = vmatpush1.msra.mxu0 %v1989
    %2798 = vmatprep.subr.mxu0 0.0
    %2799 = vmatpush1.msra.mxu0 %v1992
    %2800 = vmatprep.subr.mxu0 0.0
    %2801 = vmatpush1.msra.mxu0 %v1995
    %2802 = vmatprep.subr.mxu0 0.0
    %2803 = vmatpush1.msra.mxu0 %v1998
    %2804 = vmatprep.subr.mxu0 0.0
    %2805 = vmatpush1.msra.mxu0 %v2001
    %2806 = vmatprep.subr.mxu0 0.0
    %2807 = vmatpush1.msra.mxu0 0.0
    %2808 = vmatprep.subr.mxu0 0.0
    %2809 = vmatpush1.msra.mxu0 0.0
    %2810 = vmatprep.subr.mxu0 0.0
    %2811 = vmatpush1.msra.mxu0 0.0
    %2812 = vmatprep.subr.mxu0 0.0
    %2813 = vmatpush1.msra.mxu0 0.0
    %2814 = vmatprep.subr.mxu0 0.0
    %2815 = vmatpush1.msra.mxu0 0.0
    %2816 = vmatprep.subr.mxu0 0.0
    %2817 = vmatpush1.msra.mxu0 0.0
    %2818 = vmatprep.subr.mxu0 0.0
    %2819 = vmatpush1.msra.mxu0 0.0
    %2820 = vmatprep.subr.mxu0 0.0
    %2821 = vmatpush1.msra.mxu0 0.0
    %2822 = vmatprep.subr.mxu0 0.0
    %2823 = vmatpush1.msra.mxu0 0.0
    %2824 = vmatprep.subr.mxu0 0.0
    %2825 = vmatpush1.msra.mxu0 0.0
    %2826 = vmatprep.subr.mxu0 0.0
    %2827 = vmatpush1.msra.mxu0 0.0
    %2828 = vmatprep.subr.mxu0 0.0
    %2829 = vmatpush1.msra.mxu0 0.0
    %2830 = vmatprep.subr.mxu0 0.0
    %2831 = vmatpush1.msra.mxu0 0.0
    %2832 = vmatprep.subr.mxu0 0.0
    %2833 = vmatpush1.msra.mxu0 0.0
    %2834 = vmatprep.subr.mxu0 0.0
    %2835 = vmatpush1.msra.mxu0 0.0
    %2836 = vmatprep.subr.mxu0 0.0
    %2837 = vmatpush1.msra.mxu0 0.0
    %2838 = vmatprep.mubr.f32.mxu0 0.0
    %2839 = vmatmul.mubr.f32.gmra.mrb[0].mxu0 %v2701
    %v2840 = vpop.f32.mrb[0].mxu0
    %v2841 = vadd.f32 0.0, %v2840
    %v2842 = vpop.f32.mrb[0].mxu0
    %2843 = vdwg.mxu0
    %v2845 = vrot.slane %v2770, 4
    %v2847 = vadd.f32 %v1879, %v2845
    %v2848 = vxor.u32 %v2847, 2147483648
    %v2849 = vmul.f32 %v2848, 1.442695
    %v2850 = vpow.pop %v2849
    %v2851 = vadd.f32 %v2850, 1.0
    %v2852 = vrcp.pop %v2851
    %v2853 = vmul.f32 1.0, %v2852
    %v2855 = vrot.slane %v2772, 4
    %v2857 = vadd.f32 %v1881, %v2855
    %v2858 = vxor.u32 %v2857, 2147483648
    %v2859 = vmul.f32 %v2858, 1.442695
    %v2860 = vpow.pop %v2859
    %v2861 = vadd.f32 %v2860, 1.0
    %v2862 = vrcp.pop %v2861
    %v2863 = vmul.f32 1.0, %v2862
    %v2864 = vadd.f32 %v2841, %v2003
    %v2866 = vrot.slane %v2864, 4
    %v2868 = vmul.f32 %v2853, %v2866
    %v2869 = vadd.f32 %v1950, %v2868
    %v2870 = vtanh.pop %v2869
    %v2871 = vsub.f32 1.0, %v2863
    %v2872 = vmul.f32 %v2871, %v2870
    %v2873 = vrot.slane %v2698, 7
    %v2875 = vmul.f32 %v2863, %v2873
    %v2876 = vadd.f32 %v2872, %v2875
    %2877 = vst [vmem:[#allocation2] sm:$0x10] %v2876
    %v2879 = vrot.slane %v2876, 4
    %2881 = vmatprep.subr.mxu0 %v1955
    %2882 = vmatpush1.msra.mxu0 %v1954
    %2883 = vmatprep.subr.mxu0 %v1958
    %2884 = vmatpush1.msra.mxu0 %v1957
    %2885 = vmatprep.subr.mxu0 %v1961
    %2886 = vmatpush1.msra.mxu0 %v1960
    %2887 = vmatprep.subr.mxu0 %v1964
    %2888 = vmatpush1.msra.mxu0 %v1963
    %2889 = vmatprep.subr.mxu0 %v1967
    %2890 = vmatpush1.msra.mxu0 %v1966
    %2891 = vmatprep.subr.mxu0 %v1970
    %2892 = vmatpush1.msra.mxu0 %v1969
    %2893 = vmatprep.subr.mxu0 %v1973
    %2894 = vmatpush1.msra.mxu0 %v1972
    %2895 = vmatprep.subr.mxu0 %v1976
    %2896 = vmatpush1.msra.mxu0 %v1975
    %2897 = vmatprep.subr.mxu0 %v1979
    %2898 = vmatpush1.msra.mxu0 %v1978
    %2899 = vmatprep.subr.mxu0 %v1982
    %2900 = vmatpush1.msra.mxu0 %v1981
    %2901 = vmatprep.subr.mxu0 %v1985
    %2902 = vmatpush1.msra.mxu0 %v1984
    %2903 = vmatprep.subr.mxu0 %v1988
    %2904 = vmatpush1.msra.mxu0 %v1987
    %2905 = vmatprep.subr.mxu0 %v1991
    %2906 = vmatpush1.msra.mxu0 %v1990
    %2907 = vmatprep.subr.mxu0 %v1994
    %2908 = vmatpush1.msra.mxu0 %v1993
    %2909 = vmatprep.subr.mxu0 %v1997
    %2910 = vmatpush1.msra.mxu0 %v1996
    %2911 = vmatprep.subr.mxu0 %v2000
    %2912 = vmatpush1.msra.mxu0 %v1999
    %2913 = vmatprep.subr.mxu0 0.0
    %2914 = vmatpush1.msra.mxu0 0.0
    %2915 = vmatprep.subr.mxu0 0.0
    %2916 = vmatpush1.msra.mxu0 0.0
    %2917 = vmatprep.subr.mxu0 0.0
    %2918 = vmatpush1.msra.mxu0 0.0
    %2919 = vmatprep.subr.mxu0 0.0
    %2920 = vmatpush1.msra.mxu0 0.0
    %2921 = vmatprep.subr.mxu0 0.0
    %2922 = vmatpush1.msra.mxu0 0.0
    %2923 = vmatprep.subr.mxu0 0.0
    %2924 = vmatpush1.msra.mxu0 0.0
    %2925 = vmatprep.subr.mxu0 0.0
    %2926 = vmatpush1.msra.mxu0 0.0
    %2927 = vmatprep.subr.mxu0 0.0
    %2928 = vmatpush1.msra.mxu0 0.0
    %2929 = vmatprep.subr.mxu0 0.0
    %2930 = vmatpush1.msra.mxu0 0.0
    %2931 = vmatprep.subr.mxu0 0.0
    %2932 = vmatpush1.msra.mxu0 0.0
    %2933 = vmatprep.subr.mxu0 0.0
    %2934 = vmatpush1.msra.mxu0 0.0
    %2935 = vmatprep.subr.mxu0 0.0
    %2936 = vmatpush1.msra.mxu0 0.0
    %2937 = vmatprep.subr.mxu0 0.0
    %2938 = vmatpush1.msra.mxu0 0.0
    %2939 = vmatprep.subr.mxu0 0.0
    %2940 = vmatpush1.msra.mxu0 0.0
    %2941 = vmatprep.subr.mxu0 0.0
    %2942 = vmatpush1.msra.mxu0 0.0
    %2943 = vmatprep.subr.mxu0 0.0
    %2944 = vmatpush1.msra.mxu0 0.0
    %2945 = vmatprep.mubr.f32.mxu0 0.0
    %2946 = vmatmul.mubr.f32.gmra.mrb[0].mxu0 %v2879
    %v2947 = vpop.f32.mrb[0].mxu0
    %v2948 = vadd.f32 0.0, %v2947
    %v2949 = vpop.f32.mrb[0].mxu0
    %v2950 = vadd.f32 0.0, %v2949
    %2951 = vdwg.mxu0
    %2952 = vmatprep.subr.mxu0 0.0
    %2953 = vmatpush1.msra.mxu0 %v1956
    %2954 = vmatprep.subr.mxu0 0.0
    %2955 = vmatpush1.msra.mxu0 %v1959
    %2956 = vmatprep.subr.mxu0 0.0
    %2957 = vmatpush1.msra.mxu0 %v1962
    %2958 = vmatprep.subr.mxu0 0.0
    %2959 = vmatpush1.msra.mxu0 %v1965
    %2960 = vmatprep.subr.mxu0 0.0
    %2961 = vmatpush1.msra.mxu0 %v1968
    %2962 = vmatprep.subr.mxu0 0.0
    %2963 = vmatpush1.msra.mxu0 %v1971
    %2964 = vmatprep.subr.mxu0 0.0
    %2965 = vmatpush1.msra.mxu0 %v1974
    %2966 = vmatprep.subr.mxu0 0.0
    %2967 = vmatpush1.msra.mxu0 %v1977
    %2968 = vmatprep.subr.mxu0 0.0
    %2969 = vmatpush1.msra.mxu0 %v1980
    %2970 = vmatprep.subr.mxu0 0.0
    %2971 = vmatpush1.msra.mxu0 %v1983
    %2972 = vmatprep.subr.mxu0 0.0
    %2973 = vmatpush1.msra.mxu0 %v1986
    %2974 = vmatprep.subr.mxu0 0.0
    %2975 = vmatpush1.msra.mxu0 %v1989
    %2976 = vmatprep.subr.mxu0 0.0
    %2977 = vmatpush1.msra.mxu0 %v1992
    %2978 = vmatprep.subr.mxu0 0.0
    %2979 = vmatpush1.msra.mxu0 %v1995
    %2980 = vmatprep.subr.mxu0 0.0
    %2981 = vmatpush1.msra.mxu0 %v1998
    %2982 = vmatprep.subr.mxu0 0.0
    %2983 = vmatpush1.msra.mxu0 %v2001
    %2984 = vmatprep.subr.mxu0 0.0
    %2985 = vmatpush1.msra.mxu0 0.0
    %2986 = vmatprep.subr.mxu0 0.0
    %2987 = vmatpush1.msra.mxu0 0.0
    %2988 = vmatprep.subr.mxu0 0.0
    %2989 = vmatpush1.msra.mxu0 0.0
    %2990 = vmatprep.subr.mxu0 0.0
    %2991 = vmatpush1.msra.mxu0 0.0
    %2992 = vmatprep.subr.mxu0 0.0
    %2993 = vmatpush1.msra.mxu0 0.0
    %2994 = vmatprep.subr.mxu0 0.0
    %2995 = vmatpush1.msra.mxu0 0.0
    %2996 = vmatprep.subr.mxu0 0.0
    %2997 = vmatpush1.msra.mxu0 0.0
    %2998 = vmatprep.subr.mxu0 0.0
    %2999 = vmatpush1.msra.mxu0 0.0
    %3000 = vmatprep.subr.mxu0 0.0
    %3001 = vmatpush1.msra.mxu0 0.0
    %3002 = vmatprep.subr.mxu0 0.0
    %3003 = vmatpush1.msra.mxu0 0.0
    %3004 = vmatprep.subr.mxu0 0.0
    %3005 = vmatpush1.msra.mxu0 0.0
    %3006 = vmatprep.subr.mxu0 0.0
    %3007 = vmatpush1.msra.mxu0 0.0
    %3008 = vmatprep.subr.mxu0 0.0
    %3009 = vmatpush1.msra.mxu0 0.0
    %3010 = vmatprep.subr.mxu0 0.0
    %3011 = vmatpush1.msra.mxu0 0.0
    %3012 = vmatprep.subr.mxu0 0.0
    %3013 = vmatpush1.msra.mxu0 0.0
    %3014 = vmatprep.subr.mxu0 0.0
    %3015 = vmatpush1.msra.mxu0 0.0
    %3016 = vmatprep.mubr.f32.mxu0 0.0
    %3017 = vmatmul.mubr.f32.gmra.mrb[0].mxu0 %v2879
    %v3018 = vpop.f32.mrb[0].mxu0
    %v3019 = vadd.f32 0.0, %v3018
    %v3020 = vpop.f32.mrb[0].mxu0
    %3021 = vdwg.mxu0
    %v3023 = vrot.slane %v2948, 3
    %v3025 = vadd.f32 %v1879, %v3023
    %v3026 = vxor.u32 %v3025, 2147483648
    %v3027 = vmul.f32 %v3026, 1.442695
    %v3028 = vpow.pop %v3027
    %v3029 = vadd.f32 %v3028, 1.0
    %v3030 = vrcp.pop %v3029
    %v3031 = vmul.f32 1.0, %v3030
    %v3033 = vrot.slane %v2950, 3
    %v3035 = vadd.f32 %v1881, %v3033
    %v3036 = vxor.u32 %v3035, 2147483648
    %v3037 = vmul.f32 %v3036, 1.442695
    %v3038 = vpow.pop %v3037
    %v3039 = vadd.f32 %v3038, 1.0
    %v3040 = vrcp.pop %v3039
    %v3041 = vmul.f32 1.0, %v3040
    %v3042 = vadd.f32 %v3019, %v2003
    %v3044 = vrot.slane %v3042, 3
    %v3046 = vmul.f32 %v3031, %v3044
    %v3047 = vadd.f32 %v1950, %v3046
    %v3048 = vtanh.pop %v3047
    %v3049 = vsub.f32 1.0, %v3041
    %v3050 = vmul.f32 %v3049, %v3048
    %v3051 = vrot.slane %v2876, 7
    %v3053 = vmul.f32 %v3041, %v3051
    %v3054 = vadd.f32 %v3050, %v3053
    %3055 = vst [vmem:[#allocation2] sm:$0x20] %v3054
    %v3057 = vrot.slane %v3054, 5
    %3059 = vmatprep.subr.mxu0 %v1955
    %3060 = vmatpush1.msra.mxu0 %v1954
    %3061 = vmatprep.subr.mxu0 %v1958
    %3062 = vmatpush1.msra.mxu0 %v1957
    %3063 = vmatprep.subr.mxu0 %v1961
    %3064 = vmatpush1.msra.mxu0 %v1960
    %3065 = vmatprep.subr.mxu0 %v1964
    %3066 = vmatpush1.msra.mxu0 %v1963
    %3067 = vmatprep.subr.mxu0 %v1967
    %3068 = vmatpush1.msra.mxu0 %v1966
    %3069 = vmatprep.subr.mxu0 %v1970
    %3070 = vmatpush1.msra.mxu0 %v1969
    %3071 = vmatprep.subr.mxu0 %v1973
    %3072 = vmatpush1.msra.mxu0 %v1972
    %3073 = vmatprep.subr.mxu0 %v1976
    %3074 = vmatpush1.msra.mxu0 %v1975
    %3075 = vmatprep.subr.mxu0 %v1979
    %3076 = vmatpush1.msra.mxu0 %v1978
    %3077 = vmatprep.subr.mxu0 %v1982
    %3078 = vmatpush1.msra.mxu0 %v1981
    %3079 = vmatprep.subr.mxu0 %v1985
    %3080 = vmatpush1.msra.mxu0 %v1984
    %3081 = vmatprep.subr.mxu0 %v1988
    %3082 = vmatpush1.msra.mxu0 %v1987
    %3083 = vmatprep.subr.mxu0 %v1991
    %3084 = vmatpush1.msra.mxu0 %v1990
    %3085 = vmatprep.subr.mxu0 %v1994
    %3086 = vmatpush1.msra.mxu0 %v1993
    %3087 = vmatprep.subr.mxu0 %v1997
    %3088 = vmatpush1.msra.mxu0 %v1996
    %3089 = vmatprep.subr.mxu0 %v2000
    %3090 = vmatpush1.msra.mxu0 %v1999
    %3091 = vmatprep.subr.mxu0 0.0
    %3092 = vmatpush1.msra.mxu0 0.0
    %3093 = vmatprep.subr.mxu0 0.0
    %3094 = vmatpush1.msra.mxu0 0.0
    %3095 = vmatprep.subr.mxu0 0.0
    %3096 = vmatpush1.msra.mxu0 0.0
    %3097 = vmatprep.subr.mxu0 0.0
    %3098 = vmatpush1.msra.mxu0 0.0
    %3099 = vmatprep.subr.mxu0 0.0
    %3100 = vmatpush1.msra.mxu0 0.0
    %3101 = vmatprep.subr.mxu0 0.0
    %3102 = vmatpush1.msra.mxu0 0.0
    %3103 = vmatprep.subr.mxu0 0.0
    %3104 = vmatpush1.msra.mxu0 0.0
    %3105 = vmatprep.subr.mxu0 0.0
    %3106 = vmatpush1.msra.mxu0 0.0
    %3107 = vmatprep.subr.mxu0 0.0
    %3108 = vmatpush1.msra.mxu0 0.0
    %3109 = vmatprep.subr.mxu0 0.0
    %3110 = vmatpush1.msra.mxu0 0.0
    %3111 = vmatprep.subr.mxu0 0.0
    %3112 = vmatpush1.msra.mxu0 0.0
    %3113 = vmatprep.subr.mxu0 0.0
    %3114 = vmatpush1.msra.mxu0 0.0
    %3115 = vmatprep.subr.mxu0 0.0
    %3116 = vmatpush1.msra.mxu0 0.0
    %3117 = vmatprep.subr.mxu0 0.0
    %3118 = vmatpush1.msra.mxu0 0.0
    %3119 = vmatprep.subr.mxu0 0.0
    %3120 = vmatpush1.msra.mxu0 0.0
    %3121 = vmatprep.subr.mxu0 0.0
    %3122 = vmatpush1.msra.mxu0 0.0
    %3123 = vmatprep.mubr.f32.mxu0 0.0
    %3124 = vmatmul.mubr.f32.gmra.mrb[0].mxu0 %v3057
    %v3125 = vpop.f32.mrb[0].mxu0
    %v3126 = vadd.f32 0.0, %v3125
    %v3127 = vpop.f32.mrb[0].mxu0
    %v3128 = vadd.f32 0.0, %v3127
    %3129 = vdwg.mxu0
    %3130 = vmatprep.subr.mxu0 0.0
    %3131 = vmatpush1.msra.mxu0 %v1956
    %3132 = vmatprep.subr.mxu0 0.0
    %3133 = vmatpush1.msra.mxu0 %v1959
    %3134 = vmatprep.subr.mxu0 0.0
    %3135 = vmatpush1.msra.mxu0 %v1962
    %3136 = vmatprep.subr.mxu0 0.0
    %3137 = vmatpush1.msra.mxu0 %v1965
    %3138 = vmatprep.subr.mxu0 0.0
    %3139 = vmatpush1.msra.mxu0 %v1968
    %3140 = vmatprep.subr.mxu0 0.0
    %3141 = vmatpush1.msra.mxu0 %v1971
    %3142 = vmatprep.subr.mxu0 0.0
    %3143 = vmatpush1.msra.mxu0 %v1974
    %3144 = vmatprep.subr.mxu0 0.0
    %3145 = vmatpush1.msra.mxu0 %v1977
    %3146 = vmatprep.subr.mxu0 0.0
    %3147 = vmatpush1.msra.mxu0 %v1980
    %3148 = vmatprep.subr.mxu0 0.0
    %3149 = vmatpush1.msra.mxu0 %v1983
    %3150 = vmatprep.subr.mxu0 0.0
    %3151 = vmatpush1.msra.mxu0 %v1986
    %3152 = vmatprep.subr.mxu0 0.0
    %3153 = vmatpush1.msra.mxu0 %v1989
    %3154 = vmatprep.subr.mxu0 0.0
    %3155 = vmatpush1.msra.mxu0 %v1992
    %3156 = vmatprep.subr.mxu0 0.0
    %3157 = vmatpush1.msra.mxu0 %v1995
    %3158 = vmatprep.subr.mxu0 0.0
    %3159 = vmatpush1.msra.mxu0 %v1998
    %3160 = vmatprep.subr.mxu0 0.0
    %3161 = vmatpush1.msra.mxu0 %v2001
    %3162 = vmatprep.subr.mxu0 0.0
    %3163 = vmatpush1.msra.mxu0 0.0
    %3164 = vmatprep.subr.mxu0 0.0
    %3165 = vmatpush1.msra.mxu0 0.0
    %3166 = vmatprep.subr.mxu0 0.0
    %3167 = vmatpush1.msra.mxu0 0.0
    %3168 = vmatprep.subr.mxu0 0.0
    %3169 = vmatpush1.msra.mxu0 0.0
    %3170 = vmatprep.subr.mxu0 0.0
    %3171 = vmatpush1.msra.mxu0 0.0
    %3172 = vmatprep.subr.mxu0 0.0
    %3173 = vmatpush1.msra.mxu0 0.0
    %3174 = vmatprep.subr.mxu0 0.0
    %3175 = vmatpush1.msra.mxu0 0.0
    %3176 = vmatprep.subr.mxu0 0.0
    %3177 = vmatpush1.msra.mxu0 0.0
    %3178 = vmatprep.subr.mxu0 0.0
    %3179 = vmatpush1.msra.mxu0 0.0
    %3180 = vmatprep.subr.mxu0 0.0
    %3181 = vmatpush1.msra.mxu0 0.0
    %3182 = vmatprep.subr.mxu0 0.0
    %3183 = vmatpush1.msra.mxu0 0.0
    %3184 = vmatprep.subr.mxu0 0.0
    %3185 = vmatpush1.msra.mxu0 0.0
    %3186 = vmatprep.subr.mxu0 0.0
    %3187 = vmatpush1.msra.mxu0 0.0
    %3188 = vmatprep.subr.mxu0 0.0
    %3189 = vmatpush1.msra.mxu0 0.0
    %3190 = vmatprep.subr.mxu0 0.0
    %3191 = vmatpush1.msra.mxu0 0.0
    %3192 = vmatprep.subr.mxu0 0.0
    %3193 = vmatpush1.msra.mxu0 0.0
    %3194 = vmatprep.mubr.f32.mxu0 0.0
    %3195 = vmatmul.mubr.f32.gmra.mrb[0].mxu0 %v3057
    %v3196 = vpop.f32.mrb[0].mxu0
    %v3197 = vadd.f32 0.0, %v3196
    %v3198 = vpop.f32.mrb[0].mxu0
    %3199 = vdwg.mxu0
    %v3201 = vrot.slane %v3126, 2
    %v3203 = vadd.f32 %v1879, %v3201
    %v3204 = vxor.u32 %v3203, 2147483648
    %v3205 = vmul.f32 %v3204, 1.442695
    %v3206 = vpow.pop %v3205
    %v3207 = vadd.f32 %v3206, 1.0
    %v3208 = vrcp.pop %v3207
    %v3209 = vmul.f32 1.0, %v3208
    %v3211 = vrot.slane %v3128, 2
    %v3213 = vadd.f32 %v1881, %v3211
    %v3214 = vxor.u32 %v3213, 2147483648
    %v3215 = vmul.f32 %v3214, 1.442695
    %v3216 = vpow.pop %v3215
    %v3217 = vadd.f32 %v3216, 1.0
    %v3218 = vrcp.pop %v3217
    %v3219 = vmul.f32 1.0, %v3218
    %v3220 = vadd.f32 %v3197, %v2003
    %v3222 = vrot.slane %v3220, 2
    %v3224 = vmul.f32 %v3209, %v3222
    %v3225 = vadd.f32 %v1950, %v3224
    %v3226 = vtanh.pop %v3225
    %v3227 = vsub.f32 1.0, %v3219
    %v3228 = vmul.f32 %v3227, %v3226
    %v3229 = vrot.slane %v3054, 7
    %v3231 = vmul.f32 %v3219, %v3229
    %v3232 = vadd.f32 %v3228, %v3231
    %3233 = vst [vmem:[#allocation2] sm:$0x40] %v3232
    %v3235 = vrot.slane %v3232, 6
    %3237 = vmatprep.subr.mxu0 %v1955
    %3238 = vmatpush1.msra.mxu0 %v1954
    %3239 = vmatprep.subr.mxu0 %v1958
    %3240 = vmatpush1.msra.mxu0 %v1957
    %3241 = vmatprep.subr.mxu0 %v1961
    %3242 = vmatpush1.msra.mxu0 %v1960
    %3243 = vmatprep.subr.mxu0 %v1964
    %3244 = vmatpush1.msra.mxu0 %v1963
    %3245 = vmatprep.subr.mxu0 %v1967
    %3246 = vmatpush1.msra.mxu0 %v1966
    %3247 = vmatprep.subr.mxu0 %v1970
    %3248 = vmatpush1.msra.mxu0 %v1969
    %3249 = vmatprep.subr.mxu0 %v1973
    %3250 = vmatpush1.msra.mxu0 %v1972
    %3251 = vmatprep.subr.mxu0 %v1976
    %3252 = vmatpush1.msra.mxu0 %v1975
    %3253 = vmatprep.subr.mxu0 %v1979
    %3254 = vmatpush1.msra.mxu0 %v1978
    %3255 = vmatprep.subr.mxu0 %v1982
    %3256 = vmatpush1.msra.mxu0 %v1981
    %3257 = vmatprep.subr.mxu0 %v1985
    %3258 = vmatpush1.msra.mxu0 %v1984
    %3259 = vmatprep.subr.mxu0 %v1988
    %3260 = vmatpush1.msra.mxu0 %v1987
    %3261 = vmatprep.subr.mxu0 %v1991
    %3262 = vmatpush1.msra.mxu0 %v1990
    %3263 = vmatprep.subr.mxu0 %v1994
    %3264 = vmatpush1.msra.mxu0 %v1993
    %3265 = vmatprep.subr.mxu0 %v1997
    %3266 = vmatpush1.msra.mxu0 %v1996
    %3267 = vmatprep.subr.mxu0 %v2000
    %3268 = vmatpush1.msra.mxu0 %v1999
    %3269 = vmatprep.subr.mxu0 0.0
    %3270 = vmatpush1.msra.mxu0 0.0
    %3271 = vmatprep.subr.mxu0 0.0
    %3272 = vmatpush1.msra.mxu0 0.0
    %3273 = vmatprep.subr.mxu0 0.0
    %3274 = vmatpush1.msra.mxu0 0.0
    %3275 = vmatprep.subr.mxu0 0.0
    %3276 = vmatpush1.msra.mxu0 0.0
    %3277 = vmatprep.subr.mxu0 0.0
    %3278 = vmatpush1.msra.mxu0 0.0
    %3279 = vmatprep.subr.mxu0 0.0
    %3280 = vmatpush1.msra.mxu0 0.0
    %3281 = vmatprep.subr.mxu0 0.0
    %3282 = vmatpush1.msra.mxu0 0.0
    %3283 = vmatprep.subr.mxu0 0.0
    %3284 = vmatpush1.msra.mxu0 0.0
    %3285 = vmatprep.subr.mxu0 0.0
    %3286 = vmatpush1.msra.mxu0 0.0
    %3287 = vmatprep.subr.mxu0 0.0
    %3288 = vmatpush1.msra.mxu0 0.0
    %3289 = vmatprep.subr.mxu0 0.0
    %3290 = vmatpush1.msra.mxu0 0.0
    %3291 = vmatprep.subr.mxu0 0.0
    %3292 = vmatpush1.msra.mxu0 0.0
    %3293 = vmatprep.subr.mxu0 0.0
    %3294 = vmatpush1.msra.mxu0 0.0
    %3295 = vmatprep.subr.mxu0 0.0
    %3296 = vmatpush1.msra.mxu0 0.0
    %3297 = vmatprep.subr.mxu0 0.0
    %3298 = vmatpush1.msra.mxu0 0.0
    %3299 = vmatprep.subr.mxu0 0.0
    %3300 = vmatpush1.msra.mxu0 0.0
    %3301 = vmatprep.mubr.f32.mxu0 0.0
    %3302 = vmatmul.mubr.f32.gmra.mrb[0].mxu0 %v3235
    %v3303 = vpop.f32.mrb[0].mxu0
    %v3304 = vadd.f32 0.0, %v3303
    %v3305 = vpop.f32.mrb[0].mxu0
    %v3306 = vadd.f32 0.0, %v3305
    %3307 = vdwg.mxu0
    %3308 = vmatprep.subr.mxu0 0.0
    %3309 = vmatpush1.msra.mxu0 %v1956
    %3310 = vmatprep.subr.mxu0 0.0
    %3311 = vmatpush1.msra.mxu0 %v1959
    %3312 = vmatprep.subr.mxu0 0.0
    %3313 = vmatpush1.msra.mxu0 %v1962
    %3314 = vmatprep.subr.mxu0 0.0
    %3315 = vmatpush1.msra.mxu0 %v1965
    %3316 = vmatprep.subr.mxu0 0.0
    %3317 = vmatpush1.msra.mxu0 %v1968
    %3318 = vmatprep.subr.mxu0 0.0
    %3319 = vmatpush1.msra.mxu0 %v1971
    %3320 = vmatprep.subr.mxu0 0.0
    %3321 = vmatpush1.msra.mxu0 %v1974
    %3322 = vmatprep.subr.mxu0 0.0
    %3323 = vmatpush1.msra.mxu0 %v1977
    %3324 = vmatprep.subr.mxu0 0.0
    %3325 = vmatpush1.msra.mxu0 %v1980
    %3326 = vmatprep.subr.mxu0 0.0
    %3327 = vmatpush1.msra.mxu0 %v1983
    %3328 = vmatprep.subr.mxu0 0.0
    %3329 = vmatpush1.msra.mxu0 %v1986
    %3330 = vmatprep.subr.mxu0 0.0
    %3331 = vmatpush1.msra.mxu0 %v1989
    %3332 = vmatprep.subr.mxu0 0.0
    %3333 = vmatpush1.msra.mxu0 %v1992
    %3334 = vmatprep.subr.mxu0 0.0
    %3335 = vmatpush1.msra.mxu0 %v1995
    %3336 = vmatprep.subr.mxu0 0.0
    %3337 = vmatpush1.msra.mxu0 %v1998
    %3338 = vmatprep.subr.mxu0 0.0
    %3339 = vmatpush1.msra.mxu0 %v2001
    %3340 = vmatprep.subr.mxu0 0.0
    %3341 = vmatpush1.msra.mxu0 0.0
    %3342 = vmatprep.subr.mxu0 0.0
    %3343 = vmatpush1.msra.mxu0 0.0
    %3344 = vmatprep.subr.mxu0 0.0
    %3345 = vmatpush1.msra.mxu0 0.0
    %3346 = vmatprep.subr.mxu0 0.0
    %3347 = vmatpush1.msra.mxu0 0.0
    %3348 = vmatprep.subr.mxu0 0.0
    %3349 = vmatpush1.msra.mxu0 0.0
    %3350 = vmatprep.subr.mxu0 0.0
    %3351 = vmatpush1.msra.mxu0 0.0
    %3352 = vmatprep.subr.mxu0 0.0
    %3353 = vmatpush1.msra.mxu0 0.0
    %3354 = vmatprep.subr.mxu0 0.0
    %3355 = vmatpush1.msra.mxu0 0.0
    %3356 = vmatprep.subr.mxu0 0.0
    %3357 = vmatpush1.msra.mxu0 0.0
    %3358 = vmatprep.subr.mxu0 0.0
    %3359 = vmatpush1.msra.mxu0 0.0
    %3360 = vmatprep.subr.mxu0 0.0
    %3361 = vmatpush1.msra.mxu0 0.0
    %3362 = vmatprep.subr.mxu0 0.0
    %3363 = vmatpush1.msra.mxu0 0.0
    %3364 = vmatprep.subr.mxu0 0.0
    %3365 = vmatpush1.msra.mxu0 0.0
    %3366 = vmatprep.subr.mxu0 0.0
    %3367 = vmatpush1.msra.mxu0 0.0
    %3368 = vmatprep.subr.mxu0 0.0
    %3369 = vmatpush1.msra.mxu0 0.0
    %3370 = vmatprep.subr.mxu0 0.0
    %3371 = vmatpush1.msra.mxu0 0.0
    %3372 = vmatprep.mubr.f32.mxu0 0.0
    %3373 = vmatmul.mubr.f32.gmra.mrb[0].mxu0 %v3235
    %v3374 = vpop.f32.mrb[0].mxu0
    %v3375 = vadd.f32 0.0, %v3374
    %v3376 = vpop.f32.mrb[0].mxu0
    %3377 = vdwg.mxu0
    %v3379 = vrot.slane %v3304, 1
    %v3381 = vadd.f32 %v1879, %v3379
    %v3382 = vxor.u32 %v3381, 2147483648
    %v3383 = vmul.f32 %v3382, 1.442695
    %v3384 = vpow.pop %v3383
    %v3385 = vadd.f32 %v3384, 1.0
    %v3386 = vrcp.pop %v3385
    %v3387 = vmul.f32 1.0, %v3386
    %v3389 = vrot.slane %v3306, 1
    %v3391 = vadd.f32 %v1881, %v3389
    %v3392 = vxor.u32 %v3391, 2147483648
    %v3393 = vmul.f32 %v3392, 1.442695
    %v3394 = vpow.pop %v3393
    %v3395 = vadd.f32 %v3394, 1.0
    %v3396 = vrcp.pop %v3395
    %v3397 = vmul.f32 1.0, %v3396
    %v3398 = vadd.f32 %v3375, %v2003
    %v3400 = vrot.slane %v3398, 1
    %v3402 = vmul.f32 %v3387, %v3400
    %v3403 = vadd.f32 %v1950, %v3402
    %v3404 = vtanh.pop %v3403
    %v3405 = vsub.f32 1.0, %v3397
    %v3406 = vmul.f32 %v3405, %v3404
    %v3407 = vrot.slane %v3232, 7
    %v3409 = vmul.f32 %v3397, %v3407
    %v3410 = vadd.f32 %v3406, %v3409
    %3411 = vst [vmem:[#allocation2] sm:$0x80] %v3410
    %v3412 = vld [vmem:[#allocation2] sm:$0xff]
    %v3413 = vld [vmem:[#allocation9] sm:$0xff]
    %v3414 = vld [vmem:[#allocation9 + $0x8] sm:$0xff]
    %v3415 = vld [vmem:[#allocation9 + $0x10] sm:$0xff]
    %v3416 = vld [vmem:[#allocation9 + $0x18] sm:$0xff]
    %v3417 = vld [vmem:[#allocation9 + $0x20] sm:$0xff]
    %v3418 = vld [vmem:[#allocation9 + $0x28] sm:$0xff]
    %v3419 = vld [vmem:[#allocation9 + $0x30] sm:$0xff]
    %v3420 = vld [vmem:[#allocation9 + $0x38] sm:$0xff]
    %v3421 = vld [vmem:[#allocation9 + $0x40] sm:$0xff]
    %v3422 = vld [vmem:[#allocation9 + $0x48] sm:$0xff]
    %v3423 = vld [vmem:[#allocation9 + $0x50] sm:$0xff]
    %v3424 = vld [vmem:[#allocation9 + $0x58] sm:$0xff]
    %v3425 = vld [vmem:[#allocation9 + $0x60] sm:$0xff]
    %v3426 = vld [vmem:[#allocation9 + $0x68] sm:$0xff]
    %v3427 = vld [vmem:[#allocation9 + $0x70] sm:$0xff]
    %v3428 = vld [vmem:[#allocation9 + $0x78] sm:$0xff]
    %v3429 = vld [vmem:[%s6] sm:$0x1]
    %v3431 = vlaneseq
    %v3432 = vshrl.u32 %v3431, 7
    %v3433 = vsub.s32 0, %v3432
    %v3434 = vrot.slane %v3429, %v3433
    %3436 = vmatprep.subr.mxu0 0.0
    %3437 = vmatpush1.msra.mxu0 %v3413
    %3438 = vmatprep.subr.mxu0 0.0
    %3439 = vmatpush1.msra.mxu0 %v3414
    %3440 = vmatprep.subr.mxu0 0.0
    %3441 = vmatpush1.msra.mxu0 %v3415
    %3442 = vmatprep.subr.mxu0 0.0
    %3443 = vmatpush1.msra.mxu0 %v3416
    %3444 = vmatprep.subr.mxu0 0.0
    %3445 = vmatpush1.msra.mxu0 %v3417
    %3446 = vmatprep.subr.mxu0 0.0
    %3447 = vmatpush1.msra.mxu0 %v3418
    %3448 = vmatprep.subr.mxu0 0.0
    %3449 = vmatpush1.msra.mxu0 %v3419
    %3450 = vmatprep.subr.mxu0 0.0
    %3451 = vmatpush1.msra.mxu0 %v3420
    %3452 = vmatprep.subr.mxu0 0.0
    %3453 = vmatpush1.msra.mxu0 %v3421
    %3454 = vmatprep.subr.mxu0 0.0
    %3455 = vmatpush1.msra.mxu0 %v3422
    %3456 = vmatprep.subr.mxu0 0.0
    %3457 = vmatpush1.msra.mxu0 %v3423
    %3458 = vmatprep.subr.mxu0 0.0
    %3459 = vmatpush1.msra.mxu0 %v3424
    %3460 = vmatprep.subr.mxu0 0.0
    %3461 = vmatpush1.msra.mxu0 %v3425
    %3462 = vmatprep.subr.mxu0 0.0
    %3463 = vmatpush1.msra.mxu0 %v3426
    %3464 = vmatprep.subr.mxu0 0.0
    %3465 = vmatpush1.msra.mxu0 %v3427
    %3466 = vmatprep.subr.mxu0 0.0
    %3467 = vmatpush1.msra.mxu0 %v3428
    %3468 = vmatprep.subr.mxu0 0.0
    %3469 = vmatpush1.msra.mxu0 0.0
    %3470 = vmatprep.subr.mxu0 0.0
    %3471 = vmatpush1.msra.mxu0 0.0
    %3472 = vmatprep.subr.mxu0 0.0
    %3473 = vmatpush1.msra.mxu0 0.0
    %3474 = vmatprep.subr.mxu0 0.0
    %3475 = vmatpush1.msra.mxu0 0.0
    %3476 = vmatprep.subr.mxu0 0.0
    %3477 = vmatpush1.msra.mxu0 0.0
    %3478 = vmatprep.subr.mxu0 0.0
    %3479 = vmatpush1.msra.mxu0 0.0
    %3480 = vmatprep.subr.mxu0 0.0
    %3481 = vmatpush1.msra.mxu0 0.0
    %3482 = vmatprep.subr.mxu0 0.0
    %3483 = vmatpush1.msra.mxu0 0.0
    %3484 = vmatprep.subr.mxu0 0.0
    %3485 = vmatpush1.msra.mxu0 0.0
    %3486 = vmatprep.subr.mxu0 0.0
    %3487 = vmatpush1.msra.mxu0 0.0
    %3488 = vmatprep.subr.mxu0 0.0
    %3489 = vmatpush1.msra.mxu0 0.0
    %3490 = vmatprep.subr.mxu0 0.0
    %3491 = vmatpush1.msra.mxu0 0.0
    %3492 = vmatprep.subr.mxu0 0.0
    %3493 = vmatpush1.msra.mxu0 0.0
    %3494 = vmatprep.subr.mxu0 0.0
    %3495 = vmatpush1.msra.mxu0 0.0
    %3496 = vmatprep.subr.mxu0 0.0
    %3497 = vmatpush1.msra.mxu0 0.0
    %3498 = vmatprep.subr.mxu0 0.0
    %3499 = vmatpush1.msra.mxu0 0.0
    %3500 = vmatprep.mubr.f32.mxu0 0.0
    %3501 = vmatmul.mubr.f32.gmra.mrb[0].mxu0 %v3412
    %v3502 = vpop.f32.mrb[0].mxu0
    %v3503 = vadd.f32 %v3434, %v3502
    %v3504 = vpop.f32.mrb[0].mxu0
    %3505 = vdwg.mxu0
    %v3506 = vxor.u32 %v3503, 2147483648
    %v3507 = vmul.f32 %v3506, 1.442695
    %v3508 = vpow.pop %v3507
    %v3509 = vadd.f32 %v3508, 1.0
    %v3510 = vrcp.pop %v3509
    %v3511 = vmul.f32 1.0, %v3510
    %3512 = vst [vmem:[#allocation11] sm:$0xff] %v3511
    // Predicated region
    $region46: #{tpu_custom_call.1} parent=1 // pred_check
      _
    $region47: #{tpu_custom_call.1} parent=1 // pred_check_branch
      %3514 = sbr.rel (0) target = $region49
    $region48: #{tpu_custom_call.1} parent=1 // pred_region
      %s3516 = ssub.s32 128, 128
      %3517 = vsyncadd [#allocation5], %s3516
      %s3519 = sshll.u32 [#allocation11], 4
      %s3520 = int_to_ptr.vmem [resolvable:$true] %s3519
      %3522 = dma.vmem_to_hbm [thread:$0]  %s3520, 128, %s7, [#allocation5]
    $region49: #{tpu_custom_call.1} parent=1 // pred_fallthru
      _
    // Predicated region
    $region50: #{tpu_custom_call.1} parent=1 // pred_check
      _
    $region51: #{tpu_custom_call.1} parent=1 // pred_check_branch
      %3524 = sbr.rel (0) target = $region53
    $region52: #{tpu_custom_call.1} parent=1 // pred_region
      %3525 = dma.done [#allocation5], 128
    $region53: #{tpu_custom_call.1} parent=1 // pred_fallthru
      _
    %3526 = vsyncpa [#allocation4], 1
    %3527 = vsyncpa [#allocation7], 1
    %3528 = vsyncpa [#allocation10], 1
    %3529 = vsyncpa [#allocation5], 1

</llo_original>
